<compile_context>
chip_gen: v5e
topology: v5e:2x2
jax: 0.10.0
libtpu: 0.0.40
codegen_flags: <defaults>
</compile_context>

<pallas_src>
import functools
import math

import jax
import jax.numpy as jnp
import numpy as np
from jax import lax
from jax.experimental import pallas as pl
from jax.experimental.pallas import tpu as pltpu

LANE = 128  # TPU lane width; padded feature dims are multiples of this.


def _round_up(n, m):
    return ((n + m - 1) // m) * m


# ----------------------------- Fused Pallas kernel -------------------------

def _bert_fused_kernel(word_ref, pos_ref, type_ref, amask_ref,
                       eln_g_ref, eln_b_ref,
                       qkv_w_ref, qkv_b_ref,
                       o_w_ref, o_b_ref,
                       ln1_g_ref, ln1_b_ref,
                       i_w_ref, i_b_ref,
                       d_w_ref, d_b_ref,
                       ln2_g_ref, ln2_b_ref,
                       pool_w_ref, pool_b_ref,
                       cls_w_ref, cls_b_ref,
                       logits_ref,
                       *, num_layers, num_heads, head_pad, B, S, hidden, eps):
    Hp = word_ref.shape[-1]            # padded hidden width (multiple of 128)
    BS = B * S
    NHDp = num_heads * head_pad        # width of the padded multi-head block

    # Lane mask over the true hidden width (padded lanes of x are always
    # exactly zero, but (x - mu) is not, so variance needs the mask).
    lane_idx = lax.broadcasted_iota(jnp.int32, (1, Hp), 1)
    lane_mask = (lane_idx < hidden).astype(jnp.float32)

    def layernorm(x, g, b):
        # Two-pass statistics over the true `hidden` lanes only (f32).
        mu = jnp.sum(x, axis=-1, keepdims=True) / hidden
        d = (x - mu) * lane_mask
        var = jnp.sum(d * d, axis=-1, keepdims=True) / hidden
        # Padded gamma/beta are zero, so padded output lanes stay exactly 0.
        return (x - mu) * lax.rsqrt(var + eps) * g + b

    def gelu(x):
        # TODO(synk): HF BERT uses exact erf-GELU; tanh approximation kept here
        # (matches the in-script reference) to avoid depending on erf lowering.
        return 0.5 * x * (1.0 + jnp.tanh(
            0.7978845608028654 * (x + 0.044715 * x * x * x)))

    def bf16(x):
        return x.astype(jnp.bfloat16)

    # --- embeddings: word + position + token-type(0), then LayerNorm (f32) --
    x = word_ref[...].reshape(B, S, Hp) + pos_ref[0:S, :][None, :, :]
    x = x.reshape(BS, Hp) + type_ref[0:1, :]
    x = layernorm(x, eln_g_ref[...], eln_b_ref[...])                # (BS, Hp)

    # --- HF-style extended additive attention mask, broadcast in-kernel -----
    # (B, S) int -> (B, 1, S) float, broadcast against (B, S, S) scores.
    neg_mask = ((1.0 - amask_ref[...].astype(jnp.float32)) * -1e9)[:, None, :]

    for l in range(num_layers):                      # static unroll (L = 2)
        # --- fused QKV projection, bf16 operands, f32 accumulation ----------
        # 1/sqrt(head_dim) is folded into the Q weights/bias at pack time.
        qkv = jnp.dot(bf16(x), qkv_w_ref[l],
                      preferred_element_type=jnp.float32) + qkv_b_ref[l]
        q = qkv[:, 0 * NHDp:1 * NHDp].reshape(B, S, NHDp)
        k = qkv[:, 1 * NHDp:2 * NHDp].reshape(B, S, NHDp)
        v = qkv[:, 2 * NHDp:3 * NHDp].reshape(B, S, NHDp)

        # --- attention: 128-lane-aligned per-head slices --------------------
        ctx_heads = []
        for h in range(num_heads):
            sl = slice(h * head_pad, (h + 1) * head_pad)     # full-vreg slice
            qh, kh, vh = q[:, :, sl], k[:, :, sl], v[:, :, sl]   # (B, S, 128)
            s = jnp.einsum("bqd,bkd->bqk", bf16(qh), bf16(kh),
                           preferred_element_type=jnp.float32)   # (B, S, S)
            s = s + neg_mask
            s = s - jnp.max(s, axis=-1, keepdims=True)
            p = jnp.exp(s)
            p = p / jnp.sum(p, axis=-1, keepdims=True)           # exact, f32
            ctx_heads.append(jnp.einsum("bqk,bkd->bqd", bf16(p), bf16(vh),
                                        preferred_element_type=jnp.float32))
        # 128-aligned concat (placement only, no cross-lane shuffle).
        ctx = jnp.concatenate(ctx_heads, axis=-1).reshape(BS, NHDp)

        # --- attention output projection + residual + LN --------------------
        attn = jnp.dot(bf16(ctx), o_w_ref[l],
                       preferred_element_type=jnp.float32) + o_b_ref[l]
        x = layernorm(attn + x, ln1_g_ref[l], ln1_b_ref[l])

        # --- feed-forward + residual + LN ------------------------------------
        ff = jnp.dot(bf16(x), i_w_ref[l],
                     preferred_element_type=jnp.float32) + i_b_ref[l]
        ff = gelu(ff)
        ff2 = jnp.dot(bf16(ff), d_w_ref[l],
                      preferred_element_type=jnp.float32) + d_b_ref[l]
        x = layernorm(ff2 + x, ln2_g_ref[l], ln2_b_ref[l])

    # --- pooler (tanh on CLS token) + classifier, fused ----------------------
    cls_tok = x.reshape(B, S, Hp)[:, 0, :]                         # (B, Hp)
    pooled = jnp.tanh(jnp.dot(bf16(cls_tok), pool_w_ref[...],
                              preferred_element_type=jnp.float32)
                      + pool_b_ref[...])
    logits_ref[...] = (jnp.dot(bf16(pooled), cls_w_ref[...],
                               preferred_element_type=jnp.float32)
                       + cls_b_ref[...])               # lane-dense (B, Cp)


# ----------------------------- Parameters ----------------------------------

def init_params(key, *, vocab, max_pos, hidden, layers, intermediate, classes):
    def nrm(k, shape):
        return jax.random.normal(k, shape, dtype=jnp.float32) * 0.02

    keys = jax.random.split(key, 8 + layers)
    params = {
        "word_emb": nrm(keys[0], (vocab, hidden)),
        "pos_emb": nrm(keys[1], (max_pos, hidden)),
        "type_emb": nrm(keys[2], (2, hidden)),
        "emb_ln_g": jnp.ones((hidden,), jnp.float32),
        "emb_ln_b": jnp.zeros((hidden,), jnp.float32),
        "pool_w": nrm(keys[3], (hidden, hidden)),
        "pool_b": jnp.zeros((hidden,), jnp.float32),
        "cls_w": nrm(keys[4], (hidden, classes)),
        "cls_b": jnp.zeros((classes,), jnp.float32),
        "layers": [],
    }
    for li in range(layers):
        lk = jax.random.split(keys[8 + li], 6)
        params["layers"].append({
            "q_w": nrm(lk[0], (hidden, hidden)), "q_b": jnp.zeros((hidden,), jnp.float32),
            "k_w": nrm(lk[1], (hidden, hidden)), "k_b": jnp.zeros((hidden,), jnp.float32),
            "v_w": nrm(lk[2], (hidden, hidden)), "v_b": jnp.zeros((hidden,), jnp.float32),
            "o_w": nrm(lk[3], (hidden, hidden)), "o_b": jnp.zeros((hidden,), jnp.float32),
            "ln1_g": jnp.ones((hidden,), jnp.float32), "ln1_b": jnp.zeros((hidden,), jnp.float32),
            "i_w": nrm(lk[4], (hidden, intermediate)), "i_b": jnp.zeros((intermediate,), jnp.float32),
            "d_w": nrm(lk[5], (intermediate, hidden)), "d_b": jnp.zeros((hidden,), jnp.float32),
            "ln2_g": jnp.ones((hidden,), jnp.float32), "ln2_b": jnp.zeros((hidden,), jnp.float32),
        })
    # TODO(synk): pretrained-checkpoint loading / param freezing are training
    # concerns with no forward-pass equivalent; weights are synthetic here.
    return params


def pack_params(params, *, num_heads):
    """Fuse QKV (scale folded into Q), pad every per-head Q/K/V segment and
    every feature dim to 128 lanes, stack per-layer weights along a leading
    layer axis, and store all matmul weights as bf16 (biases/LN params f32)."""
    H = params["word_emb"].shape[1]
    I = params["layers"][0]["i_w"].shape[1]
    C = params["cls_w"].shape[1]
    L = len(params["layers"])
    Dh = H // num_heads
    Hp, Ip, Cp = _round_up(H, LANE), _round_up(I, LANE), _round_up(C, LANE)
    Dp = _round_up(Dh, LANE)            # per-head padded width (128)
    NHDp = num_heads * Dp
    scale = 1.0 / math.sqrt(Dh)

    def npf(x):
        return np.asarray(x, dtype=np.float32)

    def pad2(w, rows, cols):
        w = npf(w)
        out = np.zeros((rows, cols), np.float32)
        out[: w.shape[0], : w.shape[1]] = w
        return out

    qkv_w = np.zeros((L, Hp, 3 * NHDp), np.float32)
    qkv_b = np.zeros((L, 1, 3 * NHDp), np.float32)
    o_w = np.zeros((L, NHDp, Hp), np.float32)
    o_b = np.zeros((L, 1, Hp), np.float32)
    ln1_g = np.zeros((L, 1, Hp), np.float32)
    ln1_b = np.zeros((L, 1, Hp), np.float32)
    i_w = np.zeros((L, Hp, Ip), np.float32)
    i_b = np.zeros((L, 1, Ip), np.float32)
    d_w = np.zeros((L, Ip, Hp), np.float32)
    d_b = np.zeros((L, 1, Hp), np.float32)
    ln2_g = np.zeros((L, 1, Hp), np.float32)
    ln2_b = np.zeros((L, 1, Hp), np.float32)

    for l, lp in enumerate(params["layers"]):
        qw, kw, vw = npf(lp["q_w"]) * scale, npf(lp["k_w"]), npf(lp["v_w"])
        qb, kb, vb = npf(lp["q_b"]) * scale, npf(lp["k_b"]), npf(lp["v_b"])
        ow = npf(lp["o_w"])
        for h in range(num_heads):
            src = slice(h * Dh, (h + 1) * Dh)
            # head-major, 128-lane-aligned destinations
            qdst = slice(0 * NHDp + h * Dp, 0 * NHDp + h * Dp + Dh)
            kdst = slice(1 * NHDp + h * Dp, 1 * NHDp + h * Dp + Dh)
            vdst = slice(2 * NHDp + h * Dp, 2 * NHDp + h * Dp + Dh)
            qkv_w[l, :H, qdst] = qw[:, src]
            qkv_w[l, :H, kdst] = kw[:, src]
            qkv_w[l, :H, vdst] = vw[:, src]
            qkv_b[l, 0, qdst] = qb[src]
            qkv_b[l, 0, kdst] = kb[src]
            qkv_b[l, 0, vdst] = vb[src]
            o_w[l, h * Dp: h * Dp + Dh, :H] = ow[src, :]
        o_b[l, 0, :H] = npf(lp["o_b"])
        ln1_g[l, 0, :H] = npf(lp["ln1_g"])
        ln1_b[l, 0, :H] = npf(lp["ln1_b"])
        i_w[l, :H, :I] = npf(lp["i_w"])
        i_b[l, 0, :I] = npf(lp["i_b"])
        d_w[l, :I, :H] = npf(lp["d_w"])
        d_b[l, 0, :H] = npf(lp["d_b"])
        ln2_g[l, 0, :H] = npf(lp["ln2_g"])
        ln2_b[l, 0, :H] = npf(lp["ln2_b"])

    bf = jnp.bfloat16
    packed = {
        # embedding tables stay f32 (gather + LN path, not MXU operands)
        "word_emb": jnp.asarray(pad2(params["word_emb"], params["word_emb"].shape[0], Hp)),
        "pos_emb": jnp.asarray(pad2(params["pos_emb"], params["pos_emb"].shape[0], Hp)),
        "type_emb": jnp.asarray(pad2(params["type_emb"], 2, Hp)),
        "emb_ln_g": jnp.asarray(pad2(npf(params["emb_ln_g"]).reshape(1, H), 1, Hp)),
        "emb_ln_b": jnp.asarray(pad2(npf(params["emb_ln_b"]).reshape(1, H), 1, Hp)),
        # matmul weights bf16; biases / LN params f32
        "qkv_w": jnp.asarray(qkv_w, bf), "qkv_b": jnp.asarray(qkv_b),
        "o_w": jnp.asarray(o_w, bf), "o_b": jnp.asarray(o_b),
        "ln1_g": jnp.asarray(ln1_g), "ln1_b": jnp.asarray(ln1_b),
        "i_w": jnp.asarray(i_w, bf), "i_b": jnp.asarray(i_b),
        "d_w": jnp.asarray(d_w, bf), "d_b": jnp.asarray(d_b),
        "ln2_g": jnp.asarray(ln2_g), "ln2_b": jnp.asarray(ln2_b),
        "pool_w": jnp.asarray(pad2(params["pool_w"], Hp, Hp), bf),
        "pool_b": jnp.asarray(pad2(npf(params["pool_b"]).reshape(1, H), 1, Hp)),
        "cls_w": jnp.asarray(pad2(params["cls_w"], Hp, Cp), bf),
        "cls_b": jnp.asarray(pad2(npf(params["cls_b"]).reshape(1, C), 1, Cp)),
    }
    meta = dict(hidden=H, inter=I, classes=C, layers=L, num_heads=num_heads,
                head_dim=Dh, Dp=Dp, Hp=Hp, Ip=Ip, Cp=Cp)
    return packed, meta


# ----------------------------- Forward pass ---------------------------------

def bert_forward(packed, input_ids, attention_mask, *, meta):
    B, S = input_ids.shape
    Cp = meta["Cp"]

    # TODO(synk): the word-embedding gather stays as a single XLA op in the
    # wrapper; it could be fused via scalar-prefetched ids + in-kernel gather.
    word = jnp.take(packed["word_emb"], input_ids.reshape(-1), axis=0)  # (BS,Hp)

    kernel = functools.partial(
        _bert_fused_kernel,
        num_layers=meta["layers"], num_heads=meta["num_heads"],
        head_pad=meta["Dp"], B=B, S=S, hidden=meta["hidden"], eps=1e-12)

    logits_padded = pl.pallas_call(
        kernel,
        out_shape=jax.ShapeDtypeStruct((B, Cp), jnp.float32),
        # No grid: single step, every operand is a whole-array VMEM block
        # (< 1 MiB total working set at this toy config).
    )(word, packed["pos_emb"], packed["type_emb"], attention_mask,
      packed["emb_ln_g"], packed["emb_ln_b"],
      packed["qkv_w"], packed["qkv_b"], packed["o_w"], packed["o_b"],
      packed["ln1_g"], packed["ln1_b"], packed["i_w"], packed["i_b"],
      packed["d_w"], packed["d_b"], packed["ln2_g"], packed["ln2_b"],
      packed["pool_w"], packed["pool_b"], packed["cls_w"], packed["cls_b"])

    return logits_padded[:, : meta["classes"]]


# Pure-JAX f32 reference (unpadded weights) for a correctness check.
def bert_forward_ref(params, input_ids, attention_mask, *, num_heads):
    B, S = input_ids.shape
    H = params["word_emb"].shape[1]
    Dh = H // num_heads

    def layernorm(x, g, b, eps=1e-12):
        mu = jnp.mean(x, axis=-1, keepdims=True)
        var = jnp.mean((x - mu) ** 2, axis=-1, keepdims=True)
        return (x - mu) * lax.rsqrt(var + eps) * g + b

    def gelu(x):
        return 0.5 * x * (1.0 + jnp.tanh(
            0.7978845608028654 * (x + 0.044715 * x ** 3)))

    word = jnp.take(params["word_emb"], input_ids, axis=0)
    pos = params["pos_emb"][:S][None]
    tok = params["type_emb"][0][None, None]
    x = layernorm(word + pos + tok, params["emb_ln_g"], params["emb_ln_b"])
    ext = (1.0 - attention_mask.astype(jnp.float32)) * -1e9

    for lp in params["layers"]:
        q = (x @ lp["q_w"] + lp["q_b"]).reshape(B, S, num_heads, Dh)
        k = (x @ lp["k_w"] + lp["k_b"]).reshape(B, S, num_heads, Dh)
        v = (x @ lp["v_w"] + lp["v_b"]).reshape(B, S, num_heads, Dh)
        s = jnp.einsum("bqhd,bkhd->bhqk", q, k) / math.sqrt(Dh)
        s = s + ext[:, None, None, :]
        p = jax.nn.softmax(s, axis=-1)
        ctx = jnp.einsum("bhqk,bkhd->bqhd", p, v).reshape(B, S, H)
        attn = ctx @ lp["o_w"] + lp["o_b"]
        x = layernorm(attn + x, lp["ln1_g"], lp["ln1_b"])
        ff = gelu(x @ lp["i_w"] + lp["i_b"])
        ff2 = ff @ lp["d_w"] + lp["d_b"]
        x = layernorm(ff2 + x, lp["ln2_g"], lp["ln2_b"])

    pooled = jnp.tanh(x[:, 0, :] @ params["pool_w"] + params["pool_b"])
    return pooled @ params["cls_w"] + params["cls_b"]


# ----------------------------- Driver ---------------------------------------

if __name__ == "__main__":
    B, S = 2, 8
    HIDDEN, HEADS, LAYERS, INTER = 32, 2, 2, 64
    VOCAB, MAX_POS, CLASSES = 100, 64, 3

    root = jax.random.PRNGKey(0)
    k_params, k_ids = jax.random.split(root)

    params = init_params(k_params, vocab=VOCAB, max_pos=MAX_POS, hidden=HIDDEN,
                         layers=LAYERS, intermediate=INTER, classes=CLASSES)
    packed, meta = pack_params(params, num_heads=HEADS)

    input_ids = jax.random.randint(k_ids, (B, S), 0, VOCAB, dtype=jnp.int32)
    attention_mask = jnp.ones((B, S), dtype=jnp.int32).at[1, 6:].set(0)

    fwd = jax.jit(functools.partial(bert_forward, meta=meta))
    logits = fwd(packed, input_ids, attention_mask)
    jax.block_until_ready(logits)

    assert logits.shape == (B, CLASSES) and logits.dtype == jnp.float32
    assert bool(jnp.all(jnp.isfinite(logits)))

    # Tolerance reflects bf16 MXU operands in the kernel vs. the f32 reference.
    ref = bert_forward_ref(params, input_ids, attention_mask, num_heads=HEADS)
    np.testing.assert_allclose(np.asarray(logits), np.asarray(ref),
                               rtol=5e-2, atol=5e-3)
    print("KERNEL_OK")
</pallas_src>

<mosaic_0001>
module attributes {stable_mosaic.version = 11 : i64} {
  func.func @_bert_fused_kernel(%arg0: memref<16x128xf32, #tpu.memory_space<vmem>>, %arg1: memref<64x128xf32, #tpu.memory_space<vmem>>, %arg2: memref<2x128xf32, #tpu.memory_space<vmem>>, %arg3: memref<2x8xi32, #tpu.memory_space<vmem>>, %arg4: memref<1x128xf32, #tpu.memory_space<vmem>>, %arg5: memref<1x128xf32, #tpu.memory_space<vmem>>, %arg6: memref<2x128x768xbf16, #tpu.memory_space<vmem>>, %arg7: memref<2x1x768xf32, #tpu.memory_space<vmem>>, %arg8: memref<2x256x128xbf16, #tpu.memory_space<vmem>>, %arg9: memref<2x1x128xf32, #tpu.memory_space<vmem>>, %arg10: memref<2x1x128xf32, #tpu.memory_space<vmem>>, %arg11: memref<2x1x128xf32, #tpu.memory_space<vmem>>, %arg12: memref<2x128x128xbf16, #tpu.memory_space<vmem>>, %arg13: memref<2x1x128xf32, #tpu.memory_space<vmem>>, %arg14: memref<2x128x128xbf16, #tpu.memory_space<vmem>>, %arg15: memref<2x1x128xf32, #tpu.memory_space<vmem>>, %arg16: memref<2x1x128xf32, #tpu.memory_space<vmem>>, %arg17: memref<2x1x128xf32, #tpu.memory_space<vmem>>, %arg18: memref<128x128xbf16, #tpu.memory_space<vmem>>, %arg19: memref<1x128xf32, #tpu.memory_space<vmem>>, %arg20: memref<128x128xbf16, #tpu.memory_space<vmem>>, %arg21: memref<1x128xf32, #tpu.memory_space<vmem>>, %arg22: memref<2x128xf32, #tpu.memory_space<vmem>>) attributes {dimension_semantics = [], scalar_prefetch = 0 : i64, scratch_operands = 0 : i64, tpu.core_type = #tpu.core_type<tc>} {
    %0 = tpu.iota {dimensions = array<i32: 1>} : vector<1x128xi32>
    %c32_i32 = arith.constant 32 : i32
    %1 = vector.broadcast %c32_i32 : i32 to vector<1x128xi32>
    %2 = arith.cmpi slt, %0, %1 : vector<1x128xi32>
    %3 = arith.extui %2 : vector<1x128xi1> to vector<1x128xi32>
    %4 = arith.sitofp %3 : vector<1x128xi32> to vector<1x128xf32>
    %c0 = arith.constant 0 : index
    %c0_0 = arith.constant 0 : index
    %5 = vector.load %arg0[%c0, %c0_0] : memref<16x128xf32, #tpu.memory_space<vmem>>, vector<16x128xf32>
    %6 = vector.shape_cast %5 : vector<16x128xf32> to vector<2x8x128xf32>
    %c0_1 = arith.constant 0 : index
    %c0_2 = arith.constant 0 : index
    %7 = vector.load %arg1[%c0_1, %c0_2] : memref<64x128xf32, #tpu.memory_space<vmem>>, vector<8x128xf32>
    %8 = vector.shape_cast %7 : vector<8x128xf32> to vector<1x8x128xf32>
    %9 = vector.broadcast %8 : vector<1x8x128xf32> to vector<2x8x128xf32>
    %10 = arith.addf %6, %9 : vector<2x8x128xf32>
    %11 = vector.shape_cast %10 : vector<2x8x128xf32> to vector<16x128xf32>
    %c0_3 = arith.constant 0 : index
    %c0_4 = arith.constant 0 : index
    %12 = vector.load %arg2[%c0_3, %c0_4] : memref<2x128xf32, #tpu.memory_space<vmem>>, vector<1x128xf32>
    %13 = vector.broadcast %12 : vector<1x128xf32> to vector<16x128xf32>
    %14 = arith.addf %11, %13 : vector<16x128xf32>
    %c0_5 = arith.constant 0 : index
    %c0_6 = arith.constant 0 : index
    %15 = vector.load %arg4[%c0_5, %c0_6] : memref<1x128xf32, #tpu.memory_space<vmem>>, vector<1x128xf32>
    %c0_7 = arith.constant 0 : index
    %c0_8 = arith.constant 0 : index
    %16 = vector.load %arg5[%c0_7, %c0_8] : memref<1x128xf32, #tpu.memory_space<vmem>>, vector<1x128xf32>
    %cst = arith.constant dense<0.000000e+00> : vector<16xf32>
    %17 = vector.multi_reduction <add>, %14, %cst [1] : vector<16x128xf32> to vector<16xf32>
    %18 = vector.shape_cast %17 : vector<16xf32> to vector<16x1xf32>
    %cst_9 = arith.constant 3.200000e+01 : f32
    %19 = vector.broadcast %cst_9 : f32 to vector<16x1xf32>
    %20 = arith.divf %18, %19 : vector<16x1xf32>
    %21 = vector.broadcast %20 : vector<16x1xf32> to vector<16x128xf32>
    %22 = arith.subf %14, %21 : vector<16x128xf32>
    %23 = vector.broadcast %4 : vector<1x128xf32> to vector<16x128xf32>
    %24 = arith.mulf %22, %23 : vector<16x128xf32>
    %25 = arith.mulf %24, %24 : vector<16x128xf32>
    %cst_10 = arith.constant dense<0.000000e+00> : vector<16xf32>
    %26 = vector.multi_reduction <add>, %25, %cst_10 [1] : vector<16x128xf32> to vector<16xf32>
    %27 = vector.shape_cast %26 : vector<16xf32> to vector<16x1xf32>
    %cst_11 = arith.constant 3.200000e+01 : f32
    %28 = vector.broadcast %cst_11 : f32 to vector<16x1xf32>
    %29 = arith.divf %27, %28 : vector<16x1xf32>
    %30 = vector.broadcast %20 : vector<16x1xf32> to vector<16x128xf32>
    %31 = arith.subf %14, %30 : vector<16x128xf32>
    %cst_12 = arith.constant 9.99999996E-13 : f32
    %32 = vector.broadcast %cst_12 : f32 to vector<16x1xf32>
    %33 = arith.addf %29, %32 : vector<16x1xf32>
    %34 = math.rsqrt %33 : vector<16x1xf32>
    %35 = vector.broadcast %34 : vector<16x1xf32> to vector<16x128xf32>
    %36 = arith.mulf %31, %35 : vector<16x128xf32>
    %37 = vector.broadcast %15 : vector<1x128xf32> to vector<16x128xf32>
    %38 = arith.mulf %36, %37 : vector<16x128xf32>
    %39 = vector.broadcast %16 : vector<1x128xf32> to vector<16x128xf32>
    %40 = arith.addf %38, %39 : vector<16x128xf32>
    %c0_13 = arith.constant 0 : index
    %c0_14 = arith.constant 0 : index
    %41 = vector.load %arg3[%c0_13, %c0_14] : memref<2x8xi32, #tpu.memory_space<vmem>>, vector<2x8xi32>
    %42 = arith.sitofp %41 : vector<2x8xi32> to vector<2x8xf32>
    %cst_15 = arith.constant 1.000000e+00 : f32
    %43 = vector.broadcast %cst_15 : f32 to vector<2x8xf32>
    %44 = arith.subf %43, %42 : vector<2x8xf32>
    %cst_16 = arith.constant -1.000000e+09 : f32
    %45 = vector.broadcast %cst_16 : f32 to vector<2x8xf32>
    %46 = arith.mulf %44, %45 : vector<2x8xf32>
    %47 = vector.shape_cast %46 : vector<2x8xf32> to vector<2x1x8xf32>
    %48 = arith.truncf %40 : vector<16x128xf32> to vector<16x128xbf16>
    %c0_17 = arith.constant 0 : index
    %c0_18 = arith.constant 0 : index
    %c0_19 = arith.constant 0 : index
    %49 = vector.load %arg6[%c0_17, %c0_18, %c0_19] : memref<2x128x768xbf16, #tpu.memory_space<vmem>>, vector<1x128x768xbf16>
    %50 = vector.shape_cast %49 : vector<1x128x768xbf16> to vector<128x768xbf16>
    %cst_20 = arith.constant dense<0.000000e+00> : vector<16x768xf32>
    %51 = tpu.matmul %48, %50, %cst_20 {dimension_numbers = #tpu.dot_dimension_numbers<[1], [0], [0], [1], [0, 0, 1, 1], [], []>} : vector<16x128xbf16>, vector<128x768xbf16>, vector<16x768xf32> -> vector<16x768xf32>
    %c0_21 = arith.constant 0 : index
    %c0_22 = arith.constant 0 : index
    %c0_23 = arith.constant 0 : index
    %52 = vector.load %arg7[%c0_21, %c0_22, %c0_23] : memref<2x1x768xf32, #tpu.memory_space<vmem>>, vector<1x1x768xf32>
    %53 = vector.shape_cast %52 : vector<1x1x768xf32> to vector<1x768xf32>
    %54 = vector.broadcast %53 : vector<1x768xf32> to vector<16x768xf32>
    %55 = arith.addf %51, %54 : vector<16x768xf32>
    %56 = vector.extract_strided_slice %55 {offsets = [0, 0], sizes = [16, 256], strides = [1, 1]} : vector<16x768xf32> to vector<16x256xf32>
    %57 = vector.shape_cast %56 : vector<16x256xf32> to vector<2x8x256xf32>
    %58 = vector.extract_strided_slice %55 {offsets = [0, 256], sizes = [16, 256], strides = [1, 1]} : vector<16x768xf32> to vector<16x256xf32>
    %59 = vector.shape_cast %58 : vector<16x256xf32> to vector<2x8x256xf32>
    %60 = vector.extract_strided_slice %55 {offsets = [0, 512], sizes = [16, 256], strides = [1, 1]} : vector<16x768xf32> to vector<16x256xf32>
    %61 = vector.shape_cast %60 : vector<16x256xf32> to vector<2x8x256xf32>
    %62 = vector.extract_strided_slice %57 {offsets = [0, 0, 0], sizes = [2, 8, 128], strides = [1, 1, 1]} : vector<2x8x256xf32> to vector<2x8x128xf32>
    %63 = vector.extract_strided_slice %59 {offsets = [0, 0, 0], sizes = [2, 8, 128], strides = [1, 1, 1]} : vector<2x8x256xf32> to vector<2x8x128xf32>
    %64 = vector.extract_strided_slice %61 {offsets = [0, 0, 0], sizes = [2, 8, 128], strides = [1, 1, 1]} : vector<2x8x256xf32> to vector<2x8x128xf32>
    %65 = arith.truncf %62 : vector<2x8x128xf32> to vector<2x8x128xbf16>
    %66 = arith.truncf %63 : vector<2x8x128xf32> to vector<2x8x128xbf16>
    "tpu.trace_start"() <{level = 10 : i32, message = "bqd,bkd->bqk"}> : () -> ()
    %cst_24 = arith.constant dense<0.000000e+00> : vector<2x8x8xf32>
    %67 = tpu.matmul %65, %66, %cst_24 {dimension_numbers = #tpu.dot_dimension_numbers<[2], [2], [1], [1], [0, 0, 0, 1, 1, 1], [0], [0]>} : vector<2x8x128xbf16>, vector<2x8x128xbf16>, vector<2x8x8xf32> -> vector<2x8x8xf32>
    "tpu.trace_stop"() : () -> ()
    %68 = vector.broadcast %47 : vector<2x1x8xf32> to vector<2x8x8xf32>
    %69 = arith.addf %67, %68 : vector<2x8x8xf32>
    %cst_25 = arith.constant dense<0xFF800000> : vector<2x8xf32>
    %70 = vector.multi_reduction <maximumf>, %69, %cst_25 [2] : vector<2x8x8xf32> to vector<2x8xf32>
    %71 = vector.shape_cast %70 : vector<2x8xf32> to vector<2x8x1xf32>
    %72 = vector.broadcast %71 : vector<2x8x1xf32> to vector<2x8x8xf32>
    %73 = arith.subf %69, %72 : vector<2x8x8xf32>
    %74 = math.exp %73 : vector<2x8x8xf32>
    %cst_26 = arith.constant dense<0.000000e+00> : vector<2x8xf32>
    %75 = vector.multi_reduction <add>, %74, %cst_26 [2] : vector<2x8x8xf32> to vector<2x8xf32>
    %76 = vector.shape_cast %75 : vector<2x8xf32> to vector<2x8x1xf32>
    %77 = vector.broadcast %76 : vector<2x8x1xf32> to vector<2x8x8xf32>
    %78 = arith.divf %74, %77 : vector<2x8x8xf32>
    %79 = arith.truncf %78 : vector<2x8x8xf32> to vector<2x8x8xbf16>
    %80 = arith.truncf %64 : vector<2x8x128xf32> to vector<2x8x128xbf16>
    "tpu.trace_start"() <{level = 10 : i32, message = "bqk,bkd->bqd"}> : () -> ()
    %cst_27 = arith.constant dense<0.000000e+00> : vector<2x8x128xf32>
    %81 = tpu.matmul %79, %80, %cst_27 {dimension_numbers = #tpu.dot_dimension_numbers<[2], [1], [1], [2], [0, 0, 0, 1, 1, 2], [0], [0]>} : vector<2x8x8xbf16>, vector<2x8x128xbf16>, vector<2x8x128xf32> -> vector<2x8x128xf32>
    "tpu.trace_stop"() : () -> ()
    %82 = vector.extract_strided_slice %57 {offsets = [0, 0, 128], sizes = [2, 8, 128], strides = [1, 1, 1]} : vector<2x8x256xf32> to vector<2x8x128xf32>
    %83 = vector.extract_strided_slice %59 {offsets = [0, 0, 128], sizes = [2, 8, 128], strides = [1, 1, 1]} : vector<2x8x256xf32> to vector<2x8x128xf32>
    %84 = vector.extract_strided_slice %61 {offsets = [0, 0, 128], sizes = [2, 8, 128], strides = [1, 1, 1]} : vector<2x8x256xf32> to vector<2x8x128xf32>
    %85 = arith.truncf %82 : vector<2x8x128xf32> to vector<2x8x128xbf16>
    %86 = arith.truncf %83 : vector<2x8x128xf32> to vector<2x8x128xbf16>
    "tpu.trace_start"() <{level = 10 : i32, message = "bqd,bkd->bqk"}> : () -> ()
    %cst_28 = arith.constant dense<0.000000e+00> : vector<2x8x8xf32>
    %87 = tpu.matmul %85, %86, %cst_28 {dimension_numbers = #tpu.dot_dimension_numbers<[2], [2], [1], [1], [0, 0, 0, 1, 1, 1], [0], [0]>} : vector<2x8x128xbf16>, vector<2x8x128xbf16>, vector<2x8x8xf32> -> vector<2x8x8xf32>
    "tpu.trace_stop"() : () -> ()
    %88 = vector.broadcast %47 : vector<2x1x8xf32> to vector<2x8x8xf32>
    %89 = arith.addf %87, %88 : vector<2x8x8xf32>
    %cst_29 = arith.constant dense<0xFF800000> : vector<2x8xf32>
    %90 = vector.multi_reduction <maximumf>, %89, %cst_29 [2] : vector<2x8x8xf32> to vector<2x8xf32>
    %91 = vector.shape_cast %90 : vector<2x8xf32> to vector<2x8x1xf32>
    %92 = vector.broadcast %91 : vector<2x8x1xf32> to vector<2x8x8xf32>
    %93 = arith.subf %89, %92 : vector<2x8x8xf32>
    %94 = math.exp %93 : vector<2x8x8xf32>
    %cst_30 = arith.constant dense<0.000000e+00> : vector<2x8xf32>
    %95 = vector.multi_reduction <add>, %94, %cst_30 [2] : vector<2x8x8xf32> to vector<2x8xf32>
    %96 = vector.shape_cast %95 : vector<2x8xf32> to vector<2x8x1xf32>
    %97 = vector.broadcast %96 : vector<2x8x1xf32> to vector<2x8x8xf32>
    %98 = arith.divf %94, %97 : vector<2x8x8xf32>
    %99 = arith.truncf %98 : vector<2x8x8xf32> to vector<2x8x8xbf16>
    %100 = arith.truncf %84 : vector<2x8x128xf32> to vector<2x8x128xbf16>
    "tpu.trace_start"() <{level = 10 : i32, message = "bqk,bkd->bqd"}> : () -> ()
    %cst_31 = arith.constant dense<0.000000e+00> : vector<2x8x128xf32>
    %101 = tpu.matmul %99, %100, %cst_31 {dimension_numbers = #tpu.dot_dimension_numbers<[2], [1], [1], [2], [0, 0, 0, 1, 1, 2], [0], [0]>} : vector<2x8x8xbf16>, vector<2x8x128xbf16>, vector<2x8x128xf32> -> vector<2x8x128xf32>
    "tpu.trace_stop"() : () -> ()
    %102 = tpu.concatenate %81, %101 in 2 : vector<2x8x128xf32>, vector<2x8x128xf32> -> vector<2x8x256xf32>
    %103 = vector.shape_cast %102 : vector<2x8x256xf32> to vector<16x256xf32>
    %104 = arith.truncf %103 : vector<16x256xf32> to vector<16x256xbf16>
    %c0_32 = arith.constant 0 : index
    %c0_33 = arith.constant 0 : index
    %c0_34 = arith.constant 0 : index
    %105 = vector.load %arg8[%c0_32, %c0_33, %c0_34] : memref<2x256x128xbf16, #tpu.memory_space<vmem>>, vector<1x256x128xbf16>
    %106 = vector.shape_cast %105 : vector<1x256x128xbf16> to vector<256x128xbf16>
    %cst_35 = arith.constant dense<0.000000e+00> : vector<16x128xf32>
    %107 = tpu.matmul %104, %106, %cst_35 {dimension_numbers = #tpu.dot_dimension_numbers<[1], [0], [0], [1], [0, 0, 1, 1], [], []>} : vector<16x256xbf16>, vector<256x128xbf16>, vector<16x128xf32> -> vector<16x128xf32>
    %c0_36 = arith.constant 0 : index
    %c0_37 = arith.constant 0 : index
    %c0_38 = arith.constant 0 : index
    %108 = vector.load %arg9[%c0_36, %c0_37, %c0_38] : memref<2x1x128xf32, #tpu.memory_space<vmem>>, vector<1x1x128xf32>
    %109 = vector.shape_cast %108 : vector<1x1x128xf32> to vector<1x128xf32>
    %110 = vector.broadcast %109 : vector<1x128xf32> to vector<16x128xf32>
    %111 = arith.addf %107, %110 : vector<16x128xf32>
    %112 = arith.addf %111, %40 : vector<16x128xf32>
    %c0_39 = arith.constant 0 : index
    %c0_40 = arith.constant 0 : index
    %c0_41 = arith.constant 0 : index
    %113 = vector.load %arg10[%c0_39, %c0_40, %c0_41] : memref<2x1x128xf32, #tpu.memory_space<vmem>>, vector<1x1x128xf32>
    %114 = vector.shape_cast %113 : vector<1x1x128xf32> to vector<1x128xf32>
    %c0_42 = arith.constant 0 : index
    %c0_43 = arith.constant 0 : index
    %c0_44 = arith.constant 0 : index
    %115 = vector.load %arg11[%c0_42, %c0_43, %c0_44] : memref<2x1x128xf32, #tpu.memory_space<vmem>>, vector<1x1x128xf32>
    %116 = vector.shape_cast %115 : vector<1x1x128xf32> to vector<1x128xf32>
    %cst_45 = arith.constant dense<0.000000e+00> : vector<16xf32>
    %117 = vector.multi_reduction <add>, %112, %cst_45 [1] : vector<16x128xf32> to vector<16xf32>
    %118 = vector.shape_cast %117 : vector<16xf32> to vector<16x1xf32>
    %cst_46 = arith.constant 3.200000e+01 : f32
    %119 = vector.broadcast %cst_46 : f32 to vector<16x1xf32>
    %120 = arith.divf %118, %119 : vector<16x1xf32>
    %121 = vector.broadcast %120 : vector<16x1xf32> to vector<16x128xf32>
    %122 = arith.subf %112, %121 : vector<16x128xf32>
    %123 = vector.broadcast %4 : vector<1x128xf32> to vector<16x128xf32>
    %124 = arith.mulf %122, %123 : vector<16x128xf32>
    %125 = arith.mulf %124, %124 : vector<16x128xf32>
    %cst_47 = arith.constant dense<0.000000e+00> : vector<16xf32>
    %126 = vector.multi_reduction <add>, %125, %cst_47 [1] : vector<16x128xf32> to vector<16xf32>
    %127 = vector.shape_cast %126 : vector<16xf32> to vector<16x1xf32>
    %cst_48 = arith.constant 3.200000e+01 : f32
    %128 = vector.broadcast %cst_48 : f32 to vector<16x1xf32>
    %129 = arith.divf %127, %128 : vector<16x1xf32>
    %130 = vector.broadcast %120 : vector<16x1xf32> to vector<16x128xf32>
    %131 = arith.subf %112, %130 : vector<16x128xf32>
    %cst_49 = arith.constant 9.99999996E-13 : f32
    %132 = vector.broadcast %cst_49 : f32 to vector<16x1xf32>
    %133 = arith.addf %129, %132 : vector<16x1xf32>
    %134 = math.rsqrt %133 : vector<16x1xf32>
    %135 = vector.broadcast %134 : vector<16x1xf32> to vector<16x128xf32>
    %136 = arith.mulf %131, %135 : vector<16x128xf32>
    %137 = vector.broadcast %114 : vector<1x128xf32> to vector<16x128xf32>
    %138 = arith.mulf %136, %137 : vector<16x128xf32>
    %139 = vector.broadcast %116 : vector<1x128xf32> to vector<16x128xf32>
    %140 = arith.addf %138, %139 : vector<16x128xf32>
    %141 = arith.truncf %140 : vector<16x128xf32> to vector<16x128xbf16>
    %c0_50 = arith.constant 0 : index
    %c0_51 = arith.constant 0 : index
    %c0_52 = arith.constant 0 : index
    %142 = vector.load %arg12[%c0_50, %c0_51, %c0_52] : memref<2x128x128xbf16, #tpu.memory_space<vmem>>, vector<1x128x128xbf16>
    %143 = vector.shape_cast %142 : vector<1x128x128xbf16> to vector<128x128xbf16>
    %cst_53 = arith.constant dense<0.000000e+00> : vector<16x128xf32>
    %144 = tpu.matmul %141, %143, %cst_53 {dimension_numbers = #tpu.dot_dimension_numbers<[1], [0], [0], [1], [0, 0, 1, 1], [], []>} : vector<16x128xbf16>, vector<128x128xbf16>, vector<16x128xf32> -> vector<16x128xf32>
    %c0_54 = arith.constant 0 : index
    %c0_55 = arith.constant 0 : index
    %c0_56 = arith.constant 0 : index
    %145 = vector.load %arg13[%c0_54, %c0_55, %c0_56] : memref<2x1x128xf32, #tpu.memory_space<vmem>>, vector<1x1x128xf32>
    %146 = vector.shape_cast %145 : vector<1x1x128xf32> to vector<1x128xf32>
    %147 = vector.broadcast %146 : vector<1x128xf32> to vector<16x128xf32>
    %148 = arith.addf %144, %147 : vector<16x128xf32>
    %cst_57 = arith.constant 5.000000e-01 : f32
    %149 = vector.broadcast %cst_57 : f32 to vector<16x128xf32>
    %150 = arith.mulf %149, %148 : vector<16x128xf32>
    %cst_58 = arith.constant 4.471500e-02 : f32
    %151 = vector.broadcast %cst_58 : f32 to vector<16x128xf32>
    %152 = arith.mulf %151, %148 : vector<16x128xf32>
    %153 = arith.mulf %152, %148 : vector<16x128xf32>
    %154 = arith.mulf %153, %148 : vector<16x128xf32>
    %155 = arith.addf %148, %154 : vector<16x128xf32>
    %cst_59 = arith.constant 0.797884583 : f32
    %156 = vector.broadcast %cst_59 : f32 to vector<16x128xf32>
    %157 = arith.mulf %156, %155 : vector<16x128xf32>
    %158 = math.tanh %157 : vector<16x128xf32>
    %cst_60 = arith.constant 1.000000e+00 : f32
    %159 = vector.broadcast %cst_60 : f32 to vector<16x128xf32>
    %160 = arith.addf %159, %158 : vector<16x128xf32>
    %161 = arith.mulf %150, %160 : vector<16x128xf32>
    %162 = arith.truncf %161 : vector<16x128xf32> to vector<16x128xbf16>
    %c0_61 = arith.constant 0 : index
    %c0_62 = arith.constant 0 : index
    %c0_63 = arith.constant 0 : index
    %163 = vector.load %arg14[%c0_61, %c0_62, %c0_63] : memref<2x128x128xbf16, #tpu.memory_space<vmem>>, vector<1x128x128xbf16>
    %164 = vector.shape_cast %163 : vector<1x128x128xbf16> to vector<128x128xbf16>
    %cst_64 = arith.constant dense<0.000000e+00> : vector<16x128xf32>
    %165 = tpu.matmul %162, %164, %cst_64 {dimension_numbers = #tpu.dot_dimension_numbers<[1], [0], [0], [1], [0, 0, 1, 1], [], []>} : vector<16x128xbf16>, vector<128x128xbf16>, vector<16x128xf32> -> vector<16x128xf32>
    %c0_65 = arith.constant 0 : index
    %c0_66 = arith.constant 0 : index
    %c0_67 = arith.constant 0 : index
    %166 = vector.load %arg15[%c0_65, %c0_66, %c0_67] : memref<2x1x128xf32, #tpu.memory_space<vmem>>, vector<1x1x128xf32>
    %167 = vector.shape_cast %166 : vector<1x1x128xf32> to vector<1x128xf32>
    %168 = vector.broadcast %167 : vector<1x128xf32> to vector<16x128xf32>
    %169 = arith.addf %165, %168 : vector<16x128xf32>
    %170 = arith.addf %169, %140 : vector<16x128xf32>
    %c0_68 = arith.constant 0 : index
    %c0_69 = arith.constant 0 : index
    %c0_70 = arith.constant 0 : index
    %171 = vector.load %arg16[%c0_68, %c0_69, %c0_70] : memref<2x1x128xf32, #tpu.memory_space<vmem>>, vector<1x1x128xf32>
    %172 = vector.shape_cast %171 : vector<1x1x128xf32> to vector<1x128xf32>
    %c0_71 = arith.constant 0 : index
    %c0_72 = arith.constant 0 : index
    %c0_73 = arith.constant 0 : index
    %173 = vector.load %arg17[%c0_71, %c0_72, %c0_73] : memref<2x1x128xf32, #tpu.memory_space<vmem>>, vector<1x1x128xf32>
    %174 = vector.shape_cast %173 : vector<1x1x128xf32> to vector<1x128xf32>
    %cst_74 = arith.constant dense<0.000000e+00> : vector<16xf32>
    %175 = vector.multi_reduction <add>, %170, %cst_74 [1] : vector<16x128xf32> to vector<16xf32>
    %176 = vector.shape_cast %175 : vector<16xf32> to vector<16x1xf32>
    %cst_75 = arith.constant 3.200000e+01 : f32
    %177 = vector.broadcast %cst_75 : f32 to vector<16x1xf32>
    %178 = arith.divf %176, %177 : vector<16x1xf32>
    %179 = vector.broadcast %178 : vector<16x1xf32> to vector<16x128xf32>
    %180 = arith.subf %170, %179 : vector<16x128xf32>
    %181 = vector.broadcast %4 : vector<1x128xf32> to vector<16x128xf32>
    %182 = arith.mulf %180, %181 : vector<16x128xf32>
    %183 = arith.mulf %182, %182 : vector<16x128xf32>
    %cst_76 = arith.constant dense<0.000000e+00> : vector<16xf32>
    %184 = vector.multi_reduction <add>, %183, %cst_76 [1] : vector<16x128xf32> to vector<16xf32>
    %185 = vector.shape_cast %184 : vector<16xf32> to vector<16x1xf32>
    %cst_77 = arith.constant 3.200000e+01 : f32
    %186 = vector.broadcast %cst_77 : f32 to vector<16x1xf32>
    %187 = arith.divf %185, %186 : vector<16x1xf32>
    %188 = vector.broadcast %178 : vector<16x1xf32> to vector<16x128xf32>
    %189 = arith.subf %170, %188 : vector<16x128xf32>
    %cst_78 = arith.constant 9.99999996E-13 : f32
    %190 = vector.broadcast %cst_78 : f32 to vector<16x1xf32>
    %191 = arith.addf %187, %190 : vector<16x1xf32>
    %192 = math.rsqrt %191 : vector<16x1xf32>
    %193 = vector.broadcast %192 : vector<16x1xf32> to vector<16x128xf32>
    %194 = arith.mulf %189, %193 : vector<16x128xf32>
    %195 = vector.broadcast %172 : vector<1x128xf32> to vector<16x128xf32>
    %196 = arith.mulf %194, %195 : vector<16x128xf32>
    %197 = vector.broadcast %174 : vector<1x128xf32> to vector<16x128xf32>
    %198 = arith.addf %196, %197 : vector<16x128xf32>
    %199 = arith.truncf %198 : vector<16x128xf32> to vector<16x128xbf16>
    %c1 = arith.constant 1 : index
    %c0_79 = arith.constant 0 : index
    %c0_80 = arith.constant 0 : index
    %200 = vector.load %arg6[%c1, %c0_79, %c0_80] : memref<2x128x768xbf16, #tpu.memory_space<vmem>>, vector<1x128x768xbf16>
    %201 = vector.shape_cast %200 : vector<1x128x768xbf16> to vector<128x768xbf16>
    %cst_81 = arith.constant dense<0.000000e+00> : vector<16x768xf32>
    %202 = tpu.matmul %199, %201, %cst_81 {dimension_numbers = #tpu.dot_dimension_numbers<[1], [0], [0], [1], [0, 0, 1, 1], [], []>} : vector<16x128xbf16>, vector<128x768xbf16>, vector<16x768xf32> -> vector<16x768xf32>
    %c1_82 = arith.constant 1 : index
    %c0_83 = arith.constant 0 : index
    %c0_84 = arith.constant 0 : index
    %203 = vector.load %arg7[%c1_82, %c0_83, %c0_84] : memref<2x1x768xf32, #tpu.memory_space<vmem>>, vector<1x1x768xf32>
    %204 = vector.shape_cast %203 : vector<1x1x768xf32> to vector<1x768xf32>
    %205 = vector.broadcast %204 : vector<1x768xf32> to vector<16x768xf32>
    %206 = arith.addf %202, %205 : vector<16x768xf32>
    %207 = vector.extract_strided_slice %206 {offsets = [0, 0], sizes = [16, 256], strides = [1, 1]} : vector<16x768xf32> to vector<16x256xf32>
    %208 = vector.shape_cast %207 : vector<16x256xf32> to vector<2x8x256xf32>
    %209 = vector.extract_strided_slice %206 {offsets = [0, 256], sizes = [16, 256], strides = [1, 1]} : vector<16x768xf32> to vector<16x256xf32>
    %210 = vector.shape_cast %209 : vector<16x256xf32> to vector<2x8x256xf32>
    %211 = vector.extract_strided_slice %206 {offsets = [0, 512], sizes = [16, 256], strides = [1, 1]} : vector<16x768xf32> to vector<16x256xf32>
    %212 = vector.shape_cast %211 : vector<16x256xf32> to vector<2x8x256xf32>
    %213 = vector.extract_strided_slice %208 {offsets = [0, 0, 0], sizes = [2, 8, 128], strides = [1, 1, 1]} : vector<2x8x256xf32> to vector<2x8x128xf32>
    %214 = vector.extract_strided_slice %210 {offsets = [0, 0, 0], sizes = [2, 8, 128], strides = [1, 1, 1]} : vector<2x8x256xf32> to vector<2x8x128xf32>
    %215 = vector.extract_strided_slice %212 {offsets = [0, 0, 0], sizes = [2, 8, 128], strides = [1, 1, 1]} : vector<2x8x256xf32> to vector<2x8x128xf32>
    %216 = arith.truncf %213 : vector<2x8x128xf32> to vector<2x8x128xbf16>
    %217 = arith.truncf %214 : vector<2x8x128xf32> to vector<2x8x128xbf16>
    "tpu.trace_start"() <{level = 10 : i32, message = "bqd,bkd->bqk"}> : () -> ()
    %cst_85 = arith.constant dense<0.000000e+00> : vector<2x8x8xf32>
    %218 = tpu.matmul %216, %217, %cst_85 {dimension_numbers = #tpu.dot_dimension_numbers<[2], [2], [1], [1], [0, 0, 0, 1, 1, 1], [0], [0]>} : vector<2x8x128xbf16>, vector<2x8x128xbf16>, vector<2x8x8xf32> -> vector<2x8x8xf32>
    "tpu.trace_stop"() : () -> ()
    %219 = vector.broadcast %47 : vector<2x1x8xf32> to vector<2x8x8xf32>
    %220 = arith.addf %218, %219 : vector<2x8x8xf32>
    %cst_86 = arith.constant dense<0xFF800000> : vector<2x8xf32>
    %221 = vector.multi_reduction <maximumf>, %220, %cst_86 [2] : vector<2x8x8xf32> to vector<2x8xf32>
    %222 = vector.shape_cast %221 : vector<2x8xf32> to vector<2x8x1xf32>
    %223 = vector.broadcast %222 : vector<2x8x1xf32> to vector<2x8x8xf32>
    %224 = arith.subf %220, %223 : vector<2x8x8xf32>
    %225 = math.exp %224 : vector<2x8x8xf32>
    %cst_87 = arith.constant dense<0.000000e+00> : vector<2x8xf32>
    %226 = vector.multi_reduction <add>, %225, %cst_87 [2] : vector<2x8x8xf32> to vector<2x8xf32>
    %227 = vector.shape_cast %226 : vector<2x8xf32> to vector<2x8x1xf32>
    %228 = vector.broadcast %227 : vector<2x8x1xf32> to vector<2x8x8xf32>
    %229 = arith.divf %225, %228 : vector<2x8x8xf32>
    %230 = arith.truncf %229 : vector<2x8x8xf32> to vector<2x8x8xbf16>
    %231 = arith.truncf %215 : vector<2x8x128xf32> to vector<2x8x128xbf16>
    "tpu.trace_start"() <{level = 10 : i32, message = "bqk,bkd->bqd"}> : () -> ()
    %cst_88 = arith.constant dense<0.000000e+00> : vector<2x8x128xf32>
    %232 = tpu.matmul %230, %231, %cst_88 {dimension_numbers = #tpu.dot_dimension_numbers<[2], [1], [1], [2], [0, 0, 0, 1, 1, 2], [0], [0]>} : vector<2x8x8xbf16>, vector<2x8x128xbf16>, vector<2x8x128xf32> -> vector<2x8x128xf32>
    "tpu.trace_stop"() : () -> ()
    %233 = vector.extract_strided_slice %208 {offsets = [0, 0, 128], sizes = [2, 8, 128], strides = [1, 1, 1]} : vector<2x8x256xf32> to vector<2x8x128xf32>
    %234 = vector.extract_strided_slice %210 {offsets = [0, 0, 128], sizes = [2, 8, 128], strides = [1, 1, 1]} : vector<2x8x256xf32> to vector<2x8x128xf32>
    %235 = vector.extract_strided_slice %212 {offsets = [0, 0, 128], sizes = [2, 8, 128], strides = [1, 1, 1]} : vector<2x8x256xf32> to vector<2x8x128xf32>
    %236 = arith.truncf %233 : vector<2x8x128xf32> to vector<2x8x128xbf16>
    %237 = arith.truncf %234 : vector<2x8x128xf32> to vector<2x8x128xbf16>
    "tpu.trace_start"() <{level = 10 : i32, message = "bqd,bkd->bqk"}> : () -> ()
    %cst_89 = arith.constant dense<0.000000e+00> : vector<2x8x8xf32>
    %238 = tpu.matmul %236, %237, %cst_89 {dimension_numbers = #tpu.dot_dimension_numbers<[2], [2], [1], [1], [0, 0, 0, 1, 1, 1], [0], [0]>} : vector<2x8x128xbf16>, vector<2x8x128xbf16>, vector<2x8x8xf32> -> vector<2x8x8xf32>
    "tpu.trace_stop"() : () -> ()
    %239 = vector.broadcast %47 : vector<2x1x8xf32> to vector<2x8x8xf32>
    %240 = arith.addf %238, %239 : vector<2x8x8xf32>
    %cst_90 = arith.constant dense<0xFF800000> : vector<2x8xf32>
    %241 = vector.multi_reduction <maximumf>, %240, %cst_90 [2] : vector<2x8x8xf32> to vector<2x8xf32>
    %242 = vector.shape_cast %241 : vector<2x8xf32> to vector<2x8x1xf32>
    %243 = vector.broadcast %242 : vector<2x8x1xf32> to vector<2x8x8xf32>
    %244 = arith.subf %240, %243 : vector<2x8x8xf32>
    %245 = math.exp %244 : vector<2x8x8xf32>
    %cst_91 = arith.constant dense<0.000000e+00> : vector<2x8xf32>
    %246 = vector.multi_reduction <add>, %245, %cst_91 [2] : vector<2x8x8xf32> to vector<2x8xf32>
    %247 = vector.shape_cast %246 : vector<2x8xf32> to vector<2x8x1xf32>
    %248 = vector.broadcast %247 : vector<2x8x1xf32> to vector<2x8x8xf32>
    %249 = arith.divf %245, %248 : vector<2x8x8xf32>
    %250 = arith.truncf %249 : vector<2x8x8xf32> to vector<2x8x8xbf16>
    %251 = arith.truncf %235 : vector<2x8x128xf32> to vector<2x8x128xbf16>
    "tpu.trace_start"() <{level = 10 : i32, message = "bqk,bkd->bqd"}> : () -> ()
    %cst_92 = arith.constant dense<0.000000e+00> : vector<2x8x128xf32>
    %252 = tpu.matmul %250, %251, %cst_92 {dimension_numbers = #tpu.dot_dimension_numbers<[2], [1], [1], [2], [0, 0, 0, 1, 1, 2], [0], [0]>} : vector<2x8x8xbf16>, vector<2x8x128xbf16>, vector<2x8x128xf32> -> vector<2x8x128xf32>
    "tpu.trace_stop"() : () -> ()
    %253 = tpu.concatenate %232, %252 in 2 : vector<2x8x128xf32>, vector<2x8x128xf32> -> vector<2x8x256xf32>
    %254 = vector.shape_cast %253 : vector<2x8x256xf32> to vector<16x256xf32>
    %255 = arith.truncf %254 : vector<16x256xf32> to vector<16x256xbf16>
    %c1_93 = arith.constant 1 : index
    %c0_94 = arith.constant 0 : index
    %c0_95 = arith.constant 0 : index
    %256 = vector.load %arg8[%c1_93, %c0_94, %c0_95] : memref<2x256x128xbf16, #tpu.memory_space<vmem>>, vector<1x256x128xbf16>
    %257 = vector.shape_cast %256 : vector<1x256x128xbf16> to vector<256x128xbf16>
    %cst_96 = arith.constant dense<0.000000e+00> : vector<16x128xf32>
    %258 = tpu.matmul %255, %257, %cst_96 {dimension_numbers = #tpu.dot_dimension_numbers<[1], [0], [0], [1], [0, 0, 1, 1], [], []>} : vector<16x256xbf16>, vector<256x128xbf16>, vector<16x128xf32> -> vector<16x128xf32>
    %c1_97 = arith.constant 1 : index
    %c0_98 = arith.constant 0 : index
    %c0_99 = arith.constant 0 : index
    %259 = vector.load %arg9[%c1_97, %c0_98, %c0_99] : memref<2x1x128xf32, #tpu.memory_space<vmem>>, vector<1x1x128xf32>
    %260 = vector.shape_cast %259 : vector<1x1x128xf32> to vector<1x128xf32>
    %261 = vector.broadcast %260 : vector<1x128xf32> to vector<16x128xf32>
    %262 = arith.addf %258, %261 : vector<16x128xf32>
    %263 = arith.addf %262, %198 : vector<16x128xf32>
    %c1_100 = arith.constant 1 : index
    %c0_101 = arith.constant 0 : index
    %c0_102 = arith.constant 0 : index
    %264 = vector.load %arg10[%c1_100, %c0_101, %c0_102] : memref<2x1x128xf32, #tpu.memory_space<vmem>>, vector<1x1x128xf32>
    %265 = vector.shape_cast %264 : vector<1x1x128xf32> to vector<1x128xf32>
    %c1_103 = arith.constant 1 : index
    %c0_104 = arith.constant 0 : index
    %c0_105 = arith.constant 0 : index
    %266 = vector.load %arg11[%c1_103, %c0_104, %c0_105] : memref<2x1x128xf32, #tpu.memory_space<vmem>>, vector<1x1x128xf32>
    %267 = vector.shape_cast %266 : vector<1x1x128xf32> to vector<1x128xf32>
    %cst_106 = arith.constant dense<0.000000e+00> : vector<16xf32>
    %268 = vector.multi_reduction <add>, %263, %cst_106 [1] : vector<16x128xf32> to vector<16xf32>
    %269 = vector.shape_cast %268 : vector<16xf32> to vector<16x1xf32>
    %cst_107 = arith.constant 3.200000e+01 : f32
    %270 = vector.broadcast %cst_107 : f32 to vector<16x1xf32>
    %271 = arith.divf %269, %270 : vector<16x1xf32>
    %272 = vector.broadcast %271 : vector<16x1xf32> to vector<16x128xf32>
    %273 = arith.subf %263, %272 : vector<16x128xf32>
    %274 = vector.broadcast %4 : vector<1x128xf32> to vector<16x128xf32>
    %275 = arith.mulf %273, %274 : vector<16x128xf32>
    %276 = arith.mulf %275, %275 : vector<16x128xf32>
    %cst_108 = arith.constant dense<0.000000e+00> : vector<16xf32>
    %277 = vector.multi_reduction <add>, %276, %cst_108 [1] : vector<16x128xf32> to vector<16xf32>
    %278 = vector.shape_cast %277 : vector<16xf32> to vector<16x1xf32>
    %cst_109 = arith.constant 3.200000e+01 : f32
    %279 = vector.broadcast %cst_109 : f32 to vector<16x1xf32>
    %280 = arith.divf %278, %279 : vector<16x1xf32>
    %281 = vector.broadcast %271 : vector<16x1xf32> to vector<16x128xf32>
    %282 = arith.subf %263, %281 : vector<16x128xf32>
    %cst_110 = arith.constant 9.99999996E-13 : f32
    %283 = vector.broadcast %cst_110 : f32 to vector<16x1xf32>
    %284 = arith.addf %280, %283 : vector<16x1xf32>
    %285 = math.rsqrt %284 : vector<16x1xf32>
    %286 = vector.broadcast %285 : vector<16x1xf32> to vector<16x128xf32>
    %287 = arith.mulf %282, %286 : vector<16x128xf32>
    %288 = vector.broadcast %265 : vector<1x128xf32> to vector<16x128xf32>
    %289 = arith.mulf %287, %288 : vector<16x128xf32>
    %290 = vector.broadcast %267 : vector<1x128xf32> to vector<16x128xf32>
    %291 = arith.addf %289, %290 : vector<16x128xf32>
    %292 = arith.truncf %291 : vector<16x128xf32> to vector<16x128xbf16>
    %c1_111 = arith.constant 1 : index
    %c0_112 = arith.constant 0 : index
    %c0_113 = arith.constant 0 : index
    %293 = vector.load %arg12[%c1_111, %c0_112, %c0_113] : memref<2x128x128xbf16, #tpu.memory_space<vmem>>, vector<1x128x128xbf16>
    %294 = vector.shape_cast %293 : vector<1x128x128xbf16> to vector<128x128xbf16>
    %cst_114 = arith.constant dense<0.000000e+00> : vector<16x128xf32>
    %295 = tpu.matmul %292, %294, %cst_114 {dimension_numbers = #tpu.dot_dimension_numbers<[1], [0], [0], [1], [0, 0, 1, 1], [], []>} : vector<16x128xbf16>, vector<128x128xbf16>, vector<16x128xf32> -> vector<16x128xf32>
    %c1_115 = arith.constant 1 : index
    %c0_116 = arith.constant 0 : index
    %c0_117 = arith.constant 0 : index
    %296 = vector.load %arg13[%c1_115, %c0_116, %c0_117] : memref<2x1x128xf32, #tpu.memory_space<vmem>>, vector<1x1x128xf32>
    %297 = vector.shape_cast %296 : vector<1x1x128xf32> to vector<1x128xf32>
    %298 = vector.broadcast %297 : vector<1x128xf32> to vector<16x128xf32>
    %299 = arith.addf %295, %298 : vector<16x128xf32>
    %cst_118 = arith.constant 5.000000e-01 : f32
    %300 = vector.broadcast %cst_118 : f32 to vector<16x128xf32>
    %301 = arith.mulf %300, %299 : vector<16x128xf32>
    %cst_119 = arith.constant 4.471500e-02 : f32
    %302 = vector.broadcast %cst_119 : f32 to vector<16x128xf32>
    %303 = arith.mulf %302, %299 : vector<16x128xf32>
    %304 = arith.mulf %303, %299 : vector<16x128xf32>
    %305 = arith.mulf %304, %299 : vector<16x128xf32>
    %306 = arith.addf %299, %305 : vector<16x128xf32>
    %cst_120 = arith.constant 0.797884583 : f32
    %307 = vector.broadcast %cst_120 : f32 to vector<16x128xf32>
    %308 = arith.mulf %307, %306 : vector<16x128xf32>
    %309 = math.tanh %308 : vector<16x128xf32>
    %cst_121 = arith.constant 1.000000e+00 : f32
    %310 = vector.broadcast %cst_121 : f32 to vector<16x128xf32>
    %311 = arith.addf %310, %309 : vector<16x128xf32>
    %312 = arith.mulf %301, %311 : vector<16x128xf32>
    %313 = arith.truncf %312 : vector<16x128xf32> to vector<16x128xbf16>
    %c1_122 = arith.constant 1 : index
    %c0_123 = arith.constant 0 : index
    %c0_124 = arith.constant 0 : index
    %314 = vector.load %arg14[%c1_122, %c0_123, %c0_124] : memref<2x128x128xbf16, #tpu.memory_space<vmem>>, vector<1x128x128xbf16>
    %315 = vector.shape_cast %314 : vector<1x128x128xbf16> to vector<128x128xbf16>
    %cst_125 = arith.constant dense<0.000000e+00> : vector<16x128xf32>
    %316 = tpu.matmul %313, %315, %cst_125 {dimension_numbers = #tpu.dot_dimension_numbers<[1], [0], [0], [1], [0, 0, 1, 1], [], []>} : vector<16x128xbf16>, vector<128x128xbf16>, vector<16x128xf32> -> vector<16x128xf32>
    %c1_126 = arith.constant 1 : index
    %c0_127 = arith.constant 0 : index
    %c0_128 = arith.constant 0 : index
    %317 = vector.load %arg15[%c1_126, %c0_127, %c0_128] : memref<2x1x128xf32, #tpu.memory_space<vmem>>, vector<1x1x128xf32>
    %318 = vector.shape_cast %317 : vector<1x1x128xf32> to vector<1x128xf32>
    %319 = vector.broadcast %318 : vector<1x128xf32> to vector<16x128xf32>
    %320 = arith.addf %316, %319 : vector<16x128xf32>
    %321 = arith.addf %320, %291 : vector<16x128xf32>
    %c1_129 = arith.constant 1 : index
    %c0_130 = arith.constant 0 : index
    %c0_131 = arith.constant 0 : index
    %322 = vector.load %arg16[%c1_129, %c0_130, %c0_131] : memref<2x1x128xf32, #tpu.memory_space<vmem>>, vector<1x1x128xf32>
    %323 = vector.shape_cast %322 : vector<1x1x128xf32> to vector<1x128xf32>
    %c1_132 = arith.constant 1 : index
    %c0_133 = arith.constant 0 : index
    %c0_134 = arith.constant 0 : index
    %324 = vector.load %arg17[%c1_132, %c0_133, %c0_134] : memref<2x1x128xf32, #tpu.memory_space<vmem>>, vector<1x1x128xf32>
    %325 = vector.shape_cast %324 : vector<1x1x128xf32> to vector<1x128xf32>
    %cst_135 = arith.constant dense<0.000000e+00> : vector<16xf32>
    %326 = vector.multi_reduction <add>, %321, %cst_135 [1] : vector<16x128xf32> to vector<16xf32>
    %327 = vector.shape_cast %326 : vector<16xf32> to vector<16x1xf32>
    %cst_136 = arith.constant 3.200000e+01 : f32
    %328 = vector.broadcast %cst_136 : f32 to vector<16x1xf32>
    %329 = arith.divf %327, %328 : vector<16x1xf32>
    %330 = vector.broadcast %329 : vector<16x1xf32> to vector<16x128xf32>
    %331 = arith.subf %321, %330 : vector<16x128xf32>
    %332 = vector.broadcast %4 : vector<1x128xf32> to vector<16x128xf32>
    %333 = arith.mulf %331, %332 : vector<16x128xf32>
    %334 = arith.mulf %333, %333 : vector<16x128xf32>
    %cst_137 = arith.constant dense<0.000000e+00> : vector<16xf32>
    %335 = vector.multi_reduction <add>, %334, %cst_137 [1] : vector<16x128xf32> to vector<16xf32>
    %336 = vector.shape_cast %335 : vector<16xf32> to vector<16x1xf32>
    %cst_138 = arith.constant 3.200000e+01 : f32
    %337 = vector.broadcast %cst_138 : f32 to vector<16x1xf32>
    %338 = arith.divf %336, %337 : vector<16x1xf32>
    %339 = vector.broadcast %329 : vector<16x1xf32> to vector<16x128xf32>
    %340 = arith.subf %321, %339 : vector<16x128xf32>
    %cst_139 = arith.constant 9.99999996E-13 : f32
    %341 = vector.broadcast %cst_139 : f32 to vector<16x1xf32>
    %342 = arith.addf %338, %341 : vector<16x1xf32>
    %343 = math.rsqrt %342 : vector<16x1xf32>
    %344 = vector.broadcast %343 : vector<16x1xf32> to vector<16x128xf32>
    %345 = arith.mulf %340, %344 : vector<16x128xf32>
    %346 = vector.broadcast %323 : vector<1x128xf32> to vector<16x128xf32>
    %347 = arith.mulf %345, %346 : vector<16x128xf32>
    %348 = vector.broadcast %325 : vector<1x128xf32> to vector<16x128xf32>
    %349 = arith.addf %347, %348 : vector<16x128xf32>
    %350 = vector.shape_cast %349 : vector<16x128xf32> to vector<2x8x128xf32>
    %351 = vector.extract_strided_slice %350 {offsets = [0, 0, 0], sizes = [2, 1, 128], strides = [1, 1, 1]} : vector<2x8x128xf32> to vector<2x1x128xf32>
    %352 = vector.shape_cast %351 : vector<2x1x128xf32> to vector<2x128xf32>
    %353 = arith.truncf %352 : vector<2x128xf32> to vector<2x128xbf16>
    %c0_140 = arith.constant 0 : index
    %c0_141 = arith.constant 0 : index
    %354 = vector.load %arg18[%c0_140, %c0_141] : memref<128x128xbf16, #tpu.memory_space<vmem>>, vector<128x128xbf16>
    %cst_142 = arith.constant dense<0.000000e+00> : vector<2x128xf32>
    %355 = tpu.matmul %353, %354, %cst_142 {dimension_numbers = #tpu.dot_dimension_numbers<[1], [0], [0], [1], [0, 0, 1, 1], [], []>} : vector<2x128xbf16>, vector<128x128xbf16>, vector<2x128xf32> -> vector<2x128xf32>
    %c0_143 = arith.constant 0 : index
    %c0_144 = arith.constant 0 : index
    %356 = vector.load %arg19[%c0_143, %c0_144] : memref<1x128xf32, #tpu.memory_space<vmem>>, vector<1x128xf32>
    %357 = vector.broadcast %356 : vector<1x128xf32> to vector<2x128xf32>
    %358 = arith.addf %355, %357 : vector<2x128xf32>
    %359 = math.tanh %358 : vector<2x128xf32>
    %360 = arith.truncf %359 : vector<2x128xf32> to vector<2x128xbf16>
    %c0_145 = arith.constant 0 : index
    %c0_146 = arith.constant 0 : index
    %361 = vector.load %arg20[%c0_145, %c0_146] : memref<128x128xbf16, #tpu.memory_space<vmem>>, vector<128x128xbf16>
    %cst_147 = arith.constant dense<0.000000e+00> : vector<2x128xf32>
    %362 = tpu.matmul %360, %361, %cst_147 {dimension_numbers = #tpu.dot_dimension_numbers<[1], [0], [0], [1], [0, 0, 1, 1], [], []>} : vector<2x128xbf16>, vector<128x128xbf16>, vector<2x128xf32> -> vector<2x128xf32>
    %c0_148 = arith.constant 0 : index
    %c0_149 = arith.constant 0 : index
    %363 = vector.load %arg21[%c0_148, %c0_149] : memref<1x128xf32, #tpu.memory_space<vmem>>, vector<1x128xf32>
    %364 = vector.broadcast %363 : vector<1x128xf32> to vector<2x128xf32>
    %365 = arith.addf %362, %364 : vector<2x128xf32>
    %c0_150 = arith.constant 0 : index
    %c0_151 = arith.constant 0 : index
    %366 = vector.load %arg22[%c0_150, %c0_151] : memref<2x128xf32, #tpu.memory_space<vmem>>, vector<2x128xf32>
    tpu.vector_store %arg22[%c0_150, %c0_151], %365 {strides = array<i32>} : memref<2x128xf32, #tpu.memory_space<vmem>>, vector<2x128xf32>,
    return
  }
}

</mosaic_0001>

<llo_original>
// kernel: bert_forward.1
$region0: #{bert_forward.1}
  #allocation0 [shape = 'u32[]', space=smem, size = 0x4, offset = 0x4, fixed_abs, tag = 'smem constant byte address 0x4 - core index']
  #allocation1 [shape = 'u32[72,128]{1,0:T(1,128)}', space=vmem, size = 0x9000, scoped, tag = 'internal scratch']
  %s0 = inlined_call_operand.vmem [shape: f32[16,128], index: 0, kind: input, shape index: {}]
  %s1 = inlined_call_operand.vmem [shape: f32[64,128], index: 1, kind: input, shape index: {}]
  %s2 = inlined_call_operand.vmem [shape: f32[2,128], index: 2, kind: input, shape index: {}]
  %s3 = inlined_call_operand.vmem [shape: s32[2,8], index: 3, kind: input, shape index: {}]
  %s4 = inlined_call_operand.hbm [shape: f32[1,128], index: 4, kind: input, shape index: {}]
  %s5 = inlined_call_operand.vmem [shape: f32[1,128], index: 5, kind: input, shape index: {}]
  %s6 = inlined_call_operand.hbm [shape: bf16[2,128,768], index: 6, kind: input, shape index: {}]
  %s7 = inlined_call_operand.hbm [shape: f32[2,1,768], index: 7, kind: input, shape index: {}]
  %s8 = inlined_call_operand.hbm [shape: bf16[2,256,128], index: 8, kind: input, shape index: {}]
  %s9 = inlined_call_operand.vmem [shape: f32[2,1,128], index: 9, kind: input, shape index: {}]
  %s10 = inlined_call_operand.vmem [shape: f32[2,1,128], index: 10, kind: input, shape index: {}]
  %s11 = inlined_call_operand.vmem [shape: f32[2,1,128], index: 11, kind: input, shape index: {}]
  %s12 = inlined_call_operand.vmem [shape: bf16[2,128,128], index: 12, kind: input, shape index: {}]
  %s13 = inlined_call_operand.vmem [shape: f32[2,1,128], index: 13, kind: input, shape index: {}]
  %s14 = inlined_call_operand.hbm [shape: bf16[2,128,128], index: 14, kind: input, shape index: {}]
  %s15 = inlined_call_operand.vmem [shape: f32[2,1,128], index: 15, kind: input, shape index: {}]
  %s16 = inlined_call_operand.hbm [shape: f32[2,1,128], index: 16, kind: input, shape index: {}]
  %s17 = inlined_call_operand.hbm [shape: f32[2,1,128], index: 17, kind: input, shape index: {}]
  %s18 = inlined_call_operand.hbm [shape: bf16[128,128], index: 18, kind: input, shape index: {}]
  %s19 = inlined_call_operand.hbm [shape: f32[1,128], index: 19, kind: input, shape index: {}]
  %s20 = inlined_call_operand.hbm [shape: bf16[128,128], index: 20, kind: input, shape index: {}]
  %s21 = inlined_call_operand.vmem [shape: f32[1,128], index: 21, kind: input, shape index: {}]
  %s22 = inlined_call_operand.hbm [shape: f32[2,128], index: 22, kind: output, shape index: {}]
  %s23 = sld [smem:[#allocation0]]
  $region138: #{bert_forward.1} parent=0
    _
  %s25 = ssub.s32 1, %s23
  %s26 = scalar_select 0, %s25, %s23
  $region1: #{bert_forward.1} parent=0
    #allocation2 [shape = 'u8[512]{0}', space=vmem, size = 0x400, scoped, tag = 'input window, operand 4, single buffered']
    #allocation3 [shape = 's32[1]{0}', space=sflag, size = 0x4, scoped, tag = 'scoped memory for bert_forward.1']
    #allocation4 [shape = 's32[1]{0}', space=sflag, size = 0x4, scoped, tag = 'scoped memory for bert_forward.1']
    #allocation5 [shape = 'u8[393216]{0}', space=vmem, size = 0x60000, scoped, tag = 'input window, operand 6, single buffered']
    #allocation6 [shape = 's32[1]{0}', space=sflag, size = 0x4, scoped, tag = 'scoped memory for bert_forward.1']
    #allocation7 [shape = 'u8[6144]{0}', space=vmem, size = 0x1800, scoped, tag = 'input window, operand 7, single buffered']
    #allocation8 [shape = 'u8[131072]{0}', space=vmem, size = 0x20000, scoped, tag = 'input window, operand 8, single buffered']
    #allocation9 [shape = 's32[1]{0}', space=sflag, size = 0x4, scoped, tag = 'scoped memory for bert_forward.1']
    #allocation10 [shape = 'u8[65536]{0}', space=vmem, size = 0x10000, scoped, tag = 'input window, operand 14, single buffered']
    #allocation11 [shape = 'u8[1024]{0}', space=vmem, size = 0x400, scoped, tag = 'input window, operand 16, single buffered']
    #allocation12 [shape = 's32[1]{0}', space=sflag, size = 0x4, scoped, tag = 'scoped memory for bert_forward.1']
    #allocation13 [shape = 'u8[1024]{0}', space=vmem, size = 0x400, scoped, tag = 'input window, operand 17, single buffered']
    #allocation14 [shape = 'u8[32768]{0}', space=vmem, size = 0x8000, scoped, tag = 'input window, operand 18, single buffered']
    #allocation15 [shape = 's32[1]{0}', space=sflag, size = 0x4, scoped, tag = 'scoped memory for bert_forward.1']
    #allocation16 [shape = 'u8[512]{0}', space=vmem, size = 0x400, scoped, tag = 'input window, operand 19, single buffered']
    #allocation17 [shape = 'u8[32768]{0}', space=vmem, size = 0x8000, scoped, tag = 'input window, operand 20, single buffered']
    #allocation18 [shape = 's32[1]{0}', space=sflag, size = 0x4, scoped, tag = 'scoped memory for bert_forward.1']
    #allocation19 [shape = 'u8[1024]{0}', space=vmem, size = 0x400, scoped, tag = 'output window, operand 0, single buffered']
    %27 = vsyncpa [#allocation3], 0
    %28 = vsyncpa [#allocation6], 0
    %29 = vsyncpa [#allocation9], 0
    %30 = vsyncpa [#allocation12], 0
    %31 = vsyncpa [#allocation15], 0
    %32 = vsyncpa [#allocation18], 0
    %33 = vsyncpa [#allocation4], 0
    // Predicated region
    $region2: #{bert_forward.1} parent=1 // pred_check
      _
    $region3: #{bert_forward.1} parent=1 // pred_check_branch
      %35 = sbr.rel (0) target = $region5
    $region4: #{bert_forward.1} parent=1 // pred_region
      _
    $region5: #{bert_forward.1} parent=1 // pred_fallthru
      _
    // Predicated region
    $region6: #{bert_forward.1} parent=1 // pred_check
      _
    $region7: #{bert_forward.1} parent=1 // pred_check_branch
      %37 = sbr.rel (0) target = $region9
    $region8: #{bert_forward.1} parent=1 // pred_region
      _
    $region9: #{bert_forward.1} parent=1 // pred_fallthru
      _
    // Predicated region
    $region10: #{bert_forward.1} parent=1 // pred_check
      _
    $region11: #{bert_forward.1} parent=1 // pred_check_branch
      %39 = sbr.rel (0) target = $region13
    $region12: #{bert_forward.1} parent=1 // pred_region
      _
    $region13: #{bert_forward.1} parent=1 // pred_fallthru
      _
    // Predicated region
    $region14: #{bert_forward.1} parent=1 // pred_check
      _
    $region15: #{bert_forward.1} parent=1 // pred_check_branch
      %41 = sbr.rel (0) target = $region17
    $region16: #{bert_forward.1} parent=1 // pred_region
      _
    $region17: #{bert_forward.1} parent=1 // pred_fallthru
      _
    // Predicated region
    $region18: #{bert_forward.1} parent=1 // pred_check
      _
    $region19: #{bert_forward.1} parent=1 // pred_check_branch
      %43 = sbr.rel (0) target = $region21
    $region20: #{bert_forward.1} parent=1 // pred_region
      %45 = vsyncadd [#allocation3], 0
      %s47 = sshll.u32 %s4, 4
      %s48 = int_to_ptr.hbm [resolvable:$true] %s47
      %s49 = sshll.u32 [#allocation2], 4
      %s50 = int_to_ptr.vmem [resolvable:$true] %s49
      %52 = dma.hbm_to_vmem [thread:$0]  %s48, 16, %s50, [#allocation3]
    $region21: #{bert_forward.1} parent=1 // pred_fallthru
      _
    // Predicated region
    $region22: #{bert_forward.1} parent=1 // pred_check
      _
    $region23: #{bert_forward.1} parent=1 // pred_check_branch
      %54 = sbr.rel (0) target = $region25
    $region24: #{bert_forward.1} parent=1 // pred_region
      _
    $region25: #{bert_forward.1} parent=1 // pred_fallthru
      _
    // Predicated region
    $region26: #{bert_forward.1} parent=1 // pred_check
      _
    $region27: #{bert_forward.1} parent=1 // pred_check_branch
      %56 = sbr.rel (0) target = $region29
    $region28: #{bert_forward.1} parent=1 // pred_region
      %58 = vsyncadd [#allocation6], 0
      %s59 = sshll.u32 %s6, 4
      %s60 = int_to_ptr.hbm [resolvable:$true] %s59
      %s61 = sshll.u32 [#allocation5], 4
      %s62 = int_to_ptr.vmem [resolvable:$true] %s61
      %67 = dma.hbm_to_vmem [thread:$0]  %s60, 12288, %s62, [#allocation6], 384, 384, 24
    $region29: #{bert_forward.1} parent=1 // pred_fallthru
      _
    // Predicated region
    $region30: #{bert_forward.1} parent=1 // pred_check
      _
    $region31: #{bert_forward.1} parent=1 // pred_check_branch
      %69 = sbr.rel (0) target = $region33
    $region32: #{bert_forward.1} parent=1 // pred_region
      %71 = vsyncadd [#allocation6], 0
      %s72 = sshll.u32 %s7, 4
      %s73 = int_to_ptr.hbm [resolvable:$true] %s72
      %s74 = sshll.u32 [#allocation7], 4
      %s75 = int_to_ptr.vmem [resolvable:$true] %s74
      %80 = dma.hbm_to_vmem [thread:$0]  %s73, 192, %s75, [#allocation6], 96, 96, 6
    $region33: #{bert_forward.1} parent=1 // pred_fallthru
      _
    // Predicated region
    $region34: #{bert_forward.1} parent=1 // pred_check
      _
    $region35: #{bert_forward.1} parent=1 // pred_check_branch
      %82 = sbr.rel (0) target = $region37
    $region36: #{bert_forward.1} parent=1 // pred_region
      %84 = vsyncadd [#allocation9], 0
      %s85 = sshll.u32 %s8, 4
      %s86 = int_to_ptr.hbm [resolvable:$true] %s85
      %s87 = sshll.u32 [#allocation8], 4
      %s88 = int_to_ptr.vmem [resolvable:$true] %s87
      %93 = dma.hbm_to_vmem [thread:$0]  %s86, 4096, %s88, [#allocation9], 64, 64, 4
    $region37: #{bert_forward.1} parent=1 // pred_fallthru
      _
    // Predicated region
    $region38: #{bert_forward.1} parent=1 // pred_check
      _
    $region39: #{bert_forward.1} parent=1 // pred_check_branch
      %95 = sbr.rel (0) target = $region41
    $region40: #{bert_forward.1} parent=1 // pred_region
      _
    $region41: #{bert_forward.1} parent=1 // pred_fallthru
      _
    // Predicated region
    $region42: #{bert_forward.1} parent=1 // pred_check
      _
    $region43: #{bert_forward.1} parent=1 // pred_check_branch
      %97 = sbr.rel (0) target = $region45
    $region44: #{bert_forward.1} parent=1 // pred_region
      _
    $region45: #{bert_forward.1} parent=1 // pred_fallthru
      _
    // Predicated region
    $region46: #{bert_forward.1} parent=1 // pred_check
      _
    $region47: #{bert_forward.1} parent=1 // pred_check_branch
      %99 = sbr.rel (0) target = $region49
    $region48: #{bert_forward.1} parent=1 // pred_region
      _
    $region49: #{bert_forward.1} parent=1 // pred_fallthru
      _
    // Predicated region
    $region50: #{bert_forward.1} parent=1 // pred_check
      _
    $region51: #{bert_forward.1} parent=1 // pred_check_branch
      %101 = sbr.rel (0) target = $region53
    $region52: #{bert_forward.1} parent=1 // pred_region
      _
    $region53: #{bert_forward.1} parent=1 // pred_fallthru
      _
    // Predicated region
    $region54: #{bert_forward.1} parent=1 // pred_check
      _
    $region55: #{bert_forward.1} parent=1 // pred_check_branch
      %103 = sbr.rel (0) target = $region57
    $region56: #{bert_forward.1} parent=1 // pred_region
      _
    $region57: #{bert_forward.1} parent=1 // pred_fallthru
      _
    // Predicated region
    $region58: #{bert_forward.1} parent=1 // pred_check
      _
    $region59: #{bert_forward.1} parent=1 // pred_check_branch
      %105 = sbr.rel (0) target = $region61
    $region60: #{bert_forward.1} parent=1 // pred_region
      %107 = vsyncadd [#allocation9], 0
      %s108 = sshll.u32 %s14, 4
      %s109 = int_to_ptr.hbm [resolvable:$true] %s108
      %s110 = sshll.u32 [#allocation10], 4
      %s111 = int_to_ptr.vmem [resolvable:$true] %s110
      %116 = dma.hbm_to_vmem [thread:$0]  %s109, 2048, %s111, [#allocation9], 64, 64, 4
    $region61: #{bert_forward.1} parent=1 // pred_fallthru
      _
    // Predicated region
    $region62: #{bert_forward.1} parent=1 // pred_check
      _
    $region63: #{bert_forward.1} parent=1 // pred_check_branch
      %118 = sbr.rel (0) target = $region65
    $region64: #{bert_forward.1} parent=1 // pred_region
      _
    $region65: #{bert_forward.1} parent=1 // pred_fallthru
      _
    // Predicated region
    $region66: #{bert_forward.1} parent=1 // pred_check
      _
    $region67: #{bert_forward.1} parent=1 // pred_check_branch
      %120 = sbr.rel (0) target = $region69
    $region68: #{bert_forward.1} parent=1 // pred_region
      %122 = vsyncadd [#allocation12], 0
      %s123 = sshll.u32 %s16, 4
      %s124 = int_to_ptr.hbm [resolvable:$true] %s123
      %s125 = sshll.u32 [#allocation11], 4
      %s126 = int_to_ptr.vmem [resolvable:$true] %s125
      %131 = dma.hbm_to_vmem [thread:$0]  %s124, 32, %s126, [#allocation12], 16, 16, 1
    $region69: #{bert_forward.1} parent=1 // pred_fallthru
      _
    // Predicated region
    $region70: #{bert_forward.1} parent=1 // pred_check
      _
    $region71: #{bert_forward.1} parent=1 // pred_check_branch
      %133 = sbr.rel (0) target = $region73
    $region72: #{bert_forward.1} parent=1 // pred_region
      %135 = vsyncadd [#allocation12], 0
      %s136 = sshll.u32 %s17, 4
      %s137 = int_to_ptr.hbm [resolvable:$true] %s136
      %s138 = sshll.u32 [#allocation13], 4
      %s139 = int_to_ptr.vmem [resolvable:$true] %s138
      %144 = dma.hbm_to_vmem [thread:$0]  %s137, 32, %s139, [#allocation12], 16, 16, 1
    $region73: #{bert_forward.1} parent=1 // pred_fallthru
      _
    // Predicated region
    $region74: #{bert_forward.1} parent=1 // pred_check
      _
    $region75: #{bert_forward.1} parent=1 // pred_check_branch
      %146 = sbr.rel (0) target = $region77
    $region76: #{bert_forward.1} parent=1 // pred_region
      %148 = vsyncadd [#allocation15], 0
      %s149 = sshll.u32 %s18, 4
      %s150 = int_to_ptr.hbm [resolvable:$true] %s149
      %s151 = sshll.u32 [#allocation14], 4
      %s152 = int_to_ptr.vmem [resolvable:$true] %s151
      %157 = dma.hbm_to_vmem [thread:$0]  %s150, 1024, %s152, [#allocation15], 64, 64, 4
    $region77: #{bert_forward.1} parent=1 // pred_fallthru
      _
    // Predicated region
    $region78: #{bert_forward.1} parent=1 // pred_check
      _
    $region79: #{bert_forward.1} parent=1 // pred_check_branch
      %159 = sbr.rel (0) target = $region81
    $region80: #{bert_forward.1} parent=1 // pred_region
      %161 = vsyncadd [#allocation15], 0
      %s163 = sshll.u32 %s19, 4
      %s164 = int_to_ptr.hbm [resolvable:$true] %s163
      %s165 = sshll.u32 [#allocation16], 4
      %s166 = int_to_ptr.vmem [resolvable:$true] %s165
      %168 = dma.hbm_to_vmem [thread:$0]  %s164, 16, %s166, [#allocation15]
    $region81: #{bert_forward.1} parent=1 // pred_fallthru
      _
    // Predicated region
    $region82: #{bert_forward.1} parent=1 // pred_check
      _
    $region83: #{bert_forward.1} parent=1 // pred_check_branch
      %170 = sbr.rel (0) target = $region85
    $region84: #{bert_forward.1} parent=1 // pred_region
      %172 = vsyncadd [#allocation18], 0
      %s173 = sshll.u32 %s20, 4
      %s174 = int_to_ptr.hbm [resolvable:$true] %s173
      %s175 = sshll.u32 [#allocation17], 4
      %s176 = int_to_ptr.vmem [resolvable:$true] %s175
      %181 = dma.hbm_to_vmem [thread:$0]  %s174, 1024, %s176, [#allocation18], 64, 64, 4
    $region85: #{bert_forward.1} parent=1 // pred_fallthru
      _
    // Predicated region
    $region86: #{bert_forward.1} parent=1 // pred_check
      _
    $region87: #{bert_forward.1} parent=1 // pred_check_branch
      %183 = sbr.rel (0) target = $region89
    $region88: #{bert_forward.1} parent=1 // pred_region
      _
    $region89: #{bert_forward.1} parent=1 // pred_fallthru
      _
    // Predicated region
    $region90: #{bert_forward.1} parent=1 // pred_check
      _
    $region91: #{bert_forward.1} parent=1 // pred_check_branch
      %185 = sbr.rel (0) target = $region93
    $region92: #{bert_forward.1} parent=1 // pred_region
      %187 = dma.done [#allocation3], 16
    $region93: #{bert_forward.1} parent=1 // pred_fallthru
      _
    // Predicated region
    $region94: #{bert_forward.1} parent=1 // pred_check
      _
    $region95: #{bert_forward.1} parent=1 // pred_check_branch
      %189 = sbr.rel (0) target = $region97
    $region96: #{bert_forward.1} parent=1 // pred_region
      %191 = dma.done [#allocation6], 12288
    $region97: #{bert_forward.1} parent=1 // pred_fallthru
      _
    // Predicated region
    $region98: #{bert_forward.1} parent=1 // pred_check
      _
    $region99: #{bert_forward.1} parent=1 // pred_check_branch
      %193 = sbr.rel (0) target = $region101
    $region100: #{bert_forward.1} parent=1 // pred_region
      %195 = dma.done [#allocation6], 192
    $region101: #{bert_forward.1} parent=1 // pred_fallthru
      _
    // Predicated region
    $region102: #{bert_forward.1} parent=1 // pred_check
      _
    $region103: #{bert_forward.1} parent=1 // pred_check_branch
      %197 = sbr.rel (0) target = $region105
    $region104: #{bert_forward.1} parent=1 // pred_region
      %199 = dma.done [#allocation9], 4096
    $region105: #{bert_forward.1} parent=1 // pred_fallthru
      _
    // Predicated region
    $region106: #{bert_forward.1} parent=1 // pred_check
      _
    $region107: #{bert_forward.1} parent=1 // pred_check_branch
      %201 = sbr.rel (0) target = $region109
    $region108: #{bert_forward.1} parent=1 // pred_region
      %203 = dma.done [#allocation9], 2048
    $region109: #{bert_forward.1} parent=1 // pred_fallthru
      _
    // Predicated region
    $region110: #{bert_forward.1} parent=1 // pred_check
      _
    $region111: #{bert_forward.1} parent=1 // pred_check_branch
      %205 = sbr.rel (0) target = $region113
    $region112: #{bert_forward.1} parent=1 // pred_region
      %207 = dma.done [#allocation12], 32
    $region113: #{bert_forward.1} parent=1 // pred_fallthru
      _
    // Predicated region
    $region114: #{bert_forward.1} parent=1 // pred_check
      _
    $region115: #{bert_forward.1} parent=1 // pred_check_branch
      %209 = sbr.rel (0) target = $region117
    $region116: #{bert_forward.1} parent=1 // pred_region
      %211 = dma.done [#allocation12], 32
    $region117: #{bert_forward.1} parent=1 // pred_fallthru
      _
    // Predicated region
    $region118: #{bert_forward.1} parent=1 // pred_check
      _
    $region119: #{bert_forward.1} parent=1 // pred_check_branch
      %213 = sbr.rel (0) target = $region121
    $region120: #{bert_forward.1} parent=1 // pred_region
      %215 = dma.done [#allocation15], 1024
    $region121: #{bert_forward.1} parent=1 // pred_fallthru
      _
    // Predicated region
    $region122: #{bert_forward.1} parent=1 // pred_check
      _
    $region123: #{bert_forward.1} parent=1 // pred_check_branch
      %217 = sbr.rel (0) target = $region125
    $region124: #{bert_forward.1} parent=1 // pred_region
      %219 = dma.done [#allocation15], 16
    $region125: #{bert_forward.1} parent=1 // pred_fallthru
      _
    // Predicated region
    $region126: #{bert_forward.1} parent=1 // pred_check
      _
    $region127: #{bert_forward.1} parent=1 // pred_check_branch
      %221 = sbr.rel (0) target = $region129
    $region128: #{bert_forward.1} parent=1 // pred_region
      %223 = dma.done [#allocation18], 1024
    $region129: #{bert_forward.1} parent=1 // pred_fallthru
      _
    %v225 = vlaneseq
    %v226 = vand.u32 %v225, 127
    %vm227 = vcmp.lt.s32.totalorder %v226, 32
    %v228 = vsel %vm227, 1, 0
    %v229 = vcvt.s32.f32 %v228
    %v230 = vld [vmem:[%s0] sm:$0xff]
    %v231 = vld [vmem:[%s0 + $0x8] sm:$0xff]
    %v232 = vld [vmem:[%s1] sm:$0xff]
    %v233 = vadd.f32 %v230, %v232
    %v234 = vadd.f32 %v231, %v232
    %v235 = vld [vmem:[%s2] sm:$0x1]
    %v236 = vperm.slane %v235, 0
    %v237 = vadd.f32 %v233, %v236
    %v238 = vadd.f32 %v234, %v236
    %v239 = vld [vmem:[#allocation2] sm:$0x1]
    %v240 = vld [vmem:[%s5] sm:$0x1]
    %241 = vadd.xlane.f32.xlu0 %v237
    %v242 = vpop.xlane.xlu0 %241
    %243 = vadd.xlane.f32.xlu0 %v238
    %v244 = vpop.xlane.xlu0 %243
    %v245 = vrcp.pop 32.0
    %v246 = vmul.f32 32.0, %v245
    %v247 = vsub.f32 1.0, %v246
    %v248 = vmul.f32 %v245, %v247
    %v249 = vadd.f32 %v245, %v248
    %vm250 = vweird.f32 %v245
    %v251 = vsel %vm250, %v245, %v249
    %v252 = vmul.f32 %v242, %v251
    %v253 = vmul.f32 %v244, %v251
    %v254 = vsub.f32 %v237, %v252
    %v255 = vsub.f32 %v238, %v253
    %v256 = vmul.f32 %v254, %v229
    %v257 = vmul.f32 %v255, %v229
    %v258 = vmul.f32 %v256, %v256
    %v259 = vmul.f32 %v257, %v257
    %260 = vadd.xlane.f32.xlu0 %v258
    %v261 = vpop.xlane.xlu0 %260
    %262 = vadd.xlane.f32.xlu0 %v259
    %v263 = vpop.xlane.xlu0 %262
    %v264 = vmul.f32 %v261, %v251
    %v265 = vmul.f32 %v263, %v251
    %v266 = vadd.f32 %v264, 1e-12
    %v267 = vadd.f32 %v265, 1e-12
    %v268 = vrsqrt.pop %v266
    %v269 = vmul.f32 %v268, %v266
    %v270 = vmul.f32 %v269, %v268
    %v271 = vmul.f32 0.5, %v270
    %v272 = vsub.f32 1.5, %v271
    %v273 = vmul.f32 %v268, %v272
    %vm274 = vweird.f32 %v266
    %vm275 = vweird.f32 %v268
    %vm276 = vmor %vm274, %vm275
    %v277 = vsel %vm276, %v268, %v273
    %v278 = vrsqrt.pop %v267
    %v279 = vmul.f32 %v278, %v267
    %v280 = vmul.f32 %v279, %v278
    %v281 = vmul.f32 0.5, %v280
    %v282 = vsub.f32 1.5, %v281
    %v283 = vmul.f32 %v278, %v282
    %vm284 = vweird.f32 %v267
    %vm285 = vweird.f32 %v278
    %vm286 = vmor %vm284, %vm285
    %v287 = vsel %vm286, %v278, %v283
    %v288 = vmul.f32 %v254, %v277
    %v289 = vmul.f32 %v255, %v287
    %v291 = vperm.slane %v239, 0
    %v293 = vmul.f32 %v288, %v291
    %v294 = vmul.f32 %v289, %v291
    %v296 = vperm.slane %v240, 0
    %v298 = vadd.f32 %v293, %v296
    %v299 = vadd.f32 %v294, %v296
    %v300 = vld [vmem:[%s3] sm:$0x3]
    %v301 = vcvt.s32.f32 %v300
    %v302 = vsub.f32 1.0, %v301
    %v303 = vmul.f32 %v302, -1e+09
    %v305 = vrot.slane %v303, 1
    %v306 = vpack.c.bf16 %v299, %v298
    %v307 = vld [vmem:[#allocation5] sm:$0xff]
    %v308 = vld [vmem:[#allocation5 + $0x8] sm:$0xff]
    %v309 = vld [vmem:[#allocation5 + $0x10] sm:$0xff]
    %v310 = vld [vmem:[#allocation5 + $0x18] sm:$0xff]
    %v311 = vld [vmem:[#allocation5 + $0x20] sm:$0xff]
    %v312 = vld [vmem:[#allocation5 + $0x28] sm:$0xff]
    %v313 = vld [vmem:[#allocation5 + $0x30] sm:$0xff]
    %v314 = vld [vmem:[#allocation5 + $0x38] sm:$0xff]
    %v315 = vld [vmem:[#allocation5 + $0x40] sm:$0xff]
    %v316 = vld [vmem:[#allocation5 + $0x48] sm:$0xff]
    %v317 = vld [vmem:[#allocation5 + $0x50] sm:$0xff]
    %v318 = vld [vmem:[#allocation5 + $0x58] sm:$0xff]
    %v319 = vld [vmem:[#allocation5 + $0x60] sm:$0xff]
    %v320 = vld [vmem:[#allocation5 + $0x68] sm:$0xff]
    %v321 = vld [vmem:[#allocation5 + $0x70] sm:$0xff]
    %v322 = vld [vmem:[#allocation5 + $0x78] sm:$0xff]
    %v323 = vld [vmem:[#allocation5 + $0x80] sm:$0xff]
    %v324 = vld [vmem:[#allocation5 + $0x88] sm:$0xff]
    %v325 = vld [vmem:[#allocation5 + $0x90] sm:$0xff]
    %v326 = vld [vmem:[#allocation5 + $0x98] sm:$0xff]
    %v327 = vld [vmem:[#allocation5 + $0xa0] sm:$0xff]
    %v328 = vld [vmem:[#allocation5 + $0xa8] sm:$0xff]
    %v329 = vld [vmem:[#allocation5 + $0xb0] sm:$0xff]
    %v330 = vld [vmem:[#allocation5 + $0xb8] sm:$0xff]
    %v331 = vld [vmem:[#allocation5 + $0xc0] sm:$0xff]
    %v332 = vld [vmem:[#allocation5 + $0xc8] sm:$0xff]
    %v333 = vld [vmem:[#allocation5 + $0xd0] sm:$0xff]
    %v334 = vld [vmem:[#allocation5 + $0xd8] sm:$0xff]
    %v335 = vld [vmem:[#allocation5 + $0xe0] sm:$0xff]
    %v336 = vld [vmem:[#allocation5 + $0xe8] sm:$0xff]
    %v337 = vld [vmem:[#allocation5 + $0xf0] sm:$0xff]
    %v338 = vld [vmem:[#allocation5 + $0xf8] sm:$0xff]
    %v339 = vld [vmem:[#allocation5 + $0x100] sm:$0xff]
    %v340 = vld [vmem:[#allocation5 + $0x108] sm:$0xff]
    %v341 = vld [vmem:[#allocation5 + $0x110] sm:$0xff]
    %v342 = vld [vmem:[#allocation5 + $0x118] sm:$0xff]
    %v343 = vld [vmem:[#allocation5 + $0x120] sm:$0xff]
    %v344 = vld [vmem:[#allocation5 + $0x128] sm:$0xff]
    %v345 = vld [vmem:[#allocation5 + $0x130] sm:$0xff]
    %v346 = vld [vmem:[#allocation5 + $0x138] sm:$0xff]
    %v347 = vld [vmem:[#allocation5 + $0x140] sm:$0xff]
    %v348 = vld [vmem:[#allocation5 + $0x148] sm:$0xff]
    %v349 = vld [vmem:[#allocation5 + $0x150] sm:$0xff]
    %v350 = vld [vmem:[#allocation5 + $0x158] sm:$0xff]
    %v351 = vld [vmem:[#allocation5 + $0x160] sm:$0xff]
    %v352 = vld [vmem:[#allocation5 + $0x168] sm:$0xff]
    %v353 = vld [vmem:[#allocation5 + $0x170] sm:$0xff]
    %v354 = vld [vmem:[#allocation5 + $0x178] sm:$0xff]
    %v355 = vld [vmem:[#allocation7] sm:$0x3f]
    %v357 = vperm.slane %v355, 0
    %v358 = vperm.slane %v355, 1
    %v359 = vperm.slane %v355, 2
    %v360 = vperm.slane %v355, 3
    %v361 = vperm.slane %v355, 4
    %v362 = vperm.slane %v355, 5
    %v417 = vunpack.c.l.b16 %v307
    %v418 = vunpack.c.h.b16 %v307
    %v419 = vunpack.c.l.b16 %v308
    %v420 = vunpack.c.h.b16 %v308
    %v421 = vunpack.c.l.b16 %v309
    %v422 = vunpack.c.h.b16 %v309
    %v423 = vunpack.c.l.b16 %v310
    %v424 = vunpack.c.h.b16 %v310
    %v425 = vunpack.c.l.b16 %v311
    %v426 = vunpack.c.h.b16 %v311
    %v427 = vunpack.c.l.b16 %v312
    %v428 = vunpack.c.h.b16 %v312
    %v429 = vunpack.c.l.b16 %v313
    %v430 = vunpack.c.h.b16 %v313
    %v431 = vunpack.c.l.b16 %v314
    %v432 = vunpack.c.h.b16 %v314
    %v433 = vunpack.c.l.b16 %v315
    %v434 = vunpack.c.h.b16 %v315
    %v435 = vunpack.c.l.b16 %v316
    %v436 = vunpack.c.h.b16 %v316
    %v437 = vunpack.c.l.b16 %v317
    %v438 = vunpack.c.h.b16 %v317
    %v439 = vunpack.c.l.b16 %v318
    %v440 = vunpack.c.h.b16 %v318
    %v441 = vunpack.c.l.b16 %v319
    %v442 = vunpack.c.h.b16 %v319
    %v443 = vunpack.c.l.b16 %v320
    %v444 = vunpack.c.h.b16 %v320
    %v445 = vunpack.c.l.b16 %v321
    %v446 = vunpack.c.h.b16 %v321
    %v447 = vunpack.c.l.b16 %v322
    %v448 = vunpack.c.h.b16 %v322
    %v449 = vunpack.c.l.b16 %v323
    %v450 = vunpack.c.h.b16 %v323
    %v451 = vunpack.c.l.b16 %v324
    %v452 = vunpack.c.h.b16 %v324
    %v453 = vunpack.c.l.b16 %v325
    %v454 = vunpack.c.h.b16 %v325
    %v455 = vunpack.c.l.b16 %v326
    %v456 = vunpack.c.h.b16 %v326
    %v457 = vunpack.c.l.b16 %v327
    %v458 = vunpack.c.h.b16 %v327
    %v459 = vunpack.c.l.b16 %v328
    %v460 = vunpack.c.h.b16 %v328
    %v461 = vunpack.c.l.b16 %v329
    %v462 = vunpack.c.h.b16 %v329
    %v463 = vunpack.c.l.b16 %v330
    %v464 = vunpack.c.h.b16 %v330
    %v465 = vunpack.c.l.b16 %v331
    %v466 = vunpack.c.h.b16 %v331
    %v467 = vunpack.c.l.b16 %v332
    %v468 = vunpack.c.h.b16 %v332
    %v469 = vunpack.c.l.b16 %v333
    %v470 = vunpack.c.h.b16 %v333
    %v471 = vunpack.c.l.b16 %v334
    %v472 = vunpack.c.h.b16 %v334
    %v473 = vunpack.c.l.b16 %v335
    %v474 = vunpack.c.h.b16 %v335
    %v475 = vunpack.c.l.b16 %v336
    %v476 = vunpack.c.h.b16 %v336
    %v477 = vunpack.c.l.b16 %v337
    %v478 = vunpack.c.h.b16 %v337
    %v479 = vunpack.c.l.b16 %v338
    %v480 = vunpack.c.h.b16 %v338
    %v481 = vunpack.c.l.b16 %v339
    %v482 = vunpack.c.h.b16 %v339
    %v483 = vunpack.c.l.b16 %v340
    %v484 = vunpack.c.h.b16 %v340
    %v485 = vunpack.c.l.b16 %v341
    %v486 = vunpack.c.h.b16 %v341
    %v487 = vunpack.c.l.b16 %v342
    %v488 = vunpack.c.h.b16 %v342
    %v489 = vunpack.c.l.b16 %v343
    %v490 = vunpack.c.h.b16 %v343
    %v491 = vunpack.c.l.b16 %v344
    %v492 = vunpack.c.h.b16 %v344
    %v493 = vunpack.c.l.b16 %v345
    %v494 = vunpack.c.h.b16 %v345
    %v495 = vunpack.c.l.b16 %v346
    %v496 = vunpack.c.h.b16 %v346
    %v497 = vunpack.c.l.b16 %v347
    %v498 = vunpack.c.h.b16 %v347
    %v499 = vunpack.c.l.b16 %v348
    %v500 = vunpack.c.h.b16 %v348
    %v501 = vunpack.c.l.b16 %v349
    %v502 = vunpack.c.h.b16 %v349
    %v503 = vunpack.c.l.b16 %v350
    %v504 = vunpack.c.h.b16 %v350
    %v505 = vunpack.c.l.b16 %v351
    %v506 = vunpack.c.h.b16 %v351
    %v507 = vunpack.c.l.b16 %v352
    %v508 = vunpack.c.h.b16 %v352
    %v509 = vunpack.c.l.b16 %v353
    %v510 = vunpack.c.h.b16 %v353
    %v511 = vunpack.c.l.b16 %v354
    %v512 = vunpack.c.h.b16 %v354
    %v513 = vpack.c.b16 %v423, %v417
    %v514 = vpack.c.b16 %v424, %v418
    %v515 = vpack.c.b16 %v425, %v419
    %v516 = vpack.c.b16 %v426, %v420
    %v517 = vpack.c.b16 %v427, %v421
    %v518 = vpack.c.b16 %v428, %v422
    %v519 = vpack.c.b16 %v435, %v429
    %v520 = vpack.c.b16 %v436, %v430
    %v521 = vpack.c.b16 %v437, %v431
    %v522 = vpack.c.b16 %v438, %v432
    %v523 = vpack.c.b16 %v439, %v433
    %v524 = vpack.c.b16 %v440, %v434
    %v525 = vpack.c.b16 %v447, %v441
    %v526 = vpack.c.b16 %v448, %v442
    %v527 = vpack.c.b16 %v449, %v443
    %v528 = vpack.c.b16 %v450, %v444
    %v529 = vpack.c.b16 %v451, %v445
    %v530 = vpack.c.b16 %v452, %v446
    %v531 = vpack.c.b16 %v459, %v453
    %v532 = vpack.c.b16 %v460, %v454
    %v533 = vpack.c.b16 %v461, %v455
    %v534 = vpack.c.b16 %v462, %v456
    %v535 = vpack.c.b16 %v463, %v457
    %v536 = vpack.c.b16 %v464, %v458
    %v537 = vpack.c.b16 %v471, %v465
    %v538 = vpack.c.b16 %v472, %v466
    %v539 = vpack.c.b16 %v473, %v467
    %v540 = vpack.c.b16 %v474, %v468
    %v541 = vpack.c.b16 %v475, %v469
    %v542 = vpack.c.b16 %v476, %v470
    %v543 = vpack.c.b16 %v483, %v477
    %v544 = vpack.c.b16 %v484, %v478
    %v545 = vpack.c.b16 %v485, %v479
    %v546 = vpack.c.b16 %v486, %v480
    %v547 = vpack.c.b16 %v487, %v481
    %v548 = vpack.c.b16 %v488, %v482
    %v549 = vpack.c.b16 %v495, %v489
    %v550 = vpack.c.b16 %v496, %v490
    %v551 = vpack.c.b16 %v497, %v491
    %v552 = vpack.c.b16 %v498, %v492
    %v553 = vpack.c.b16 %v499, %v493
    %v554 = vpack.c.b16 %v500, %v494
    %v555 = vpack.c.b16 %v507, %v501
    %v556 = vpack.c.b16 %v508, %v502
    %v557 = vpack.c.b16 %v509, %v503
    %v558 = vpack.c.b16 %v510, %v504
    %v559 = vpack.c.b16 %v511, %v505
    %v560 = vpack.c.b16 %v512, %v506
    %609 = vmatpush.bf16.msra.mxu0 %v555
    %610 = vmatpush.bf16.msra.mxu0 %v549
    %611 = vmatpush.bf16.msra.mxu0 %v543
    %612 = vmatpush.bf16.msra.mxu0 %v537
    %613 = vmatpush.bf16.msra.mxu0 %v531
    %614 = vmatpush.bf16.msra.mxu0 %v525
    %615 = vmatpush.bf16.msra.mxu0 %v519
    %616 = vmatpush.bf16.msra.mxu0 %v513
    %617 = vmatmul.bf16.gmra.mxu0 %v306
    %v618 = vpop.f32.mrf.mxu0
    %v619 = vadd.f32 %v357, %v618
    %v620 = vpop.f32.mrf.mxu0
    %v621 = vadd.f32 %v357, %v620
    %622 = vdwg.mxu0
    %623 = vmatpush.bf16.msra.mxu0 %v556
    %624 = vmatpush.bf16.msra.mxu0 %v550
    %625 = vmatpush.bf16.msra.mxu0 %v544
    %626 = vmatpush.bf16.msra.mxu0 %v538
    %627 = vmatpush.bf16.msra.mxu0 %v532
    %628 = vmatpush.bf16.msra.mxu0 %v526
    %629 = vmatpush.bf16.msra.mxu0 %v520
    %630 = vmatpush.bf16.msra.mxu0 %v514
    %631 = vmatmul.bf16.gmra.mxu0 %v306
    %v632 = vpop.f32.mrf.mxu0
    %v633 = vadd.f32 %v358, %v632
    %v634 = vpop.f32.mrf.mxu0
    %v635 = vadd.f32 %v358, %v634
    %636 = vdwg.mxu0
    %637 = vmatpush.bf16.msra.mxu0 %v557
    %638 = vmatpush.bf16.msra.mxu0 %v551
    %639 = vmatpush.bf16.msra.mxu0 %v545
    %640 = vmatpush.bf16.msra.mxu0 %v539
    %641 = vmatpush.bf16.msra.mxu0 %v533
    %642 = vmatpush.bf16.msra.mxu0 %v527
    %643 = vmatpush.bf16.msra.mxu0 %v521
    %644 = vmatpush.bf16.msra.mxu0 %v515
    %645 = vmatmul.bf16.gmra.mxu0 %v306
    %v646 = vpop.f32.mrf.mxu0
    %v647 = vadd.f32 %v359, %v646
    %v648 = vpop.f32.mrf.mxu0
    %v649 = vadd.f32 %v359, %v648
    %650 = vdwg.mxu0
    %651 = vmatpush.bf16.msra.mxu0 %v558
    %652 = vmatpush.bf16.msra.mxu0 %v552
    %653 = vmatpush.bf16.msra.mxu0 %v546
    %654 = vmatpush.bf16.msra.mxu0 %v540
    %655 = vmatpush.bf16.msra.mxu0 %v534
    %656 = vmatpush.bf16.msra.mxu0 %v528
    %657 = vmatpush.bf16.msra.mxu0 %v522
    %658 = vmatpush.bf16.msra.mxu0 %v516
    %659 = vmatmul.bf16.gmra.mxu0 %v306
    %v660 = vpop.f32.mrf.mxu0
    %v661 = vadd.f32 %v360, %v660
    %v662 = vpop.f32.mrf.mxu0
    %v663 = vadd.f32 %v360, %v662
    %664 = vdwg.mxu0
    %665 = vmatpush.bf16.msra.mxu0 %v559
    %666 = vmatpush.bf16.msra.mxu0 %v553
    %667 = vmatpush.bf16.msra.mxu0 %v547
    %668 = vmatpush.bf16.msra.mxu0 %v541
    %669 = vmatpush.bf16.msra.mxu0 %v535
    %670 = vmatpush.bf16.msra.mxu0 %v529
    %671 = vmatpush.bf16.msra.mxu0 %v523
    %672 = vmatpush.bf16.msra.mxu0 %v517
    %673 = vmatmul.bf16.gmra.mxu0 %v306
    %v674 = vpop.f32.mrf.mxu0
    %v675 = vadd.f32 %v361, %v674
    %v676 = vpop.f32.mrf.mxu0
    %v677 = vadd.f32 %v361, %v676
    %678 = vdwg.mxu0
    %679 = vmatpush.bf16.msra.mxu0 %v560
    %680 = vmatpush.bf16.msra.mxu0 %v554
    %681 = vmatpush.bf16.msra.mxu0 %v548
    %682 = vmatpush.bf16.msra.mxu0 %v542
    %683 = vmatpush.bf16.msra.mxu0 %v536
    %684 = vmatpush.bf16.msra.mxu0 %v530
    %685 = vmatpush.bf16.msra.mxu0 %v524
    %686 = vmatpush.bf16.msra.mxu0 %v518
    %687 = vmatmul.bf16.gmra.mxu0 %v306
    %v688 = vpop.f32.mrf.mxu0
    %v689 = vadd.f32 %v362, %v688
    %v690 = vpop.f32.mrf.mxu0
    %v691 = vadd.f32 %v362, %v690
    %692 = vdwg.mxu0
    %v693 = vpack.c.bf16 %v619, %v619
    %v694 = vpack.c.bf16 %v621, %v621
    %v695 = vpack.c.bf16 %v647, %v647
    %v696 = vpack.c.bf16 %v649, %v649
    %v697 = vperm.slane %v303, 0
    %v698 = vperm.slane %v305, 0
    %701 = vmatpush.bf16.xpose.msra.mxu0 0
    %702 = vmatpush.bf16.xpose.msra.mxu0 0
    %703 = vmatpush.bf16.xpose.msra.mxu0 0
    %704 = vmatpush.bf16.xpose.msra.mxu0 0
    %705 = vmatpush.bf16.xpose.msra.mxu0 0
    %706 = vmatpush.bf16.xpose.msra.mxu0 0
    %707 = vmatpush.bf16.xpose.msra.mxu0 0
    %708 = vmatpush.bf16.xpose.msra.mxu0 %v695
    %709 = vmatmul.bf16.gmra.mxu0 %v693
    %v710 = vpop.f32.mrf.mxu0
    %v711 = vadd.f32 %v697, %v710
    %v712 = vpop.f32.mrf.mxu0
    %713 = vdwg.mxu0
    %714 = vmatpush.bf16.xpose.msra.mxu0 0
    %715 = vmatpush.bf16.xpose.msra.mxu0 0
    %716 = vmatpush.bf16.xpose.msra.mxu0 0
    %717 = vmatpush.bf16.xpose.msra.mxu0 0
    %718 = vmatpush.bf16.xpose.msra.mxu0 0
    %719 = vmatpush.bf16.xpose.msra.mxu0 0
    %720 = vmatpush.bf16.xpose.msra.mxu0 0
    %721 = vmatpush.bf16.xpose.msra.mxu0 %v696
    %722 = vmatmul.bf16.gmra.mxu0 %v694
    %v723 = vpop.f32.mrf.mxu0
    %v724 = vadd.f32 %v698, %v723
    %v725 = vpop.f32.mrf.mxu0
    %726 = vdwg.mxu0
    %vm727 = vcmask 64512
    %v728 = vsel %vm727, %v711, -inf
    %729 = vmax.xlane.f32.xlu0 %v728
    %v730 = vpop.xlane.xlu0 %729
    %v731 = vsel %vm727, %v724, -inf
    %732 = vmax.xlane.f32.xlu0 %v731
    %v733 = vpop.xlane.xlu0 %732
    %v734 = vsub.f32 %v711, %v730
    %v735 = vsub.f32 %v724, %v733
    %v736 = vmul.f32 %v734, 1.442695
    %v737 = vpow.pop %v736
    %v738 = vmul.f32 %v735, 1.442695
    %v739 = vpow.pop %v738
    %v740 = vsel %vm727, %v737, 0.0
    %741 = vadd.xlane.f32.xlu0 %v740
    %v742 = vpop.xlane.xlu0 %741
    %v743 = vsel %vm727, %v739, 0.0
    %744 = vadd.xlane.f32.xlu0 %v743
    %v745 = vpop.xlane.xlu0 %744
    %v746 = vrcp.pop %v742
    %v747 = vmul.f32 %v742, %v746
    %v748 = vsub.f32 1.0, %v747
    %v749 = vmul.f32 %v746, %v748
    %v750 = vadd.f32 %v746, %v749
    %vm751 = vweird.f32 %v742
    %vm752 = vweird.f32 %v746
    %vm753 = vmor %vm751, %vm752
    %v754 = vsel %vm753, %v746, %v750
    %v755 = vand.u32 2147483647, %v742
    %vm756 = vcmp.eq.f32.partialorder %v755, 8.507059e+37
    %v757 = vand.u32 %v742, 2147483648
    %v758 = vor.u32 1.1754944e-38, %v757
    %v759 = vsel %vm756, %v758, %v754
    %v760 = vmul.f32 %v737, %v759
    %v761 = vrcp.pop %v745
    %v762 = vmul.f32 %v745, %v761
    %v763 = vsub.f32 1.0, %v762
    %v764 = vmul.f32 %v761, %v763
    %v765 = vadd.f32 %v761, %v764
    %vm766 = vweird.f32 %v745
    %vm767 = vweird.f32 %v761
    %vm768 = vmor %vm766, %vm767
    %v769 = vsel %vm768, %v761, %v765
    %v770 = vand.u32 2147483647, %v745
    %vm771 = vcmp.eq.f32.partialorder %v770, 8.507059e+37
    %v772 = vand.u32 %v745, 2147483648
    %v773 = vor.u32 1.1754944e-38, %v772
    %v774 = vsel %vm771, %v773, %v769
    %v775 = vmul.f32 %v739, %v774
    %v776 = vpack.c.bf16 %v760, %v760
    %v777 = vpack.c.bf16 %v775, %v775
    %v778 = vpack.c.bf16 %v675, %v675
    %v779 = vpack.c.bf16 %v677, %v677
    %v781 = vsel %vm727, %v776, 0
    %vm783 = vcmask 1043456
    %v785 = vsel %vm783, %v778, 0
    %787 = vmatpush.bf16.msra.mxu0 0
    %788 = vmatpush.bf16.msra.mxu0 0
    %789 = vmatpush.bf16.msra.mxu0 0
    %790 = vmatpush.bf16.msra.mxu0 0
    %791 = vmatpush.bf16.msra.mxu0 0
    %792 = vmatpush.bf16.msra.mxu0 0
    %793 = vmatpush.bf16.msra.mxu0 0
    %794 = vmatpush.bf16.msra.mxu0 %v785
    %795 = vmatmul.bf16.gmra.mxu0 %v781
    %v796 = vpop.f32.mrf.mxu0
    %v797 = vadd.f32 0.0, %v796
    %v798 = vpop.f32.mrf.mxu0
    %799 = vdwg.mxu0
    %v801 = vsel %vm727, %v777, 0
    %v804 = vsel %vm783, %v779, 0
    %806 = vmatpush.bf16.msra.mxu0 0
    %807 = vmatpush.bf16.msra.mxu0 0
    %808 = vmatpush.bf16.msra.mxu0 0
    %809 = vmatpush.bf16.msra.mxu0 0
    %810 = vmatpush.bf16.msra.mxu0 0
    %811 = vmatpush.bf16.msra.mxu0 0
    %812 = vmatpush.bf16.msra.mxu0 0
    %813 = vmatpush.bf16.msra.mxu0 %v804
    %814 = vmatmul.bf16.gmra.mxu0 %v801
    %v815 = vpop.f32.mrf.mxu0
    %v816 = vadd.f32 0.0, %v815
    %v817 = vpop.f32.mrf.mxu0
    %818 = vdwg.mxu0
    %v819 = vpack.c.bf16 %v633, %v633
    %v820 = vpack.c.bf16 %v635, %v635
    %v821 = vpack.c.bf16 %v661, %v661
    %v822 = vpack.c.bf16 %v663, %v663
    %823 = vmatpush.bf16.xpose.msra.mxu0 0
    %824 = vmatpush.bf16.xpose.msra.mxu0 0
    %825 = vmatpush.bf16.xpose.msra.mxu0 0
    %826 = vmatpush.bf16.xpose.msra.mxu0 0
    %827 = vmatpush.bf16.xpose.msra.mxu0 0
    %828 = vmatpush.bf16.xpose.msra.mxu0 0
    %829 = vmatpush.bf16.xpose.msra.mxu0 0
    %830 = vmatpush.bf16.xpose.msra.mxu0 %v821
    %831 = vmatmul.bf16.gmra.mxu0 %v819
    %v832 = vpop.f32.mrf.mxu0
    %v833 = vadd.f32 %v697, %v832
    %v834 = vpop.f32.mrf.mxu0
    %835 = vdwg.mxu0
    %836 = vmatpush.bf16.xpose.msra.mxu0 0
    %837 = vmatpush.bf16.xpose.msra.mxu0 0
    %838 = vmatpush.bf16.xpose.msra.mxu0 0
    %839 = vmatpush.bf16.xpose.msra.mxu0 0
    %840 = vmatpush.bf16.xpose.msra.mxu0 0
    %841 = vmatpush.bf16.xpose.msra.mxu0 0
    %842 = vmatpush.bf16.xpose.msra.mxu0 0
    %843 = vmatpush.bf16.xpose.msra.mxu0 %v822
    %844 = vmatmul.bf16.gmra.mxu0 %v820
    %v845 = vpop.f32.mrf.mxu0
    %v846 = vadd.f32 %v698, %v845
    %v847 = vpop.f32.mrf.mxu0
    %848 = vdwg.mxu0
    %v849 = vsel %vm727, %v833, -inf
    %850 = vmax.xlane.f32.xlu0 %v849
    %v851 = vpop.xlane.xlu0 %850
    %v852 = vsel %vm727, %v846, -inf
    %853 = vmax.xlane.f32.xlu0 %v852
    %v854 = vpop.xlane.xlu0 %853
    %v855 = vsub.f32 %v833, %v851
    %v856 = vsub.f32 %v846, %v854
    %v857 = vmul.f32 %v855, 1.442695
    %v858 = vpow.pop %v857
    %v859 = vmul.f32 %v856, 1.442695
    %v860 = vpow.pop %v859
    %v861 = vsel %vm727, %v858, 0.0
    %862 = vadd.xlane.f32.xlu0 %v861
    %v863 = vpop.xlane.xlu0 %862
    %v864 = vsel %vm727, %v860, 0.0
    %865 = vadd.xlane.f32.xlu0 %v864
    %v866 = vpop.xlane.xlu0 %865
    %v867 = vrcp.pop %v863
    %v868 = vmul.f32 %v863, %v867
    %v869 = vsub.f32 1.0, %v868
    %v870 = vmul.f32 %v867, %v869
    %v871 = vadd.f32 %v867, %v870
    %vm872 = vweird.f32 %v863
    %vm873 = vweird.f32 %v867
    %vm874 = vmor %vm872, %vm873
    %v875 = vsel %vm874, %v867, %v871
    %v876 = vand.u32 2147483647, %v863
    %vm877 = vcmp.eq.f32.partialorder %v876, 8.507059e+37
    %v878 = vand.u32 %v863, 2147483648
    %v879 = vor.u32 1.1754944e-38, %v878
    %v880 = vsel %vm877, %v879, %v875
    %v881 = vmul.f32 %v858, %v880
    %v882 = vrcp.pop %v866
    %v883 = vmul.f32 %v866, %v882
    %v884 = vsub.f32 1.0, %v883
    %v885 = vmul.f32 %v882, %v884
    %v886 = vadd.f32 %v882, %v885
    %vm887 = vweird.f32 %v866
    %vm888 = vweird.f32 %v882
    %vm889 = vmor %vm887, %vm888
    %v890 = vsel %vm889, %v882, %v886
    %v891 = vand.u32 2147483647, %v866
    %vm892 = vcmp.eq.f32.partialorder %v891, 8.507059e+37
    %v893 = vand.u32 %v866, 2147483648
    %v894 = vor.u32 1.1754944e-38, %v893
    %v895 = vsel %vm892, %v894, %v890
    %v896 = vmul.f32 %v860, %v895
    %v897 = vpack.c.bf16 %v881, %v881
    %v898 = vpack.c.bf16 %v896, %v896
    %v899 = vpack.c.bf16 %v689, %v689
    %v900 = vpack.c.bf16 %v691, %v691
    %v902 = vsel %vm727, %v897, 0
    %v905 = vsel %vm783, %v899, 0
    %907 = vmatpush.bf16.msra.mxu0 0
    %908 = vmatpush.bf16.msra.mxu0 0
    %909 = vmatpush.bf16.msra.mxu0 0
    %910 = vmatpush.bf16.msra.mxu0 0
    %911 = vmatpush.bf16.msra.mxu0 0
    %912 = vmatpush.bf16.msra.mxu0 0
    %913 = vmatpush.bf16.msra.mxu0 0
    %914 = vmatpush.bf16.msra.mxu0 %v905
    %915 = vmatmul.bf16.gmra.mxu0 %v902
    %v916 = vpop.f32.mrf.mxu0
    %v917 = vadd.f32 0.0, %v916
    %v918 = vpop.f32.mrf.mxu0
    %919 = vdwg.mxu0
    %v921 = vsel %vm727, %v898, 0
    %v924 = vsel %vm783, %v900, 0
    %926 = vmatpush.bf16.msra.mxu0 0
    %927 = vmatpush.bf16.msra.mxu0 0
    %928 = vmatpush.bf16.msra.mxu0 0
    %929 = vmatpush.bf16.msra.mxu0 0
    %930 = vmatpush.bf16.msra.mxu0 0
    %931 = vmatpush.bf16.msra.mxu0 0
    %932 = vmatpush.bf16.msra.mxu0 0
    %933 = vmatpush.bf16.msra.mxu0 %v924
    %934 = vmatmul.bf16.gmra.mxu0 %v921
    %v935 = vpop.f32.mrf.mxu0
    %v936 = vadd.f32 0.0, %v935
    %v937 = vpop.f32.mrf.mxu0
    %938 = vdwg.mxu0
    %v939 = vpack.c.bf16 %v816, %v797
    %v940 = vpack.c.bf16 %v936, %v917
    %v941 = vld [vmem:[#allocation8] sm:$0xf]
    %v942 = vld [vmem:[#allocation8 + $0x4] sm:$0xf]
    %v943 = vld [vmem:[#allocation8 + $0x8] sm:$0xf]
    %v944 = vld [vmem:[#allocation8 + $0xc] sm:$0xf]
    %v945 = vld [vmem:[#allocation8 + $0x10] sm:$0xf]
    %v946 = vld [vmem:[#allocation8 + $0x14] sm:$0xf]
    %v947 = vld [vmem:[#allocation8 + $0x18] sm:$0xf]
    %v948 = vld [vmem:[#allocation8 + $0x1c] sm:$0xf]
    %v949 = vld [vmem:[#allocation8 + $0x20] sm:$0xf]
    %v950 = vld [vmem:[#allocation8 + $0x24] sm:$0xf]
    %v951 = vld [vmem:[#allocation8 + $0x28] sm:$0xf]
    %v952 = vld [vmem:[#allocation8 + $0x2c] sm:$0xf]
    %v953 = vld [vmem:[#allocation8 + $0x30] sm:$0xf]
    %v954 = vld [vmem:[#allocation8 + $0x34] sm:$0xf]
    %v955 = vld [vmem:[#allocation8 + $0x38] sm:$0xf]
    %v956 = vld [vmem:[#allocation8 + $0x3c] sm:$0xf]
    %v957 = vld [vmem:[#allocation8 + $0x40] sm:$0xf]
    %v958 = vld [vmem:[#allocation8 + $0x44] sm:$0xf]
    %v959 = vld [vmem:[#allocation8 + $0x48] sm:$0xf]
    %v960 = vld [vmem:[#allocation8 + $0x4c] sm:$0xf]
    %v961 = vld [vmem:[#allocation8 + $0x50] sm:$0xf]
    %v962 = vld [vmem:[#allocation8 + $0x54] sm:$0xf]
    %v963 = vld [vmem:[#allocation8 + $0x58] sm:$0xf]
    %v964 = vld [vmem:[#allocation8 + $0x5c] sm:$0xf]
    %v965 = vld [vmem:[#allocation8 + $0x60] sm:$0xf]
    %v966 = vld [vmem:[#allocation8 + $0x64] sm:$0xf]
    %v967 = vld [vmem:[#allocation8 + $0x68] sm:$0xf]
    %v968 = vld [vmem:[#allocation8 + $0x6c] sm:$0xf]
    %v969 = vld [vmem:[#allocation8 + $0x70] sm:$0xf]
    %v970 = vld [vmem:[#allocation8 + $0x74] sm:$0xf]
    %v971 = vld [vmem:[#allocation8 + $0x78] sm:$0xf]
    %v972 = vld [vmem:[#allocation8 + $0x7c] sm:$0xf]
    %v973 = vld [vmem:[%s9] sm:$0x1]
    %v975 = vperm.slane %v973, 0
    %v1009 = vunpack.c.l.b16 %v941
    %v1010 = vunpack.c.l.b16 %v942
    %v1011 = vunpack.c.l.b16 %v943
    %v1012 = vunpack.c.l.b16 %v944
    %v1013 = vunpack.c.l.b16 %v945
    %v1014 = vunpack.c.l.b16 %v946
    %v1015 = vunpack.c.l.b16 %v947
    %v1016 = vunpack.c.l.b16 %v948
    %v1017 = vunpack.c.l.b16 %v949
    %v1018 = vunpack.c.l.b16 %v950
    %v1019 = vunpack.c.l.b16 %v951
    %v1020 = vunpack.c.l.b16 %v952
    %v1021 = vunpack.c.l.b16 %v953
    %v1022 = vunpack.c.l.b16 %v954
    %v1023 = vunpack.c.l.b16 %v955
    %v1024 = vunpack.c.l.b16 %v956
    %v1025 = vunpack.c.l.b16 %v957
    %v1026 = vunpack.c.l.b16 %v958
    %v1027 = vunpack.c.l.b16 %v959
    %v1028 = vunpack.c.l.b16 %v960
    %v1029 = vunpack.c.l.b16 %v961
    %v1030 = vunpack.c.l.b16 %v962
    %v1031 = vunpack.c.l.b16 %v963
    %v1032 = vunpack.c.l.b16 %v964
    %v1033 = vunpack.c.l.b16 %v965
    %v1034 = vunpack.c.l.b16 %v966
    %v1035 = vunpack.c.l.b16 %v967
    %v1036 = vunpack.c.l.b16 %v968
    %v1037 = vunpack.c.l.b16 %v969
    %v1038 = vunpack.c.l.b16 %v970
    %v1039 = vunpack.c.l.b16 %v971
    %v1040 = vunpack.c.l.b16 %v972
    %v1041 = vpack.c.b16 %v1010, %v1009
    %v1042 = vpack.c.b16 %v1012, %v1011
    %v1043 = vpack.c.b16 %v1014, %v1013
    %v1044 = vpack.c.b16 %v1016, %v1015
    %v1045 = vpack.c.b16 %v1018, %v1017
    %v1046 = vpack.c.b16 %v1020, %v1019
    %v1047 = vpack.c.b16 %v1022, %v1021
    %v1048 = vpack.c.b16 %v1024, %v1023
    %v1049 = vpack.c.b16 %v1026, %v1025
    %v1050 = vpack.c.b16 %v1028, %v1027
    %v1051 = vpack.c.b16 %v1030, %v1029
    %v1052 = vpack.c.b16 %v1032, %v1031
    %v1053 = vpack.c.b16 %v1034, %v1033
    %v1054 = vpack.c.b16 %v1036, %v1035
    %v1055 = vpack.c.b16 %v1038, %v1037
    %v1056 = vpack.c.b16 %v1040, %v1039
    %1073 = vmatpush.bf16.msra.mxu0 %v1048
    %1074 = vmatpush.bf16.msra.mxu0 %v1047
    %1075 = vmatpush.bf16.msra.mxu0 %v1046
    %1076 = vmatpush.bf16.msra.mxu0 %v1045
    %1077 = vmatpush.bf16.msra.mxu0 %v1044
    %1078 = vmatpush.bf16.msra.mxu0 %v1043
    %1079 = vmatpush.bf16.msra.mxu0 %v1042
    %1080 = vmatpush.bf16.msra.mxu0 %v1041
    %1081 = vmatmul.bf16.gmra.mxu0 %v939
    %v1082 = vpop.f32.mrf.mxu0
    %v1083 = vadd.f32 %v975, %v1082
    %v1084 = vpop.f32.mrf.mxu0
    %v1085 = vadd.f32 %v975, %v1084
    %1086 = vdwg.mxu0
    %1087 = vmatpush.bf16.msra.mxu0 %v1056
    %1088 = vmatpush.bf16.msra.mxu0 %v1055
    %1089 = vmatpush.bf16.msra.mxu0 %v1054
    %1090 = vmatpush.bf16.msra.mxu0 %v1053
    %1091 = vmatpush.bf16.msra.mxu0 %v1052
    %1092 = vmatpush.bf16.msra.mxu0 %v1051
    %1093 = vmatpush.bf16.msra.mxu0 %v1050
    %1094 = vmatpush.bf16.msra.mxu0 %v1049
    %1095 = vmatmul.bf16.gmra.mxu0 %v940
    %v1096 = vpop.f32.mrf.mxu0
    %v1097 = vadd.f32 %v1083, %v1096
    %v1098 = vpop.f32.mrf.mxu0
    %v1099 = vadd.f32 %v1085, %v1098
    %1100 = vdwg.mxu0
    %v1101 = vadd.f32 %v1097, %v298
    %v1102 = vadd.f32 %v1099, %v299
    %v1103 = vld [vmem:[%s10] sm:$0x1]
    %v1104 = vld [vmem:[%s11] sm:$0x1]
    %1105 = vadd.xlane.f32.xlu0 %v1101
    %v1106 = vpop.xlane.xlu0 %1105
    %1107 = vadd.xlane.f32.xlu0 %v1102
    %v1108 = vpop.xlane.xlu0 %1107
    %v1109 = vmul.f32 %v1106, %v251
    %v1110 = vmul.f32 %v1108, %v251
    %v1111 = vsub.f32 %v1101, %v1109
    %v1112 = vsub.f32 %v1102, %v1110
    %v1113 = vmul.f32 %v1111, %v229
    %v1114 = vmul.f32 %v1112, %v229
    %v1115 = vmul.f32 %v1113, %v1113
    %v1116 = vmul.f32 %v1114, %v1114
    %1117 = vadd.xlane.f32.xlu0 %v1115
    %v1118 = vpop.xlane.xlu0 %1117
    %1119 = vadd.xlane.f32.xlu0 %v1116
    %v1120 = vpop.xlane.xlu0 %1119
    %v1121 = vmul.f32 %v1118, %v251
    %v1122 = vmul.f32 %v1120, %v251
    %v1123 = vadd.f32 %v1121, 1e-12
    %v1124 = vadd.f32 %v1122, 1e-12
    %v1125 = vrsqrt.pop %v1123
    %v1126 = vmul.f32 %v1125, %v1123
    %v1127 = vmul.f32 %v1126, %v1125
    %v1128 = vmul.f32 0.5, %v1127
    %v1129 = vsub.f32 1.5, %v1128
    %v1130 = vmul.f32 %v1125, %v1129
    %vm1131 = vweird.f32 %v1123
    %vm1132 = vweird.f32 %v1125
    %vm1133 = vmor %vm1131, %vm1132
    %v1134 = vsel %vm1133, %v1125, %v1130
    %v1135 = vrsqrt.pop %v1124
    %v1136 = vmul.f32 %v1135, %v1124
    %v1137 = vmul.f32 %v1136, %v1135
    %v1138 = vmul.f32 0.5, %v1137
    %v1139 = vsub.f32 1.5, %v1138
    %v1140 = vmul.f32 %v1135, %v1139
    %vm1141 = vweird.f32 %v1124
    %vm1142 = vweird.f32 %v1135
    %vm1143 = vmor %vm1141, %vm1142
    %v1144 = vsel %vm1143, %v1135, %v1140
    %v1145 = vmul.f32 %v1111, %v1134
    %v1146 = vmul.f32 %v1112, %v1144
    %v1148 = vperm.slane %v1103, 0
    %v1150 = vmul.f32 %v1145, %v1148
    %v1151 = vmul.f32 %v1146, %v1148
    %v1153 = vperm.slane %v1104, 0
    %v1155 = vadd.f32 %v1150, %v1153
    %v1156 = vadd.f32 %v1151, %v1153
    %v1157 = vpack.c.bf16 %v1156, %v1155
    %v1158 = vld [vmem:[%s12] sm:$0xf]
    %v1159 = vld [vmem:[%s12 + $0x4] sm:$0xf]
    %v1160 = vld [vmem:[%s12 + $0x8] sm:$0xf]
    %v1161 = vld [vmem:[%s12 + $0xc] sm:$0xf]
    %v1162 = vld [vmem:[%s12 + $0x10] sm:$0xf]
    %v1163 = vld [vmem:[%s12 + $0x14] sm:$0xf]
    %v1164 = vld [vmem:[%s12 + $0x18] sm:$0xf]
    %v1165 = vld [vmem:[%s12 + $0x1c] sm:$0xf]
    %v1166 = vld [vmem:[%s12 + $0x20] sm:$0xf]
    %v1167 = vld [vmem:[%s12 + $0x24] sm:$0xf]
    %v1168 = vld [vmem:[%s12 + $0x28] sm:$0xf]
    %v1169 = vld [vmem:[%s12 + $0x2c] sm:$0xf]
    %v1170 = vld [vmem:[%s12 + $0x30] sm:$0xf]
    %v1171 = vld [vmem:[%s12 + $0x34] sm:$0xf]
    %v1172 = vld [vmem:[%s12 + $0x38] sm:$0xf]
    %v1173 = vld [vmem:[%s12 + $0x3c] sm:$0xf]
    %v1174 = vld [vmem:[%s13] sm:$0x1]
    %v1176 = vperm.slane %v1174, 0
    %v1194 = vunpack.c.l.b16 %v1158
    %v1195 = vunpack.c.l.b16 %v1159
    %v1196 = vunpack.c.l.b16 %v1160
    %v1197 = vunpack.c.l.b16 %v1161
    %v1198 = vunpack.c.l.b16 %v1162
    %v1199 = vunpack.c.l.b16 %v1163
    %v1200 = vunpack.c.l.b16 %v1164
    %v1201 = vunpack.c.l.b16 %v1165
    %v1202 = vunpack.c.l.b16 %v1166
    %v1203 = vunpack.c.l.b16 %v1167
    %v1204 = vunpack.c.l.b16 %v1168
    %v1205 = vunpack.c.l.b16 %v1169
    %v1206 = vunpack.c.l.b16 %v1170
    %v1207 = vunpack.c.l.b16 %v1171
    %v1208 = vunpack.c.l.b16 %v1172
    %v1209 = vunpack.c.l.b16 %v1173
    %v1210 = vpack.c.b16 %v1195, %v1194
    %v1211 = vpack.c.b16 %v1197, %v1196
    %v1212 = vpack.c.b16 %v1199, %v1198
    %v1213 = vpack.c.b16 %v1201, %v1200
    %v1214 = vpack.c.b16 %v1203, %v1202
    %v1215 = vpack.c.b16 %v1205, %v1204
    %v1216 = vpack.c.b16 %v1207, %v1206
    %v1217 = vpack.c.b16 %v1209, %v1208
    %1226 = vmatpush.bf16.msra.mxu0 %v1217
    %1227 = vmatpush.bf16.msra.mxu0 %v1216
    %1228 = vmatpush.bf16.msra.mxu0 %v1215
    %1229 = vmatpush.bf16.msra.mxu0 %v1214
    %1230 = vmatpush.bf16.msra.mxu0 %v1213
    %1231 = vmatpush.bf16.msra.mxu0 %v1212
    %1232 = vmatpush.bf16.msra.mxu0 %v1211
    %1233 = vmatpush.bf16.msra.mxu0 %v1210
    %1234 = vmatmul.bf16.gmra.mxu0 %v1157
    %v1235 = vpop.f32.mrf.mxu0
    %v1236 = vadd.f32 %v1176, %v1235
    %v1237 = vpop.f32.mrf.mxu0
    %v1238 = vadd.f32 %v1176, %v1237
    %1239 = vdwg.mxu0
    %v1240 = vmul.f32 %v1236, 0.5
    %v1241 = vmul.f32 %v1238, 0.5
    %v1242 = vmul.f32 %v1236, 0.044715
    %v1243 = vmul.f32 %v1238, 0.044715
    %v1244 = vmul.f32 %v1242, %v1236
    %v1245 = vmul.f32 %v1243, %v1238
    %v1246 = vmul.f32 %v1244, %v1236
    %v1247 = vmul.f32 %v1245, %v1238
    %v1248 = vadd.f32 %v1236, %v1246
    %v1249 = vadd.f32 %v1238, %v1247
    %v1250 = vmul.f32 %v1248, 0.7978846
    %v1251 = vmul.f32 %v1249, 0.7978846
    %v1252 = vtanh.pop %v1250
    %v1253 = vtanh.pop %v1251
    %v1254 = vadd.f32 %v1252, 1.0
    %v1255 = vadd.f32 %v1253, 1.0
    %v1256 = vmul.f32 %v1240, %v1254
    %v1257 = vmul.f32 %v1241, %v1255
    %v1258 = vpack.c.bf16 %v1257, %v1256
    %v1259 = vld [vmem:[#allocation10] sm:$0xf]
    %v1260 = vld [vmem:[#allocation10 + $0x4] sm:$0xf]
    %v1261 = vld [vmem:[#allocation10 + $0x8] sm:$0xf]
    %v1262 = vld [vmem:[#allocation10 + $0xc] sm:$0xf]
    %v1263 = vld [vmem:[#allocation10 + $0x10] sm:$0xf]
    %v1264 = vld [vmem:[#allocation10 + $0x14] sm:$0xf]
    %v1265 = vld [vmem:[#allocation10 + $0x18] sm:$0xf]
    %v1266 = vld [vmem:[#allocation10 + $0x1c] sm:$0xf]
    %v1267 = vld [vmem:[#allocation10 + $0x20] sm:$0xf]
    %v1268 = vld [vmem:[#allocation10 + $0x24] sm:$0xf]
    %v1269 = vld [vmem:[#allocation10 + $0x28] sm:$0xf]
    %v1270 = vld [vmem:[#allocation10 + $0x2c] sm:$0xf]
    %v1271 = vld [vmem:[#allocation10 + $0x30] sm:$0xf]
    %v1272 = vld [vmem:[#allocation10 + $0x34] sm:$0xf]
    %v1273 = vld [vmem:[#allocation10 + $0x38] sm:$0xf]
    %v1274 = vld [vmem:[#allocation10 + $0x3c] sm:$0xf]
    %v1275 = vld [vmem:[%s15] sm:$0x1]
    %v1277 = vperm.slane %v1275, 0
    %v1295 = vunpack.c.l.b16 %v1259
    %v1296 = vunpack.c.l.b16 %v1260
    %v1297 = vunpack.c.l.b16 %v1261
    %v1298 = vunpack.c.l.b16 %v1262
    %v1299 = vunpack.c.l.b16 %v1263
    %v1300 = vunpack.c.l.b16 %v1264
    %v1301 = vunpack.c.l.b16 %v1265
    %v1302 = vunpack.c.l.b16 %v1266
    %v1303 = vunpack.c.l.b16 %v1267
    %v1304 = vunpack.c.l.b16 %v1268
    %v1305 = vunpack.c.l.b16 %v1269
    %v1306 = vunpack.c.l.b16 %v1270
    %v1307 = vunpack.c.l.b16 %v1271
    %v1308 = vunpack.c.l.b16 %v1272
    %v1309 = vunpack.c.l.b16 %v1273
    %v1310 = vunpack.c.l.b16 %v1274
    %v1311 = vpack.c.b16 %v1296, %v1295
    %v1312 = vpack.c.b16 %v1298, %v1297
    %v1313 = vpack.c.b16 %v1300, %v1299
    %v1314 = vpack.c.b16 %v1302, %v1301
    %v1315 = vpack.c.b16 %v1304, %v1303
    %v1316 = vpack.c.b16 %v1306, %v1305
    %v1317 = vpack.c.b16 %v1308, %v1307
    %v1318 = vpack.c.b16 %v1310, %v1309
    %1327 = vmatpush.bf16.msra.mxu0 %v1318
    %1328 = vmatpush.bf16.msra.mxu0 %v1317
    %1329 = vmatpush.bf16.msra.mxu0 %v1316
    %1330 = vmatpush.bf16.msra.mxu0 %v1315
    %1331 = vmatpush.bf16.msra.mxu0 %v1314
    %1332 = vmatpush.bf16.msra.mxu0 %v1313
    %1333 = vmatpush.bf16.msra.mxu0 %v1312
    %1334 = vmatpush.bf16.msra.mxu0 %v1311
    %1335 = vmatmul.bf16.gmra.mxu0 %v1258
    %v1336 = vpop.f32.mrf.mxu0
    %v1337 = vadd.f32 %v1277, %v1336
    %v1338 = vpop.f32.mrf.mxu0
    %v1339 = vadd.f32 %v1277, %v1338
    %1340 = vdwg.mxu0
    %v1341 = vadd.f32 %v1337, %v1155
    %v1342 = vadd.f32 %v1339, %v1156
    %v1343 = vld [vmem:[#allocation11] sm:$0x1]
    %v1344 = vld [vmem:[#allocation13] sm:$0x1]
    %1345 = vadd.xlane.f32.xlu0 %v1341
    %v1346 = vpop.xlane.xlu0 %1345
    %1347 = vadd.xlane.f32.xlu0 %v1342
    %v1348 = vpop.xlane.xlu0 %1347
    %v1349 = vmul.f32 %v1346, %v251
    %v1350 = vmul.f32 %v1348, %v251
    %v1351 = vsub.f32 %v1341, %v1349
    %v1352 = vsub.f32 %v1342, %v1350
    %v1353 = vmul.f32 %v1351, %v229
    %v1354 = vmul.f32 %v1352, %v229
    %v1355 = vmul.f32 %v1353, %v1353
    %v1356 = vmul.f32 %v1354, %v1354
    %1357 = vadd.xlane.f32.xlu0 %v1355
    %v1358 = vpop.xlane.xlu0 %1357
    %1359 = vadd.xlane.f32.xlu0 %v1356
    %v1360 = vpop.xlane.xlu0 %1359
    %v1361 = vmul.f32 %v1358, %v251
    %v1362 = vmul.f32 %v1360, %v251
    %v1363 = vadd.f32 %v1361, 1e-12
    %v1364 = vadd.f32 %v1362, 1e-12
    %v1365 = vrsqrt.pop %v1363
    %v1366 = vmul.f32 %v1365, %v1363
    %v1367 = vmul.f32 %v1366, %v1365
    %v1368 = vmul.f32 0.5, %v1367
    %v1369 = vsub.f32 1.5, %v1368
    %v1370 = vmul.f32 %v1365, %v1369
    %vm1371 = vweird.f32 %v1363
    %vm1372 = vweird.f32 %v1365
    %vm1373 = vmor %vm1371, %vm1372
    %v1374 = vsel %vm1373, %v1365, %v1370
    %v1375 = vrsqrt.pop %v1364
    %v1376 = vmul.f32 %v1375, %v1364
    %v1377 = vmul.f32 %v1376, %v1375
    %v1378 = vmul.f32 0.5, %v1377
    %v1379 = vsub.f32 1.5, %v1378
    %v1380 = vmul.f32 %v1375, %v1379
    %vm1381 = vweird.f32 %v1364
    %vm1382 = vweird.f32 %v1375
    %vm1383 = vmor %vm1381, %vm1382
    %v1384 = vsel %vm1383, %v1375, %v1380
    %v1385 = vmul.f32 %v1351, %v1374
    %v1386 = vmul.f32 %v1352, %v1384
    %v1388 = vperm.slane %v1343, 0
    %v1390 = vmul.f32 %v1385, %v1388
    %v1391 = vmul.f32 %v1386, %v1388
    %v1393 = vperm.slane %v1344, 0
    %v1395 = vadd.f32 %v1390, %v1393
    %v1396 = vadd.f32 %v1391, %v1393
    %v1397 = vpack.c.bf16 %v1396, %v1395
    %s1398 = scalar_lea.vmem [#allocation5], 384
    %v1399 = vld [vmem:[%s1398] sm:$0xff]
    %v1400 = vld [vmem:[%s1398 + $0x8] sm:$0xff]
    %v1401 = vld [vmem:[%s1398 + $0x10] sm:$0xff]
    %v1402 = vld [vmem:[%s1398 + $0x18] sm:$0xff]
    %v1403 = vld [vmem:[%s1398 + $0x20] sm:$0xff]
    %v1404 = vld [vmem:[%s1398 + $0x28] sm:$0xff]
    %v1405 = vld [vmem:[%s1398 + $0x30] sm:$0xff]
    %v1406 = vld [vmem:[%s1398 + $0x38] sm:$0xff]
    %v1407 = vld [vmem:[%s1398 + $0x40] sm:$0xff]
    %v1408 = vld [vmem:[%s1398 + $0x48] sm:$0xff]
    %v1409 = vld [vmem:[%s1398 + $0x50] sm:$0xff]
    %v1410 = vld [vmem:[%s1398 + $0x58] sm:$0xff]
    %v1411 = vld [vmem:[%s1398 + $0x60] sm:$0xff]
    %v1412 = vld [vmem:[%s1398 + $0x68] sm:$0xff]
    %v1413 = vld [vmem:[%s1398 + $0x70] sm:$0xff]
    %v1414 = vld [vmem:[%s1398 + $0x78] sm:$0xff]
    %v1415 = vld [vmem:[%s1398 + $0x80] sm:$0xff]
    %v1416 = vld [vmem:[%s1398 + $0x88] sm:$0xff]
    %v1417 = vld [vmem:[%s1398 + $0x90] sm:$0xff]
    %v1418 = vld [vmem:[%s1398 + $0x98] sm:$0xff]
    %v1419 = vld [vmem:[%s1398 + $0xa0] sm:$0xff]
    %v1420 = vld [vmem:[%s1398 + $0xa8] sm:$0xff]
    %v1421 = vld [vmem:[%s1398 + $0xb0] sm:$0xff]
    %v1422 = vld [vmem:[%s1398 + $0xb8] sm:$0xff]
    %v1423 = vld [vmem:[%s1398 + $0xc0] sm:$0xff]
    %v1424 = vld [vmem:[%s1398 + $0xc8] sm:$0xff]
    %v1425 = vld [vmem:[%s1398 + $0xd0] sm:$0xff]
    %v1426 = vld [vmem:[%s1398 + $0xd8] sm:$0xff]
    %v1427 = vld [vmem:[%s1398 + $0xe0] sm:$0xff]
    %v1428 = vld [vmem:[%s1398 + $0xe8] sm:$0xff]
    %v1429 = vld [vmem:[%s1398 + $0xf0] sm:$0xff]
    %v1430 = vld [vmem:[%s1398 + $0xf8] sm:$0xff]
    %v1431 = vld [vmem:[%s1398 + $0x100] sm:$0xff]
    %v1432 = vld [vmem:[%s1398 + $0x108] sm:$0xff]
    %v1433 = vld [vmem:[%s1398 + $0x110] sm:$0xff]
    %v1434 = vld [vmem:[%s1398 + $0x118] sm:$0xff]
    %v1435 = vld [vmem:[%s1398 + $0x120] sm:$0xff]
    %v1436 = vld [vmem:[%s1398 + $0x128] sm:$0xff]
    %v1437 = vld [vmem:[%s1398 + $0x130] sm:$0xff]
    %v1438 = vld [vmem:[%s1398 + $0x138] sm:$0xff]
    %v1439 = vld [vmem:[%s1398 + $0x140] sm:$0xff]
    %v1440 = vld [vmem:[%s1398 + $0x148] sm:$0xff]
    %v1441 = vld [vmem:[%s1398 + $0x150] sm:$0xff]
    %v1442 = vld [vmem:[%s1398 + $0x158] sm:$0xff]
    %v1443 = vld [vmem:[%s1398 + $0x160] sm:$0xff]
    %v1444 = vld [vmem:[%s1398 + $0x168] sm:$0xff]
    %v1445 = vld [vmem:[%s1398 + $0x170] sm:$0xff]
    %v1446 = vld [vmem:[%s1398 + $0x178] sm:$0xff]
    %s1447 = scalar_lea.vmem [#allocation7], 6
    %v1448 = vld [vmem:[%s1447] sm:$0x3f]
    %v1450 = vperm.slane %v1448, 0
    %v1451 = vperm.slane %v1448, 1
    %v1452 = vperm.slane %v1448, 2
    %v1453 = vperm.slane %v1448, 3
    %v1454 = vperm.slane %v1448, 4
    %v1455 = vperm.slane %v1448, 5
    %v1510 = vunpack.c.l.b16 %v1399
    %v1511 = vunpack.c.h.b16 %v1399
    %v1512 = vunpack.c.l.b16 %v1400
    %v1513 = vunpack.c.h.b16 %v1400
    %v1514 = vunpack.c.l.b16 %v1401
    %v1515 = vunpack.c.h.b16 %v1401
    %v1516 = vunpack.c.l.b16 %v1402
    %v1517 = vunpack.c.h.b16 %v1402
    %v1518 = vunpack.c.l.b16 %v1403
    %v1519 = vunpack.c.h.b16 %v1403
    %v1520 = vunpack.c.l.b16 %v1404
    %v1521 = vunpack.c.h.b16 %v1404
    %v1522 = vunpack.c.l.b16 %v1405
    %v1523 = vunpack.c.h.b16 %v1405
    %v1524 = vunpack.c.l.b16 %v1406
    %v1525 = vunpack.c.h.b16 %v1406
    %v1526 = vunpack.c.l.b16 %v1407
    %v1527 = vunpack.c.h.b16 %v1407
    %v1528 = vunpack.c.l.b16 %v1408
    %v1529 = vunpack.c.h.b16 %v1408
    %v1530 = vunpack.c.l.b16 %v1409
    %v1531 = vunpack.c.h.b16 %v1409
    %v1532 = vunpack.c.l.b16 %v1410
    %v1533 = vunpack.c.h.b16 %v1410
    %v1534 = vunpack.c.l.b16 %v1411
    %v1535 = vunpack.c.h.b16 %v1411
    %v1536 = vunpack.c.l.b16 %v1412
    %v1537 = vunpack.c.h.b16 %v1412
    %v1538 = vunpack.c.l.b16 %v1413
    %v1539 = vunpack.c.h.b16 %v1413
    %v1540 = vunpack.c.l.b16 %v1414
    %v1541 = vunpack.c.h.b16 %v1414
    %v1542 = vunpack.c.l.b16 %v1415
    %v1543 = vunpack.c.h.b16 %v1415
    %v1544 = vunpack.c.l.b16 %v1416
    %v1545 = vunpack.c.h.b16 %v1416
    %v1546 = vunpack.c.l.b16 %v1417
    %v1547 = vunpack.c.h.b16 %v1417
    %v1548 = vunpack.c.l.b16 %v1418
    %v1549 = vunpack.c.h.b16 %v1418
    %v1550 = vunpack.c.l.b16 %v1419
    %v1551 = vunpack.c.h.b16 %v1419
    %v1552 = vunpack.c.l.b16 %v1420
    %v1553 = vunpack.c.h.b16 %v1420
    %v1554 = vunpack.c.l.b16 %v1421
    %v1555 = vunpack.c.h.b16 %v1421
    %v1556 = vunpack.c.l.b16 %v1422
    %v1557 = vunpack.c.h.b16 %v1422
    %v1558 = vunpack.c.l.b16 %v1423
    %v1559 = vunpack.c.h.b16 %v1423
    %v1560 = vunpack.c.l.b16 %v1424
    %v1561 = vunpack.c.h.b16 %v1424
    %v1562 = vunpack.c.l.b16 %v1425
    %v1563 = vunpack.c.h.b16 %v1425
    %v1564 = vunpack.c.l.b16 %v1426
    %v1565 = vunpack.c.h.b16 %v1426
    %v1566 = vunpack.c.l.b16 %v1427
    %v1567 = vunpack.c.h.b16 %v1427
    %v1568 = vunpack.c.l.b16 %v1428
    %v1569 = vunpack.c.h.b16 %v1428
    %v1570 = vunpack.c.l.b16 %v1429
    %v1571 = vunpack.c.h.b16 %v1429
    %v1572 = vunpack.c.l.b16 %v1430
    %v1573 = vunpack.c.h.b16 %v1430
    %v1574 = vunpack.c.l.b16 %v1431
    %v1575 = vunpack.c.h.b16 %v1431
    %v1576 = vunpack.c.l.b16 %v1432
    %v1577 = vunpack.c.h.b16 %v1432
    %v1578 = vunpack.c.l.b16 %v1433
    %v1579 = vunpack.c.h.b16 %v1433
    %v1580 = vunpack.c.l.b16 %v1434
    %v1581 = vunpack.c.h.b16 %v1434
    %v1582 = vunpack.c.l.b16 %v1435
    %v1583 = vunpack.c.h.b16 %v1435
    %v1584 = vunpack.c.l.b16 %v1436
    %v1585 = vunpack.c.h.b16 %v1436
    %v1586 = vunpack.c.l.b16 %v1437
    %v1587 = vunpack.c.h.b16 %v1437
    %v1588 = vunpack.c.l.b16 %v1438
    %v1589 = vunpack.c.h.b16 %v1438
    %v1590 = vunpack.c.l.b16 %v1439
    %v1591 = vunpack.c.h.b16 %v1439
    %v1592 = vunpack.c.l.b16 %v1440
    %v1593 = vunpack.c.h.b16 %v1440
    %v1594 = vunpack.c.l.b16 %v1441
    %v1595 = vunpack.c.h.b16 %v1441
    %v1596 = vunpack.c.l.b16 %v1442
    %v1597 = vunpack.c.h.b16 %v1442
    %v1598 = vunpack.c.l.b16 %v1443
    %v1599 = vunpack.c.h.b16 %v1443
    %v1600 = vunpack.c.l.b16 %v1444
    %v1601 = vunpack.c.h.b16 %v1444
    %v1602 = vunpack.c.l.b16 %v1445
    %v1603 = vunpack.c.h.b16 %v1445
    %v1604 = vunpack.c.l.b16 %v1446
    %v1605 = vunpack.c.h.b16 %v1446
    %v1606 = vpack.c.b16 %v1516, %v1510
    %v1607 = vpack.c.b16 %v1517, %v1511
    %v1608 = vpack.c.b16 %v1518, %v1512
    %v1609 = vpack.c.b16 %v1519, %v1513
    %v1610 = vpack.c.b16 %v1520, %v1514
    %v1611 = vpack.c.b16 %v1521, %v1515
    %v1612 = vpack.c.b16 %v1528, %v1522
    %v1613 = vpack.c.b16 %v1529, %v1523
    %v1614 = vpack.c.b16 %v1530, %v1524
    %v1615 = vpack.c.b16 %v1531, %v1525
    %v1616 = vpack.c.b16 %v1532, %v1526
    %v1617 = vpack.c.b16 %v1533, %v1527
    %v1618 = vpack.c.b16 %v1540, %v1534
    %v1619 = vpack.c.b16 %v1541, %v1535
    %v1620 = vpack.c.b16 %v1542, %v1536
    %v1621 = vpack.c.b16 %v1543, %v1537
    %v1622 = vpack.c.b16 %v1544, %v1538
    %v1623 = vpack.c.b16 %v1545, %v1539
    %v1624 = vpack.c.b16 %v1552, %v1546
    %v1625 = vpack.c.b16 %v1553, %v1547
    %v1626 = vpack.c.b16 %v1554, %v1548
    %v1627 = vpack.c.b16 %v1555, %v1549
    %v1628 = vpack.c.b16 %v1556, %v1550
    %v1629 = vpack.c.b16 %v1557, %v1551
    %v1630 = vpack.c.b16 %v1564, %v1558
    %v1631 = vpack.c.b16 %v1565, %v1559
    %v1632 = vpack.c.b16 %v1566, %v1560
    %v1633 = vpack.c.b16 %v1567, %v1561
    %v1634 = vpack.c.b16 %v1568, %v1562
    %v1635 = vpack.c.b16 %v1569, %v1563
    %v1636 = vpack.c.b16 %v1576, %v1570
    %v1637 = vpack.c.b16 %v1577, %v1571
    %v1638 = vpack.c.b16 %v1578, %v1572
    %v1639 = vpack.c.b16 %v1579, %v1573
    %v1640 = vpack.c.b16 %v1580, %v1574
    %v1641 = vpack.c.b16 %v1581, %v1575
    %v1642 = vpack.c.b16 %v1588, %v1582
    %v1643 = vpack.c.b16 %v1589, %v1583
    %v1644 = vpack.c.b16 %v1590, %v1584
    %v1645 = vpack.c.b16 %v1591, %v1585
    %v1646 = vpack.c.b16 %v1592, %v1586
    %v1647 = vpack.c.b16 %v1593, %v1587
    %v1648 = vpack.c.b16 %v1600, %v1594
    %v1649 = vpack.c.b16 %v1601, %v1595
    %v1650 = vpack.c.b16 %v1602, %v1596
    %v1651 = vpack.c.b16 %v1603, %v1597
    %v1652 = vpack.c.b16 %v1604, %v1598
    %v1653 = vpack.c.b16 %v1605, %v1599
    %1702 = vmatpush.bf16.msra.mxu0 %v1648
    %1703 = vmatpush.bf16.msra.mxu0 %v1642
    %1704 = vmatpush.bf16.msra.mxu0 %v1636
    %1705 = vmatpush.bf16.msra.mxu0 %v1630
    %1706 = vmatpush.bf16.msra.mxu0 %v1624
    %1707 = vmatpush.bf16.msra.mxu0 %v1618
    %1708 = vmatpush.bf16.msra.mxu0 %v1612
    %1709 = vmatpush.bf16.msra.mxu0 %v1606
    %1710 = vmatmul.bf16.gmra.mxu0 %v1397
    %v1711 = vpop.f32.mrf.mxu0
    %v1712 = vadd.f32 %v1450, %v1711
    %v1713 = vpop.f32.mrf.mxu0
    %v1714 = vadd.f32 %v1450, %v1713
    %1715 = vdwg.mxu0
    %1716 = vmatpush.bf16.msra.mxu0 %v1649
    %1717 = vmatpush.bf16.msra.mxu0 %v1643
    %1718 = vmatpush.bf16.msra.mxu0 %v1637
    %1719 = vmatpush.bf16.msra.mxu0 %v1631
    %1720 = vmatpush.bf16.msra.mxu0 %v1625
    %1721 = vmatpush.bf16.msra.mxu0 %v1619
    %1722 = vmatpush.bf16.msra.mxu0 %v1613
    %1723 = vmatpush.bf16.msra.mxu0 %v1607
    %1724 = vmatmul.bf16.gmra.mxu0 %v1397
    %v1725 = vpop.f32.mrf.mxu0
    %v1726 = vadd.f32 %v1451, %v1725
    %v1727 = vpop.f32.mrf.mxu0
    %v1728 = vadd.f32 %v1451, %v1727
    %1729 = vdwg.mxu0
    %1730 = vmatpush.bf16.msra.mxu0 %v1650
    %1731 = vmatpush.bf16.msra.mxu0 %v1644
    %1732 = vmatpush.bf16.msra.mxu0 %v1638
    %1733 = vmatpush.bf16.msra.mxu0 %v1632
    %1734 = vmatpush.bf16.msra.mxu0 %v1626
    %1735 = vmatpush.bf16.msra.mxu0 %v1620
    %1736 = vmatpush.bf16.msra.mxu0 %v1614
    %1737 = vmatpush.bf16.msra.mxu0 %v1608
    %1738 = vmatmul.bf16.gmra.mxu0 %v1397
    %v1739 = vpop.f32.mrf.mxu0
    %v1740 = vadd.f32 %v1452, %v1739
    %v1741 = vpop.f32.mrf.mxu0
    %v1742 = vadd.f32 %v1452, %v1741
    %1743 = vdwg.mxu0
    %1744 = vmatpush.bf16.msra.mxu0 %v1651
    %1745 = vmatpush.bf16.msra.mxu0 %v1645
    %1746 = vmatpush.bf16.msra.mxu0 %v1639
    %1747 = vmatpush.bf16.msra.mxu0 %v1633
    %1748 = vmatpush.bf16.msra.mxu0 %v1627
    %1749 = vmatpush.bf16.msra.mxu0 %v1621
    %1750 = vmatpush.bf16.msra.mxu0 %v1615
    %1751 = vmatpush.bf16.msra.mxu0 %v1609
    %1752 = vmatmul.bf16.gmra.mxu0 %v1397
    %v1753 = vpop.f32.mrf.mxu0
    %v1754 = vadd.f32 %v1453, %v1753
    %v1755 = vpop.f32.mrf.mxu0
    %v1756 = vadd.f32 %v1453, %v1755
    %1757 = vdwg.mxu0
    %1758 = vmatpush.bf16.msra.mxu0 %v1652
    %1759 = vmatpush.bf16.msra.mxu0 %v1646
    %1760 = vmatpush.bf16.msra.mxu0 %v1640
    %1761 = vmatpush.bf16.msra.mxu0 %v1634
    %1762 = vmatpush.bf16.msra.mxu0 %v1628
    %1763 = vmatpush.bf16.msra.mxu0 %v1622
    %1764 = vmatpush.bf16.msra.mxu0 %v1616
    %1765 = vmatpush.bf16.msra.mxu0 %v1610
    %1766 = vmatmul.bf16.gmra.mxu0 %v1397
    %v1767 = vpop.f32.mrf.mxu0
    %v1768 = vadd.f32 %v1454, %v1767
    %v1769 = vpop.f32.mrf.mxu0
    %v1770 = vadd.f32 %v1454, %v1769
    %1771 = vdwg.mxu0
    %1772 = vmatpush.bf16.msra.mxu0 %v1653
    %1773 = vmatpush.bf16.msra.mxu0 %v1647
    %1774 = vmatpush.bf16.msra.mxu0 %v1641
    %1775 = vmatpush.bf16.msra.mxu0 %v1635
    %1776 = vmatpush.bf16.msra.mxu0 %v1629
    %1777 = vmatpush.bf16.msra.mxu0 %v1623
    %1778 = vmatpush.bf16.msra.mxu0 %v1617
    %1779 = vmatpush.bf16.msra.mxu0 %v1611
    %1780 = vmatmul.bf16.gmra.mxu0 %v1397
    %v1781 = vpop.f32.mrf.mxu0
    %v1782 = vadd.f32 %v1455, %v1781
    %v1783 = vpop.f32.mrf.mxu0
    %v1784 = vadd.f32 %v1455, %v1783
    %1785 = vdwg.mxu0
    %v1786 = vpack.c.bf16 %v1712, %v1712
    %v1787 = vpack.c.bf16 %v1714, %v1714
    %v1788 = vpack.c.bf16 %v1740, %v1740
    %v1789 = vpack.c.bf16 %v1742, %v1742
    %1790 = vmatpush.bf16.xpose.msra.mxu0 0
    %1791 = vmatpush.bf16.xpose.msra.mxu0 0
    %1792 = vmatpush.bf16.xpose.msra.mxu0 0
    %1793 = vmatpush.bf16.xpose.msra.mxu0 0
    %1794 = vmatpush.bf16.xpose.msra.mxu0 0
    %1795 = vmatpush.bf16.xpose.msra.mxu0 0
    %1796 = vmatpush.bf16.xpose.msra.mxu0 0
    %1797 = vmatpush.bf16.xpose.msra.mxu0 %v1788
    %1798 = vmatmul.bf16.gmra.mxu0 %v1786
    %v1799 = vpop.f32.mrf.mxu0
    %v1800 = vadd.f32 %v697, %v1799
    %v1801 = vpop.f32.mrf.mxu0
    %1802 = vdwg.mxu0
    %1803 = vmatpush.bf16.xpose.msra.mxu0 0
    %1804 = vmatpush.bf16.xpose.msra.mxu0 0
    %1805 = vmatpush.bf16.xpose.msra.mxu0 0
    %1806 = vmatpush.bf16.xpose.msra.mxu0 0
    %1807 = vmatpush.bf16.xpose.msra.mxu0 0
    %1808 = vmatpush.bf16.xpose.msra.mxu0 0
    %1809 = vmatpush.bf16.xpose.msra.mxu0 0
    %1810 = vmatpush.bf16.xpose.msra.mxu0 %v1789
    %1811 = vmatmul.bf16.gmra.mxu0 %v1787
    %v1812 = vpop.f32.mrf.mxu0
    %v1813 = vadd.f32 %v698, %v1812
    %v1814 = vpop.f32.mrf.mxu0
    %1815 = vdwg.mxu0
    %v1816 = vsel %vm727, %v1800, -inf
    %1817 = vmax.xlane.f32.xlu0 %v1816
    %v1818 = vpop.xlane.xlu0 %1817
    %v1819 = vsel %vm727, %v1813, -inf
    %1820 = vmax.xlane.f32.xlu0 %v1819
    %v1821 = vpop.xlane.xlu0 %1820
    %v1822 = vsub.f32 %v1800, %v1818
    %v1823 = vsub.f32 %v1813, %v1821
    %v1824 = vmul.f32 %v1822, 1.442695
    %v1825 = vpow.pop %v1824
    %v1826 = vmul.f32 %v1823, 1.442695
    %v1827 = vpow.pop %v1826
    %v1828 = vsel %vm727, %v1825, 0.0
    %1829 = vadd.xlane.f32.xlu0 %v1828
    %v1830 = vpop.xlane.xlu0 %1829
    %v1831 = vsel %vm727, %v1827, 0.0
    %1832 = vadd.xlane.f32.xlu0 %v1831
    %v1833 = vpop.xlane.xlu0 %1832
    %v1834 = vrcp.pop %v1830
    %v1835 = vmul.f32 %v1830, %v1834
    %v1836 = vsub.f32 1.0, %v1835
    %v1837 = vmul.f32 %v1834, %v1836
    %v1838 = vadd.f32 %v1834, %v1837
    %vm1839 = vweird.f32 %v1830
    %vm1840 = vweird.f32 %v1834
    %vm1841 = vmor %vm1839, %vm1840
    %v1842 = vsel %vm1841, %v1834, %v1838
    %v1843 = vand.u32 2147483647, %v1830
    %vm1844 = vcmp.eq.f32.partialorder %v1843, 8.507059e+37
    %v1845 = vand.u32 %v1830, 2147483648
    %v1846 = vor.u32 1.1754944e-38, %v1845
    %v1847 = vsel %vm1844, %v1846, %v1842
    %v1848 = vmul.f32 %v1825, %v1847
    %v1849 = vrcp.pop %v1833
    %v1850 = vmul.f32 %v1833, %v1849
    %v1851 = vsub.f32 1.0, %v1850
    %v1852 = vmul.f32 %v1849, %v1851
    %v1853 = vadd.f32 %v1849, %v1852
    %vm1854 = vweird.f32 %v1833
    %vm1855 = vweird.f32 %v1849
    %vm1856 = vmor %vm1854, %vm1855
    %v1857 = vsel %vm1856, %v1849, %v1853
    %v1858 = vand.u32 2147483647, %v1833
    %vm1859 = vcmp.eq.f32.partialorder %v1858, 8.507059e+37
    %v1860 = vand.u32 %v1833, 2147483648
    %v1861 = vor.u32 1.1754944e-38, %v1860
    %v1862 = vsel %vm1859, %v1861, %v1857
    %v1863 = vmul.f32 %v1827, %v1862
    %v1864 = vpack.c.bf16 %v1848, %v1848
    %v1865 = vpack.c.bf16 %v1863, %v1863
    %v1866 = vpack.c.bf16 %v1768, %v1768
    %v1867 = vpack.c.bf16 %v1770, %v1770
    %v1869 = vsel %vm727, %v1864, 0
    %v1872 = vsel %vm783, %v1866, 0
    %1874 = vmatpush.bf16.msra.mxu0 0
    %1875 = vmatpush.bf16.msra.mxu0 0
    %1876 = vmatpush.bf16.msra.mxu0 0
    %1877 = vmatpush.bf16.msra.mxu0 0
    %1878 = vmatpush.bf16.msra.mxu0 0
    %1879 = vmatpush.bf16.msra.mxu0 0
    %1880 = vmatpush.bf16.msra.mxu0 0
    %1881 = vmatpush.bf16.msra.mxu0 %v1872
    %1882 = vmatmul.bf16.gmra.mxu0 %v1869
    %v1883 = vpop.f32.mrf.mxu0
    %v1884 = vadd.f32 0.0, %v1883
    %v1885 = vpop.f32.mrf.mxu0
    %1886 = vdwg.mxu0
    %v1888 = vsel %vm727, %v1865, 0
    %v1891 = vsel %vm783, %v1867, 0
    %1893 = vmatpush.bf16.msra.mxu0 0
    %1894 = vmatpush.bf16.msra.mxu0 0
    %1895 = vmatpush.bf16.msra.mxu0 0
    %1896 = vmatpush.bf16.msra.mxu0 0
    %1897 = vmatpush.bf16.msra.mxu0 0
    %1898 = vmatpush.bf16.msra.mxu0 0
    %1899 = vmatpush.bf16.msra.mxu0 0
    %1900 = vmatpush.bf16.msra.mxu0 %v1891
    %1901 = vmatmul.bf16.gmra.mxu0 %v1888
    %v1902 = vpop.f32.mrf.mxu0
    %v1903 = vadd.f32 0.0, %v1902
    %v1904 = vpop.f32.mrf.mxu0
    %1905 = vdwg.mxu0
    %v1906 = vpack.c.bf16 %v1726, %v1726
    %v1907 = vpack.c.bf16 %v1728, %v1728
    %v1908 = vpack.c.bf16 %v1754, %v1754
    %v1909 = vpack.c.bf16 %v1756, %v1756
    %1910 = vmatpush.bf16.xpose.msra.mxu0 0
    %1911 = vmatpush.bf16.xpose.msra.mxu0 0
    %1912 = vmatpush.bf16.xpose.msra.mxu0 0
    %1913 = vmatpush.bf16.xpose.msra.mxu0 0
    %1914 = vmatpush.bf16.xpose.msra.mxu0 0
    %1915 = vmatpush.bf16.xpose.msra.mxu0 0
    %1916 = vmatpush.bf16.xpose.msra.mxu0 0
    %1917 = vmatpush.bf16.xpose.msra.mxu0 %v1908
    %1918 = vmatmul.bf16.gmra.mxu0 %v1906
    %v1919 = vpop.f32.mrf.mxu0
    %v1920 = vadd.f32 %v697, %v1919
    %v1921 = vpop.f32.mrf.mxu0
    %1922 = vdwg.mxu0
    %1923 = vmatpush.bf16.xpose.msra.mxu0 0
    %1924 = vmatpush.bf16.xpose.msra.mxu0 0
    %1925 = vmatpush.bf16.xpose.msra.mxu0 0
    %1926 = vmatpush.bf16.xpose.msra.mxu0 0
    %1927 = vmatpush.bf16.xpose.msra.mxu0 0
    %1928 = vmatpush.bf16.xpose.msra.mxu0 0
    %1929 = vmatpush.bf16.xpose.msra.mxu0 0
    %1930 = vmatpush.bf16.xpose.msra.mxu0 %v1909
    %1931 = vmatmul.bf16.gmra.mxu0 %v1907
    %v1932 = vpop.f32.mrf.mxu0
    %v1933 = vadd.f32 %v698, %v1932
    %v1934 = vpop.f32.mrf.mxu0
    %1935 = vdwg.mxu0
    %v1936 = vsel %vm727, %v1920, -inf
    %1937 = vmax.xlane.f32.xlu0 %v1936
    %v1938 = vpop.xlane.xlu0 %1937
    %v1939 = vsel %vm727, %v1933, -inf
    %1940 = vmax.xlane.f32.xlu0 %v1939
    %v1941 = vpop.xlane.xlu0 %1940
    %v1942 = vsub.f32 %v1920, %v1938
    %v1943 = vsub.f32 %v1933, %v1941
    %v1944 = vmul.f32 %v1942, 1.442695
    %v1945 = vpow.pop %v1944
    %v1946 = vmul.f32 %v1943, 1.442695
    %v1947 = vpow.pop %v1946
    %v1948 = vsel %vm727, %v1945, 0.0
    %1949 = vadd.xlane.f32.xlu0 %v1948
    %v1950 = vpop.xlane.xlu0 %1949
    %v1951 = vsel %vm727, %v1947, 0.0
    %1952 = vadd.xlane.f32.xlu0 %v1951
    %v1953 = vpop.xlane.xlu0 %1952
    %v1954 = vrcp.pop %v1950
    %v1955 = vmul.f32 %v1950, %v1954
    %v1956 = vsub.f32 1.0, %v1955
    %v1957 = vmul.f32 %v1954, %v1956
    %v1958 = vadd.f32 %v1954, %v1957
    %vm1959 = vweird.f32 %v1950
    %vm1960 = vweird.f32 %v1954
    %vm1961 = vmor %vm1959, %vm1960
    %v1962 = vsel %vm1961, %v1954, %v1958
    %v1963 = vand.u32 2147483647, %v1950
    %vm1964 = vcmp.eq.f32.partialorder %v1963, 8.507059e+37
    %v1965 = vand.u32 %v1950, 2147483648
    %v1966 = vor.u32 1.1754944e-38, %v1965
    %v1967 = vsel %vm1964, %v1966, %v1962
    %v1968 = vmul.f32 %v1945, %v1967
    %v1969 = vrcp.pop %v1953
    %v1970 = vmul.f32 %v1953, %v1969
    %v1971 = vsub.f32 1.0, %v1970
    %v1972 = vmul.f32 %v1969, %v1971
    %v1973 = vadd.f32 %v1969, %v1972
    %vm1974 = vweird.f32 %v1953
    %vm1975 = vweird.f32 %v1969
    %vm1976 = vmor %vm1974, %vm1975
    %v1977 = vsel %vm1976, %v1969, %v1973
    %v1978 = vand.u32 2147483647, %v1953
    %vm1979 = vcmp.eq.f32.partialorder %v1978, 8.507059e+37
    %v1980 = vand.u32 %v1953, 2147483648
    %v1981 = vor.u32 1.1754944e-38, %v1980
    %v1982 = vsel %vm1979, %v1981, %v1977
    %v1983 = vmul.f32 %v1947, %v1982
    %v1984 = vpack.c.bf16 %v1968, %v1968
    %v1985 = vpack.c.bf16 %v1983, %v1983
    %v1986 = vpack.c.bf16 %v1782, %v1782
    %v1987 = vpack.c.bf16 %v1784, %v1784
    %v1989 = vsel %vm727, %v1984, 0
    %v1992 = vsel %vm783, %v1986, 0
    %1994 = vmatpush.bf16.msra.mxu0 0
    %1995 = vmatpush.bf16.msra.mxu0 0
    %1996 = vmatpush.bf16.msra.mxu0 0
    %1997 = vmatpush.bf16.msra.mxu0 0
    %1998 = vmatpush.bf16.msra.mxu0 0
    %1999 = vmatpush.bf16.msra.mxu0 0
    %2000 = vmatpush.bf16.msra.mxu0 0
    %2001 = vmatpush.bf16.msra.mxu0 %v1992
    %2002 = vmatmul.bf16.gmra.mxu0 %v1989
    %v2003 = vpop.f32.mrf.mxu0
    %v2004 = vadd.f32 0.0, %v2003
    %v2005 = vpop.f32.mrf.mxu0
    %2006 = vdwg.mxu0
    %v2008 = vsel %vm727, %v1985, 0
    %v2011 = vsel %vm783, %v1987, 0
    %2013 = vmatpush.bf16.msra.mxu0 0
    %2014 = vmatpush.bf16.msra.mxu0 0
    %2015 = vmatpush.bf16.msra.mxu0 0
    %2016 = vmatpush.bf16.msra.mxu0 0
    %2017 = vmatpush.bf16.msra.mxu0 0
    %2018 = vmatpush.bf16.msra.mxu0 0
    %2019 = vmatpush.bf16.msra.mxu0 0
    %2020 = vmatpush.bf16.msra.mxu0 %v2011
    %2021 = vmatmul.bf16.gmra.mxu0 %v2008
    %v2022 = vpop.f32.mrf.mxu0
    %v2023 = vadd.f32 0.0, %v2022
    %v2024 = vpop.f32.mrf.mxu0
    %2025 = vdwg.mxu0
    %v2026 = vpack.c.bf16 %v1903, %v1884
    %v2027 = vpack.c.bf16 %v2023, %v2004
    %s2028 = scalar_lea.vmem [#allocation8], 128
    %v2029 = vld [vmem:[%s2028] sm:$0xf]
    %v2030 = vld [vmem:[%s2028 + $0x4] sm:$0xf]
    %v2031 = vld [vmem:[%s2028 + $0x8] sm:$0xf]
    %v2032 = vld [vmem:[%s2028 + $0xc] sm:$0xf]
    %v2033 = vld [vmem:[%s2028 + $0x10] sm:$0xf]
    %v2034 = vld [vmem:[%s2028 + $0x14] sm:$0xf]
    %v2035 = vld [vmem:[%s2028 + $0x18] sm:$0xf]
    %v2036 = vld [vmem:[%s2028 + $0x1c] sm:$0xf]
    %v2037 = vld [vmem:[%s2028 + $0x20] sm:$0xf]
    %v2038 = vld [vmem:[%s2028 + $0x24] sm:$0xf]
    %v2039 = vld [vmem:[%s2028 + $0x28] sm:$0xf]
    %v2040 = vld [vmem:[%s2028 + $0x2c] sm:$0xf]
    %v2041 = vld [vmem:[%s2028 + $0x30] sm:$0xf]
    %v2042 = vld [vmem:[%s2028 + $0x34] sm:$0xf]
    %v2043 = vld [vmem:[%s2028 + $0x38] sm:$0xf]
    %v2044 = vld [vmem:[%s2028 + $0x3c] sm:$0xf]
    %v2045 = vld [vmem:[%s2028 + $0x40] sm:$0xf]
    %v2046 = vld [vmem:[%s2028 + $0x44] sm:$0xf]
    %v2047 = vld [vmem:[%s2028 + $0x48] sm:$0xf]
    %v2048 = vld [vmem:[%s2028 + $0x4c] sm:$0xf]
    %v2049 = vld [vmem:[%s2028 + $0x50] sm:$0xf]
    %v2050 = vld [vmem:[%s2028 + $0x54] sm:$0xf]
    %v2051 = vld [vmem:[%s2028 + $0x58] sm:$0xf]
    %v2052 = vld [vmem:[%s2028 + $0x5c] sm:$0xf]
    %v2053 = vld [vmem:[%s2028 + $0x60] sm:$0xf]
    %v2054 = vld [vmem:[%s2028 + $0x64] sm:$0xf]
    %v2055 = vld [vmem:[%s2028 + $0x68] sm:$0xf]
    %v2056 = vld [vmem:[%s2028 + $0x6c] sm:$0xf]
    %v2057 = vld [vmem:[%s2028 + $0x70] sm:$0xf]
    %v2058 = vld [vmem:[%s2028 + $0x74] sm:$0xf]
    %v2059 = vld [vmem:[%s2028 + $0x78] sm:$0xf]
    %v2060 = vld [vmem:[%s2028 + $0x7c] sm:$0xf]
    %s2061 = scalar_lea.vmem %s9, 1
    %v2062 = vld [vmem:[%s2061] sm:$0x1]
    %v2064 = vperm.slane %v2062, 0
    %v2098 = vunpack.c.l.b16 %v2029
    %v2099 = vunpack.c.l.b16 %v2030
    %v2100 = vunpack.c.l.b16 %v2031
    %v2101 = vunpack.c.l.b16 %v2032
    %v2102 = vunpack.c.l.b16 %v2033
    %v2103 = vunpack.c.l.b16 %v2034
    %v2104 = vunpack.c.l.b16 %v2035
    %v2105 = vunpack.c.l.b16 %v2036
    %v2106 = vunpack.c.l.b16 %v2037
    %v2107 = vunpack.c.l.b16 %v2038
    %v2108 = vunpack.c.l.b16 %v2039
    %v2109 = vunpack.c.l.b16 %v2040
    %v2110 = vunpack.c.l.b16 %v2041
    %v2111 = vunpack.c.l.b16 %v2042
    %v2112 = vunpack.c.l.b16 %v2043
    %v2113 = vunpack.c.l.b16 %v2044
    %v2114 = vunpack.c.l.b16 %v2045
    %v2115 = vunpack.c.l.b16 %v2046
    %v2116 = vunpack.c.l.b16 %v2047
    %v2117 = vunpack.c.l.b16 %v2048
    %v2118 = vunpack.c.l.b16 %v2049
    %v2119 = vunpack.c.l.b16 %v2050
    %v2120 = vunpack.c.l.b16 %v2051
    %v2121 = vunpack.c.l.b16 %v2052
    %v2122 = vunpack.c.l.b16 %v2053
    %v2123 = vunpack.c.l.b16 %v2054
    %v2124 = vunpack.c.l.b16 %v2055
    %v2125 = vunpack.c.l.b16 %v2056
    %v2126 = vunpack.c.l.b16 %v2057
    %v2127 = vunpack.c.l.b16 %v2058
    %v2128 = vunpack.c.l.b16 %v2059
    %v2129 = vunpack.c.l.b16 %v2060
    %v2130 = vpack.c.b16 %v2099, %v2098
    %v2131 = vpack.c.b16 %v2101, %v2100
    %v2132 = vpack.c.b16 %v2103, %v2102
    %v2133 = vpack.c.b16 %v2105, %v2104
    %v2134 = vpack.c.b16 %v2107, %v2106
    %v2135 = vpack.c.b16 %v2109, %v2108
    %v2136 = vpack.c.b16 %v2111, %v2110
    %v2137 = vpack.c.b16 %v2113, %v2112
    %v2138 = vpack.c.b16 %v2115, %v2114
    %v2139 = vpack.c.b16 %v2117, %v2116
    %v2140 = vpack.c.b16 %v2119, %v2118
    %v2141 = vpack.c.b16 %v2121, %v2120
    %v2142 = vpack.c.b16 %v2123, %v2122
    %v2143 = vpack.c.b16 %v2125, %v2124
    %v2144 = vpack.c.b16 %v2127, %v2126
    %v2145 = vpack.c.b16 %v2129, %v2128
    %2162 = vmatpush.bf16.msra.mxu0 %v2137
    %2163 = vmatpush.bf16.msra.mxu0 %v2136
    %2164 = vmatpush.bf16.msra.mxu0 %v2135
    %2165 = vmatpush.bf16.msra.mxu0 %v2134
    %2166 = vmatpush.bf16.msra.mxu0 %v2133
    %2167 = vmatpush.bf16.msra.mxu0 %v2132
    %2168 = vmatpush.bf16.msra.mxu0 %v2131
    %2169 = vmatpush.bf16.msra.mxu0 %v2130
    %2170 = vmatmul.bf16.gmra.mxu0 %v2026
    %v2171 = vpop.f32.mrf.mxu0
    %v2172 = vadd.f32 %v2064, %v2171
    %v2173 = vpop.f32.mrf.mxu0
    %v2174 = vadd.f32 %v2064, %v2173
    %2175 = vdwg.mxu0
    %2176 = vmatpush.bf16.msra.mxu0 %v2145
    %2177 = vmatpush.bf16.msra.mxu0 %v2144
    %2178 = vmatpush.bf16.msra.mxu0 %v2143
    %2179 = vmatpush.bf16.msra.mxu0 %v2142
    %2180 = vmatpush.bf16.msra.mxu0 %v2141
    %2181 = vmatpush.bf16.msra.mxu0 %v2140
    %2182 = vmatpush.bf16.msra.mxu0 %v2139
    %2183 = vmatpush.bf16.msra.mxu0 %v2138
    %2184 = vmatmul.bf16.gmra.mxu0 %v2027
    %v2185 = vpop.f32.mrf.mxu0
    %v2186 = vadd.f32 %v2172, %v2185
    %v2187 = vpop.f32.mrf.mxu0
    %v2188 = vadd.f32 %v2174, %v2187
    %2189 = vdwg.mxu0
    %v2190 = vadd.f32 %v2186, %v1395
    %v2191 = vadd.f32 %v2188, %v1396
    %s2192 = scalar_lea.vmem %s10, 1
    %v2193 = vld [vmem:[%s2192] sm:$0x1]
    %s2194 = scalar_lea.vmem %s11, 1
    %v2195 = vld [vmem:[%s2194] sm:$0x1]
    %2196 = vadd.xlane.f32.xlu0 %v2190
    %v2197 = vpop.xlane.xlu0 %2196
    %2198 = vadd.xlane.f32.xlu0 %v2191
    %v2199 = vpop.xlane.xlu0 %2198
    %v2200 = vmul.f32 %v2197, %v251
    %v2201 = vmul.f32 %v2199, %v251
    %v2202 = vsub.f32 %v2190, %v2200
    %v2203 = vsub.f32 %v2191, %v2201
    %v2204 = vmul.f32 %v2202, %v229
    %v2205 = vmul.f32 %v2203, %v229
    %v2206 = vmul.f32 %v2204, %v2204
    %v2207 = vmul.f32 %v2205, %v2205
    %2208 = vadd.xlane.f32.xlu0 %v2206
    %v2209 = vpop.xlane.xlu0 %2208
    %2210 = vadd.xlane.f32.xlu0 %v2207
    %v2211 = vpop.xlane.xlu0 %2210
    %v2212 = vmul.f32 %v2209, %v251
    %v2213 = vmul.f32 %v2211, %v251
    %v2214 = vadd.f32 %v2212, 1e-12
    %v2215 = vadd.f32 %v2213, 1e-12
    %v2216 = vrsqrt.pop %v2214
    %v2217 = vmul.f32 %v2216, %v2214
    %v2218 = vmul.f32 %v2217, %v2216
    %v2219 = vmul.f32 0.5, %v2218
    %v2220 = vsub.f32 1.5, %v2219
    %v2221 = vmul.f32 %v2216, %v2220
    %vm2222 = vweird.f32 %v2214
    %vm2223 = vweird.f32 %v2216
    %vm2224 = vmor %vm2222, %vm2223
    %v2225 = vsel %vm2224, %v2216, %v2221
    %v2226 = vrsqrt.pop %v2215
    %v2227 = vmul.f32 %v2226, %v2215
    %v2228 = vmul.f32 %v2227, %v2226
    %v2229 = vmul.f32 0.5, %v2228
    %v2230 = vsub.f32 1.5, %v2229
    %v2231 = vmul.f32 %v2226, %v2230
    %vm2232 = vweird.f32 %v2215
    %vm2233 = vweird.f32 %v2226
    %vm2234 = vmor %vm2232, %vm2233
    %v2235 = vsel %vm2234, %v2226, %v2231
    %v2236 = vmul.f32 %v2202, %v2225
    %v2237 = vmul.f32 %v2203, %v2235
    %v2239 = vperm.slane %v2193, 0
    %v2241 = vmul.f32 %v2236, %v2239
    %v2242 = vmul.f32 %v2237, %v2239
    %v2244 = vperm.slane %v2195, 0
    %v2246 = vadd.f32 %v2241, %v2244
    %v2247 = vadd.f32 %v2242, %v2244
    %v2248 = vpack.c.bf16 %v2247, %v2246
    %s2249 = scalar_lea.vmem %s12, 64
    %v2250 = vld [vmem:[%s2249] sm:$0xf]
    %v2251 = vld [vmem:[%s2249 + $0x4] sm:$0xf]
    %v2252 = vld [vmem:[%s2249 + $0x8] sm:$0xf]
    %v2253 = vld [vmem:[%s2249 + $0xc] sm:$0xf]
    %v2254 = vld [vmem:[%s2249 + $0x10] sm:$0xf]
    %v2255 = vld [vmem:[%s2249 + $0x14] sm:$0xf]
    %v2256 = vld [vmem:[%s2249 + $0x18] sm:$0xf]
    %v2257 = vld [vmem:[%s2249 + $0x1c] sm:$0xf]
    %v2258 = vld [vmem:[%s2249 + $0x20] sm:$0xf]
    %v2259 = vld [vmem:[%s2249 + $0x24] sm:$0xf]
    %v2260 = vld [vmem:[%s2249 + $0x28] sm:$0xf]
    %v2261 = vld [vmem:[%s2249 + $0x2c] sm:$0xf]
    %v2262 = vld [vmem:[%s2249 + $0x30] sm:$0xf]
    %v2263 = vld [vmem:[%s2249 + $0x34] sm:$0xf]
    %v2264 = vld [vmem:[%s2249 + $0x38] sm:$0xf]
    %v2265 = vld [vmem:[%s2249 + $0x3c] sm:$0xf]
    %s2266 = scalar_lea.vmem %s13, 1
    %v2267 = vld [vmem:[%s2266] sm:$0x1]
    %v2269 = vperm.slane %v2267, 0
    %v2287 = vunpack.c.l.b16 %v2250
    %v2288 = vunpack.c.l.b16 %v2251
    %v2289 = vunpack.c.l.b16 %v2252
    %v2290 = vunpack.c.l.b16 %v2253
    %v2291 = vunpack.c.l.b16 %v2254
    %v2292 = vunpack.c.l.b16 %v2255
    %v2293 = vunpack.c.l.b16 %v2256
    %v2294 = vunpack.c.l.b16 %v2257
    %v2295 = vunpack.c.l.b16 %v2258
    %v2296 = vunpack.c.l.b16 %v2259
    %v2297 = vunpack.c.l.b16 %v2260
    %v2298 = vunpack.c.l.b16 %v2261
    %v2299 = vunpack.c.l.b16 %v2262
    %v2300 = vunpack.c.l.b16 %v2263
    %v2301 = vunpack.c.l.b16 %v2264
    %v2302 = vunpack.c.l.b16 %v2265
    %v2303 = vpack.c.b16 %v2288, %v2287
    %v2304 = vpack.c.b16 %v2290, %v2289
    %v2305 = vpack.c.b16 %v2292, %v2291
    %v2306 = vpack.c.b16 %v2294, %v2293
    %v2307 = vpack.c.b16 %v2296, %v2295
    %v2308 = vpack.c.b16 %v2298, %v2297
    %v2309 = vpack.c.b16 %v2300, %v2299
    %v2310 = vpack.c.b16 %v2302, %v2301
    %2319 = vmatpush.bf16.msra.mxu0 %v2310
    %2320 = vmatpush.bf16.msra.mxu0 %v2309
    %2321 = vmatpush.bf16.msra.mxu0 %v2308
    %2322 = vmatpush.bf16.msra.mxu0 %v2307
    %2323 = vmatpush.bf16.msra.mxu0 %v2306
    %2324 = vmatpush.bf16.msra.mxu0 %v2305
    %2325 = vmatpush.bf16.msra.mxu0 %v2304
    %2326 = vmatpush.bf16.msra.mxu0 %v2303
    %2327 = vmatmul.bf16.gmra.mxu0 %v2248
    %v2328 = vpop.f32.mrf.mxu0
    %v2329 = vadd.f32 %v2269, %v2328
    %v2330 = vpop.f32.mrf.mxu0
    %v2331 = vadd.f32 %v2269, %v2330
    %2332 = vdwg.mxu0
    %v2333 = vmul.f32 %v2329, 0.5
    %v2334 = vmul.f32 %v2331, 0.5
    %v2335 = vmul.f32 %v2329, 0.044715
    %v2336 = vmul.f32 %v2331, 0.044715
    %v2337 = vmul.f32 %v2335, %v2329
    %v2338 = vmul.f32 %v2336, %v2331
    %v2339 = vmul.f32 %v2337, %v2329
    %v2340 = vmul.f32 %v2338, %v2331
    %v2341 = vadd.f32 %v2329, %v2339
    %v2342 = vadd.f32 %v2331, %v2340
    %v2343 = vmul.f32 %v2341, 0.7978846
    %v2344 = vmul.f32 %v2342, 0.7978846
    %v2345 = vtanh.pop %v2343
    %v2346 = vtanh.pop %v2344
    %v2347 = vadd.f32 %v2345, 1.0
    %v2348 = vadd.f32 %v2346, 1.0
    %v2349 = vmul.f32 %v2333, %v2347
    %v2350 = vmul.f32 %v2334, %v2348
    %v2351 = vpack.c.bf16 %v2350, %v2349
    %s2352 = scalar_lea.vmem [#allocation10], 64
    %v2353 = vld [vmem:[%s2352] sm:$0xf]
    %v2354 = vld [vmem:[%s2352 + $0x4] sm:$0xf]
    %v2355 = vld [vmem:[%s2352 + $0x8] sm:$0xf]
    %v2356 = vld [vmem:[%s2352 + $0xc] sm:$0xf]
    %v2357 = vld [vmem:[%s2352 + $0x10] sm:$0xf]
    %v2358 = vld [vmem:[%s2352 + $0x14] sm:$0xf]
    %v2359 = vld [vmem:[%s2352 + $0x18] sm:$0xf]
    %v2360 = vld [vmem:[%s2352 + $0x1c] sm:$0xf]
    %v2361 = vld [vmem:[%s2352 + $0x20] sm:$0xf]
    %v2362 = vld [vmem:[%s2352 + $0x24] sm:$0xf]
    %v2363 = vld [vmem:[%s2352 + $0x28] sm:$0xf]
    %v2364 = vld [vmem:[%s2352 + $0x2c] sm:$0xf]
    %v2365 = vld [vmem:[%s2352 + $0x30] sm:$0xf]
    %v2366 = vld [vmem:[%s2352 + $0x34] sm:$0xf]
    %v2367 = vld [vmem:[%s2352 + $0x38] sm:$0xf]
    %v2368 = vld [vmem:[%s2352 + $0x3c] sm:$0xf]
    %s2369 = scalar_lea.vmem %s15, 1
    %v2370 = vld [vmem:[%s2369] sm:$0x1]
    %v2372 = vperm.slane %v2370, 0
    %v2390 = vunpack.c.l.b16 %v2353
    %v2391 = vunpack.c.l.b16 %v2354
    %v2392 = vunpack.c.l.b16 %v2355
    %v2393 = vunpack.c.l.b16 %v2356
    %v2394 = vunpack.c.l.b16 %v2357
    %v2395 = vunpack.c.l.b16 %v2358
    %v2396 = vunpack.c.l.b16 %v2359
    %v2397 = vunpack.c.l.b16 %v2360
    %v2398 = vunpack.c.l.b16 %v2361
    %v2399 = vunpack.c.l.b16 %v2362
    %v2400 = vunpack.c.l.b16 %v2363
    %v2401 = vunpack.c.l.b16 %v2364
    %v2402 = vunpack.c.l.b16 %v2365
    %v2403 = vunpack.c.l.b16 %v2366
    %v2404 = vunpack.c.l.b16 %v2367
    %v2405 = vunpack.c.l.b16 %v2368
    %v2406 = vpack.c.b16 %v2391, %v2390
    %v2407 = vpack.c.b16 %v2393, %v2392
    %v2408 = vpack.c.b16 %v2395, %v2394
    %v2409 = vpack.c.b16 %v2397, %v2396
    %v2410 = vpack.c.b16 %v2399, %v2398
    %v2411 = vpack.c.b16 %v2401, %v2400
    %v2412 = vpack.c.b16 %v2403, %v2402
    %v2413 = vpack.c.b16 %v2405, %v2404
    %2422 = vmatpush.bf16.msra.mxu0 %v2413
    %2423 = vmatpush.bf16.msra.mxu0 %v2412
    %2424 = vmatpush.bf16.msra.mxu0 %v2411
    %2425 = vmatpush.bf16.msra.mxu0 %v2410
    %2426 = vmatpush.bf16.msra.mxu0 %v2409
    %2427 = vmatpush.bf16.msra.mxu0 %v2408
    %2428 = vmatpush.bf16.msra.mxu0 %v2407
    %2429 = vmatpush.bf16.msra.mxu0 %v2406
    %2430 = vmatmul.bf16.gmra.mxu0 %v2351
    %v2431 = vpop.f32.mrf.mxu0
    %v2432 = vadd.f32 %v2372, %v2431
    %v2433 = vpop.f32.mrf.mxu0
    %v2434 = vadd.f32 %v2372, %v2433
    %2435 = vdwg.mxu0
    %v2436 = vadd.f32 %v2432, %v2246
    %v2437 = vadd.f32 %v2434, %v2247
    %s2438 = scalar_lea.vmem [#allocation11], 1
    %v2439 = vld [vmem:[%s2438] sm:$0x1]
    %s2440 = scalar_lea.vmem [#allocation13], 1
    %v2441 = vld [vmem:[%s2440] sm:$0x1]
    %2442 = vadd.xlane.f32.xlu0 %v2436
    %v2443 = vpop.xlane.xlu0 %2442
    %2444 = vadd.xlane.f32.xlu0 %v2437
    %v2445 = vpop.xlane.xlu0 %2444
    %v2446 = vmul.f32 %v2443, %v251
    %v2447 = vmul.f32 %v2445, %v251
    %v2448 = vsub.f32 %v2436, %v2446
    %v2449 = vsub.f32 %v2437, %v2447
    %v2450 = vmul.f32 %v2448, %v229
    %v2451 = vmul.f32 %v2449, %v229
    %v2452 = vmul.f32 %v2450, %v2450
    %v2453 = vmul.f32 %v2451, %v2451
    %2454 = vadd.xlane.f32.xlu0 %v2452
    %v2455 = vpop.xlane.xlu0 %2454
    %2456 = vadd.xlane.f32.xlu0 %v2453
    %v2457 = vpop.xlane.xlu0 %2456
    %v2458 = vmul.f32 %v2455, %v251
    %v2459 = vmul.f32 %v2457, %v251
    %v2460 = vadd.f32 %v2458, 1e-12
    %v2461 = vadd.f32 %v2459, 1e-12
    %v2462 = vrsqrt.pop %v2460
    %v2463 = vmul.f32 %v2462, %v2460
    %v2464 = vmul.f32 %v2463, %v2462
    %v2465 = vmul.f32 0.5, %v2464
    %v2466 = vsub.f32 1.5, %v2465
    %v2467 = vmul.f32 %v2462, %v2466
    %vm2468 = vweird.f32 %v2460
    %vm2469 = vweird.f32 %v2462
    %vm2470 = vmor %vm2468, %vm2469
    %v2471 = vsel %vm2470, %v2462, %v2467
    %v2472 = vrsqrt.pop %v2461
    %v2473 = vmul.f32 %v2472, %v2461
    %v2474 = vmul.f32 %v2473, %v2472
    %v2475 = vmul.f32 0.5, %v2474
    %v2476 = vsub.f32 1.5, %v2475
    %v2477 = vmul.f32 %v2472, %v2476
    %vm2478 = vweird.f32 %v2461
    %vm2479 = vweird.f32 %v2472
    %vm2480 = vmor %vm2478, %vm2479
    %v2481 = vsel %vm2480, %v2472, %v2477
    %v2482 = vmul.f32 %v2448, %v2471
    %v2483 = vmul.f32 %v2449, %v2481
    %v2485 = vperm.slane %v2439, 0
    %v2487 = vmul.f32 %v2482, %v2485
    %v2488 = vmul.f32 %v2483, %v2485
    %v2490 = vperm.slane %v2441, 0
    %v2492 = vadd.f32 %v2487, %v2490
    %v2493 = vadd.f32 %v2488, %v2490
    %v2494 = vpack.c.bf16 %v2492, %v2492
    %v2495 = vpack.c.bf16 %v2493, %v2493
    %v2496 = vld [vmem:[#allocation14] sm:$0xf]
    %v2497 = vld [vmem:[#allocation14 + $0x4] sm:$0xf]
    %v2498 = vld [vmem:[#allocation14 + $0x8] sm:$0xf]
    %v2499 = vld [vmem:[#allocation14 + $0xc] sm:$0xf]
    %v2500 = vld [vmem:[#allocation14 + $0x10] sm:$0xf]
    %v2501 = vld [vmem:[#allocation14 + $0x14] sm:$0xf]
    %v2502 = vld [vmem:[#allocation14 + $0x18] sm:$0xf]
    %v2503 = vld [vmem:[#allocation14 + $0x1c] sm:$0xf]
    %v2504 = vld [vmem:[#allocation14 + $0x20] sm:$0xf]
    %v2505 = vld [vmem:[#allocation14 + $0x24] sm:$0xf]
    %v2506 = vld [vmem:[#allocation14 + $0x28] sm:$0xf]
    %v2507 = vld [vmem:[#allocation14 + $0x2c] sm:$0xf]
    %v2508 = vld [vmem:[#allocation14 + $0x30] sm:$0xf]
    %v2509 = vld [vmem:[#allocation14 + $0x34] sm:$0xf]
    %v2510 = vld [vmem:[#allocation14 + $0x38] sm:$0xf]
    %v2511 = vld [vmem:[#allocation14 + $0x3c] sm:$0xf]
    %v2512 = vld [vmem:[#allocation16] sm:$0x1]
    %v2514 = vperm.slane %v2512, 0
    %v2518 = vunpack.c.l.b16 %v2494
    %v2519 = vunpack.c.l.b16 %v2495
    %v2520 = vrot.slane %v2519, 7
    %vm2521 = vcmask 1041409
    %v2522 = vsel %vm2521, %v2520, %v2518
    %v2523 = vpack.c.b16 %v2522, %v2522
    %v2541 = vunpack.c.l.b16 %v2496
    %v2542 = vunpack.c.l.b16 %v2497
    %v2543 = vunpack.c.l.b16 %v2498
    %v2544 = vunpack.c.l.b16 %v2499
    %v2545 = vunpack.c.l.b16 %v2500
    %v2546 = vunpack.c.l.b16 %v2501
    %v2547 = vunpack.c.l.b16 %v2502
    %v2548 = vunpack.c.l.b16 %v2503
    %v2549 = vunpack.c.l.b16 %v2504
    %v2550 = vunpack.c.l.b16 %v2505
    %v2551 = vunpack.c.l.b16 %v2506
    %v2552 = vunpack.c.l.b16 %v2507
    %v2553 = vunpack.c.l.b16 %v2508
    %v2554 = vunpack.c.l.b16 %v2509
    %v2555 = vunpack.c.l.b16 %v2510
    %v2556 = vunpack.c.l.b16 %v2511
    %v2557 = vpack.c.b16 %v2542, %v2541
    %v2558 = vpack.c.b16 %v2544, %v2543
    %v2559 = vpack.c.b16 %v2546, %v2545
    %v2560 = vpack.c.b16 %v2548, %v2547
    %v2561 = vpack.c.b16 %v2550, %v2549
    %v2562 = vpack.c.b16 %v2552, %v2551
    %v2563 = vpack.c.b16 %v2554, %v2553
    %v2564 = vpack.c.b16 %v2556, %v2555
    %2573 = vmatpush.bf16.msra.mxu0 %v2564
    %2574 = vmatpush.bf16.msra.mxu0 %v2563
    %2575 = vmatpush.bf16.msra.mxu0 %v2562
    %2576 = vmatpush.bf16.msra.mxu0 %v2561
    %2577 = vmatpush.bf16.msra.mxu0 %v2560
    %2578 = vmatpush.bf16.msra.mxu0 %v2559
    %2579 = vmatpush.bf16.msra.mxu0 %v2558
    %2580 = vmatpush.bf16.msra.mxu0 %v2557
    %2581 = vmatmul.bf16.gmra.mxu0 %v2523
    %v2582 = vpop.f32.mrf.mxu0
    %v2583 = vadd.f32 %v2514, %v2582
    %v2584 = vpop.f32.mrf.mxu0
    %2585 = vdwg.mxu0
    %v2586 = vtanh.pop %v2583
    %v2587 = vpack.c.bf16 %v2586, %v2586
    %v2588 = vld [vmem:[#allocation17] sm:$0xf]
    %v2589 = vld [vmem:[#allocation17 + $0x4] sm:$0xf]
    %v2590 = vld [vmem:[#allocation17 + $0x8] sm:$0xf]
    %v2591 = vld [vmem:[#allocation17 + $0xc] sm:$0xf]
    %v2592 = vld [vmem:[#allocation17 + $0x10] sm:$0xf]
    %v2593 = vld [vmem:[#allocation17 + $0x14] sm:$0xf]
    %v2594 = vld [vmem:[#allocation17 + $0x18] sm:$0xf]
    %v2595 = vld [vmem:[#allocation17 + $0x1c] sm:$0xf]
    %v2596 = vld [vmem:[#allocation17 + $0x20] sm:$0xf]
    %v2597 = vld [vmem:[#allocation17 + $0x24] sm:$0xf]
    %v2598 = vld [vmem:[#allocation17 + $0x28] sm:$0xf]
    %v2599 = vld [vmem:[#allocation17 + $0x2c] sm:$0xf]
    %v2600 = vld [vmem:[#allocation17 + $0x30] sm:$0xf]
    %v2601 = vld [vmem:[#allocation17 + $0x34] sm:$0xf]
    %v2602 = vld [vmem:[#allocation17 + $0x38] sm:$0xf]
    %v2603 = vld [vmem:[#allocation17 + $0x3c] sm:$0xf]
    %v2604 = vld [vmem:[%s21] sm:$0x1]
    %v2606 = vperm.slane %v2604, 0
    %v2624 = vunpack.c.l.b16 %v2588
    %v2625 = vunpack.c.l.b16 %v2589
    %v2626 = vunpack.c.l.b16 %v2590
    %v2627 = vunpack.c.l.b16 %v2591
    %v2628 = vunpack.c.l.b16 %v2592
    %v2629 = vunpack.c.l.b16 %v2593
    %v2630 = vunpack.c.l.b16 %v2594
    %v2631 = vunpack.c.l.b16 %v2595
    %v2632 = vunpack.c.l.b16 %v2596
    %v2633 = vunpack.c.l.b16 %v2597
    %v2634 = vunpack.c.l.b16 %v2598
    %v2635 = vunpack.c.l.b16 %v2599
    %v2636 = vunpack.c.l.b16 %v2600
    %v2637 = vunpack.c.l.b16 %v2601
    %v2638 = vunpack.c.l.b16 %v2602
    %v2639 = vunpack.c.l.b16 %v2603
    %v2640 = vpack.c.b16 %v2625, %v2624
    %v2641 = vpack.c.b16 %v2627, %v2626
    %v2642 = vpack.c.b16 %v2629, %v2628
    %v2643 = vpack.c.b16 %v2631, %v2630
    %v2644 = vpack.c.b16 %v2633, %v2632
    %v2645 = vpack.c.b16 %v2635, %v2634
    %v2646 = vpack.c.b16 %v2637, %v2636
    %v2647 = vpack.c.b16 %v2639, %v2638
    %2656 = vmatpush.bf16.msra.mxu0 %v2647
    %2657 = vmatpush.bf16.msra.mxu0 %v2646
    %2658 = vmatpush.bf16.msra.mxu0 %v2645
    %2659 = vmatpush.bf16.msra.mxu0 %v2644
    %2660 = vmatpush.bf16.msra.mxu0 %v2643
    %2661 = vmatpush.bf16.msra.mxu0 %v2642
    %2662 = vmatpush.bf16.msra.mxu0 %v2641
    %2663 = vmatpush.bf16.msra.mxu0 %v2640
    %2664 = vmatmul.bf16.gmra.mxu0 %v2587
    %v2665 = vpop.f32.mrf.mxu0
    %v2666 = vadd.f32 %v2606, %v2665
    %v2667 = vpop.f32.mrf.mxu0
    %2668 = vdwg.mxu0
    %2669 = vst [vmem:[#allocation19] sm:$0x3] %v2666
    // Predicated region
    $region130: #{bert_forward.1} parent=1 // pred_check
      _
    $region131: #{bert_forward.1} parent=1 // pred_check_branch
      %2671 = sbr.rel (0) target = $region133
    $region132: #{bert_forward.1} parent=1 // pred_region
      %2673 = vsyncadd [#allocation4], 0
      %s2675 = sshll.u32 [#allocation19], 4
      %s2676 = int_to_ptr.vmem [resolvable:$true] %s2675
      %s2677 = sshll.u32 %s22, 4
      %s2678 = int_to_ptr.hbm [resolvable:$true] %s2677
      %2680 = dma.vmem_to_hbm [thread:$0]  %s2676, 32, %s2678, [#allocation4]
    $region133: #{bert_forward.1} parent=1 // pred_fallthru
      _
    // Predicated region
    $region134: #{bert_forward.1} parent=1 // pred_check
      _
    $region135: #{bert_forward.1} parent=1 // pred_check_branch
      %2682 = sbr.rel (0) target = $region137
    $region136: #{bert_forward.1} parent=1 // pred_region
      %2684 = dma.done [#allocation4], 32
    $region137: #{bert_forward.1} parent=1 // pred_fallthru
      _
    %2685 = vsyncpa [#allocation3], 1
    %2686 = vsyncpa [#allocation6], 1
    %2687 = vsyncpa [#allocation9], 1
    %2688 = vsyncpa [#allocation12], 1
    %2689 = vsyncpa [#allocation15], 1
    %2690 = vsyncpa [#allocation18], 1
    %2691 = vsyncpa [#allocation4], 1

</llo_original>
